<compile_context>
chip_gen: v6e
topology: v6e:2x2x1
jax: 0.10.0
libtpu: 0.0.40
codegen_flags: <defaults>
</compile_context>

<pallas_src>
import functools

import jax
import jax.numpy as jnp
from jax.experimental import pallas as pl
from jax.experimental.pallas import tpu as pltpu


def _round_up(x, m):
    return ((x + m - 1) // m) * m


def _vmem_capacity_bytes():
    try:
        return int(pltpu.get_tpu_info().vmem_capacity_bytes)
    except Exception:
        return 128 << 20  # conservative: assume a 128 MiB part


# ----------------------------------------------------------------------------
# Mode A: K (in_feat) fits in VMEM.  Grid = (N tiles, batch tiles).
# exp(weights) and bias @ exp(weights) live in VMEM scratch, computed once per
# weight block when the batch axis is sequential, or per step when both axes
# are parallel (so v7x can use both TensorCores even with a single N tile).
# ----------------------------------------------------------------------------
def _exu_kernel(x_ref, b_ref, w_ref, o_ref, ew_ref, brow_ref, *,
                n, matmul_dtype, exp_once, use_vpu, in_feat):
    def _init_weight_block():
        ew = jnp.exp(w_ref[...].astype(jnp.float32))
        ew_ref[...] = ew.astype(ew_ref.dtype)
        brow_ref[...] = jnp.dot(b_ref[...].astype(jnp.float32), ew,
                                preferred_element_type=jnp.float32)

    if exp_once:
        # Weight block only depends on the outer (N) grid axis; batch axis is
        # "arbitrary", so compute exp(W)/bias-row once per weight block.
        pl.when(pl.program_id(1) == 0)(_init_weight_block)
    else:
        _init_weight_block()

    if use_vpu:
        # Small-K path (NAM-style ExU): outer-product accumulate on the VPU.
        # The MXU would pad K to 128/256 and sit mostly idle.
        xb = x_ref[...].astype(jnp.float32)
        ew = ew_ref[...].astype(jnp.float32)
        mm = jnp.zeros(o_ref.shape, jnp.float32)
        for k in range(in_feat):                       # static unroll, K <= 32
            mm = mm + xb[:, k:k + 1] * ew[k:k + 1, :]
    else:
        mm = jnp.dot(x_ref[...].astype(matmul_dtype), ew_ref[...],
                     preferred_element_type=jnp.float32)

    acc = mm - brow_ref[...]                           # (x - b) @ E == x@E - b@E
    # relu followed by clamp(0, n) == clip(0, n): single fused clip.
    o_ref[...] = jnp.clip(acc, 0.0, jnp.float32(n)).astype(o_ref.dtype)


# ----------------------------------------------------------------------------
# Mode B: K tiled.  Grid = (N tiles, batch tiles, K tiles) with K innermost
# ("arbitrary") and an f32 accumulator scratch.  exp(W) is recomputed per
# (tk, tn) block on the EUP (its own issue slot, overlaps the MXU).
# ----------------------------------------------------------------------------
def _exu_kernel_ktiled(x_ref, b_ref, w_ref, o_ref, acc_ref, *, n, matmul_dtype):
    k = pl.program_id(2)

    @pl.when(k == 0)
    def _():
        acc_ref[...] = jnp.zeros_like(acc_ref)

    ew = jnp.exp(w_ref[...].astype(jnp.float32)).astype(matmul_dtype)
    centered = (x_ref[...] - b_ref[...]).astype(matmul_dtype)
    acc_ref[...] += jnp.dot(centered, ew, preferred_element_type=jnp.float32)

    @pl.when(k == pl.num_programs(2) - 1)
    def _():
        o_ref[...] = jnp.clip(acc_ref[...], 0.0,
                              jnp.float32(n)).astype(o_ref.dtype)


def exu_forward(x, weights, bias, n=1.0, *, tb=512, tn=256, tk=None,
                matmul_dtype=None, out_dtype=None):
    """ExU forward: clamp(relu((x - bias) @ exp(weights)), 0, n).

    x: (batch, in_feat); weights: (in_feat, out_feat); bias: (in_feat,)

    tb / tn are batch / out-feature tile sizes (tn kept >= 256 and a multiple
    of 128 for lane-dense stores and full MXU width on v6e/v7x).  tk enables
    K tiling; it is auto-enabled when the un-tiled working set would exceed
    the generation-aware VMEM budget.

    matmul_dtype=jnp.bfloat16 gives ~2-3x MXU throughput on every generation
    (v5e included), but note exp(weights) is large for mean-4 weights and the
    post-clamp range is only [0, n]: keep f32 (default) when n is small and
    accuracy inside the clamp window matters.
    """
    batch, in_feat = x.shape
    in_feat_w, out_feat = weights.shape
    assert in_feat == in_feat_w and bias.shape == (in_feat,)
    if matmul_dtype is None:
        matmul_dtype = x.dtype
    if out_dtype is None:
        out_dtype = x.dtype
    isz = lambda d: jnp.dtype(d).itemsize

    # Generation-aware VMEM budget (leave headroom for Mosaic internal scratch
    # and the double-buffer pipeline): ~50 MiB on v7x (64 MiB TC), ~100 MiB on
    # v5e/v6e (128 MiB).
    phys_vmem = _vmem_capacity_bytes()
    vmem_cap = max(min(phys_vmem - (12 << 20), int(phys_vmem * 0.78)), 32 << 20)

    # Lane-dense output: pad out_feat up to a multiple of 128 (padded weight
    # columns are sliced off the output afterwards).
    out_p = _round_up(out_feat, 128)
    w_work = weights
    if out_p != out_feat:
        w_work = jnp.pad(weights, ((0, 0), (0, out_p - out_feat)))

    # Tile sizes: batch tile a multiple of 8 (sublane); out-feature tile a
    # multiple of 128, >= 256 (full MXU N width on v6e/v7x, harmless on v5e).
    tb_eff = min(_round_up(tb, 8), _round_up(batch, 8))
    if out_p <= tn:
        tn_eff = out_p
    else:
        tn_eff = max(256, (tn // 128) * 128)

    def mode_a_vmem(tb_, tn_):
        return (2 * tb_ * in_feat * isz(x.dtype)            # x tiles (dbl buf)
                + 2 * in_feat * tn_ * isz(weights.dtype)    # W tiles
                + 2 * 8 * in_feat * isz(bias.dtype)         # bias (sublane pad)
                + 2 * tb_ * tn_ * isz(out_dtype)            # out tiles
                + in_feat * tn_ * isz(matmul_dtype)         # exp(W) scratch
                + 8 * tn_ * 4                               # bias-row scratch
                + tb_ * in_feat * 4 + tb_ * tn_ * 4)        # in-kernel temps

    use_k_tiling = tk is not None and in_feat > int(tk)
    if not use_k_tiling and mode_a_vmem(tb_eff, tn_eff) + (4 << 20) > vmem_cap:
        use_k_tiling = True
        if tk is None:
            tk = 512

    # TODO(synk): adaptive grid ordering (x-resident vs W-resident outer axis)
    # to avoid re-streaming x once per N tile when batch*in_feat >> in_feat*out_feat.
    # TODO(synk): pipeline_mode=pl.Buffered(3) on the weight operand to hide the
    # (K, tn) DMA + exp pass at weight-block transitions when batch tiles are few.

    if not use_k_tiling:
        n_tiles = pl.cdiv(out_p, tn_eff)
        b_tiles = pl.cdiv(batch, tb_eff)
        use_vpu = in_feat <= 32
        # Guarding exp(W) on program_id(batch)==0 requires a sequential batch
        # axis.  If there is only one N tile, keep both axes "parallel" (v7x
        # 2-TC) and recompute exp(W) per step instead (EUP slot, mostly hidden).
        exp_once = (b_tiles > 1) and (n_tiles > 1)
        batch_sem = "arbitrary" if exp_once else "parallel"

        vmem_need = mode_a_vmem(tb_eff, tn_eff)
        vmem_limit = int(min(max(vmem_need + (4 << 20), 32 << 20), vmem_cap))

        kernel = functools.partial(
            _exu_kernel, n=float(n), matmul_dtype=matmul_dtype,
            exp_once=exp_once, use_vpu=use_vpu, in_feat=in_feat)

        out = pl.pallas_call(
            kernel,
            out_shape=jax.ShapeDtypeStruct((batch, out_p), out_dtype),
            grid_spec=pltpu.PrefetchScalarGridSpec(
                num_scalar_prefetch=0,
                grid=(n_tiles, b_tiles),
                in_specs=[
                    pl.BlockSpec((tb_eff, in_feat), lambda j, i: (i, 0)),   # x
                    pl.BlockSpec((1, in_feat), lambda j, i: (0, 0)),        # bias
                    pl.BlockSpec((in_feat, tn_eff), lambda j, i: (0, j)),   # W
                ],
                out_specs=pl.BlockSpec((tb_eff, tn_eff), lambda j, i: (i, j)),
                scratch_shapes=[
                    pltpu.VMEM((in_feat, tn_eff), matmul_dtype),  # exp(W)
                    pltpu.VMEM((1, tn_eff), jnp.float32),         # bias @ exp(W)
                ],
            ),
            compiler_params=pltpu.CompilerParams(
                dimension_semantics=("parallel", batch_sem),
                vmem_limit_bytes=vmem_limit),
        )(x, bias.reshape(1, in_feat), w_work)
    else:
        # K-tiled path for large in_feat.  Pad K to a multiple of tk with
        # zeros: padded contribution is (0 - 0) * exp(0) == 0.
        tk_eff = max(128, (int(tk) // 128) * 128)
        in_p = _round_up(in_feat, tk_eff)
        x_work, bias_work, w_k = x, bias, w_work
        if in_p != in_feat:
            x_work = jnp.pad(x, ((0, 0), (0, in_p - in_feat)))
            bias_work = jnp.pad(bias, (0, in_p - in_feat))
            w_k = jnp.pad(w_work, ((0, in_p - in_feat), (0, 0)))
        k_tiles = in_p // tk_eff
        n_tiles = pl.cdiv(out_p, tn_eff)
        b_tiles = pl.cdiv(batch, tb_eff)

        vmem_need = (2 * tb_eff * tk_eff * isz(x.dtype)
                     + 2 * tk_eff * tn_eff * isz(weights.dtype)
                     + 2 * 8 * tk_eff * isz(bias.dtype)
                     + 2 * tb_eff * tn_eff * isz(out_dtype)
                     + tb_eff * tn_eff * 4                      # f32 acc scratch
                     + tk_eff * tn_eff * isz(matmul_dtype)      # exp(W) temp
                     + tb_eff * tk_eff * isz(matmul_dtype))     # centered temp
        vmem_limit = int(min(max(vmem_need + (4 << 20), 32 << 20), vmem_cap))

        kernel = functools.partial(_exu_kernel_ktiled, n=float(n),
                                   matmul_dtype=matmul_dtype)

        out = pl.pallas_call(
            kernel,
            out_shape=jax.ShapeDtypeStruct((batch, out_p), out_dtype),
            grid_spec=pltpu.PrefetchScalarGridSpec(
                num_scalar_prefetch=0,
                grid=(n_tiles, b_tiles, k_tiles),
                in_specs=[
                    pl.BlockSpec((tb_eff, tk_eff), lambda j, i, k: (i, k)),   # x
                    pl.BlockSpec((1, tk_eff), lambda j, i, k: (0, k)),        # bias
                    pl.BlockSpec((tk_eff, tn_eff), lambda j, i, k: (k, j)),   # W
                ],
                out_specs=pl.BlockSpec((tb_eff, tn_eff), lambda j, i, k: (i, j)),
                scratch_shapes=[pltpu.VMEM((tb_eff, tn_eff), jnp.float32)],
            ),
            compiler_params=pltpu.CompilerParams(
                dimension_semantics=("parallel", "parallel", "arbitrary"),
                vmem_limit_bytes=vmem_limit),
        )(x_work, bias_work.reshape(1, in_p), w_k)

    if out_p != out_feat:
        out = out[:, :out_feat]
    return out


def _trunc_normal(key, shape, mean=0.0, std=1.0):
    # torch.nn.init.trunc_normal_ truncates at mean +/- 2*std by default.
    z = jax.random.truncated_normal(key, -2.0, 2.0, shape, dtype=jnp.float32)
    return mean + std * z


if __name__ == "__main__":
    key = jax.random.PRNGKey(0)

    def ref_exu(x, w, b, n):
        return jnp.clip(
            jnp.dot(x - b, jnp.exp(w), precision=jax.lax.Precision.HIGHEST),
            0.0, float(n))

    def run_case(name, batch, in_feat, out_feat, case_key, **kw):
        kx, kwt, kb = jax.random.split(case_key, 3)
        w = _trunc_normal(kwt, (in_feat, out_feat), mean=4.0, std=0.5)
        b = _trunc_normal(kb, (in_feat,), std=0.5)
        x = jax.random.normal(kx, (batch, in_feat), dtype=jnp.float32)

        out = jax.block_until_ready(exu_forward(x, w, b, n=1.0, **kw))
        ref = ref_exu(x, w, b, 1.0)
        assert out.shape == ref.shape and out.dtype == jnp.float32

        # Scale-aware elementwise tolerance: pre-clamp magnitudes are large
        # (exp(w) ~ 20-150), so bound the error by the positive-term sum of the
        # accumulation (clip is 1-Lipschitz, so the bound carries post-clamp).
        absdot = jnp.dot(jnp.abs(x - b), jnp.exp(w),
                         precision=jax.lax.Precision.HIGHEST)
        tol = 2e-6 * absdot + 1e-4
        err = jnp.abs(out - ref)
        assert bool(jnp.all(err <= tol)), (
            "%s: max abs err %g exceeds tolerance" % (name, float(jnp.max(err))))

    k1, k2, k3 = jax.random.split(key, 3)
    # 1) NAM-style small-K ExU: VPU outer-product path, single lane-dense tile.
    run_case("small-K VPU path", batch=256, in_feat=16, out_feat=256,
             case_key=k1)
    # 2) MXU path with >1 batch and N tiles: exercises the exp-once-per-weight-
    #    block scratch (pl.when guard) and the folded bias row.
    run_case("MXU / exp-once path", batch=384, in_feat=256, out_feat=512,
             case_key=k2, tb=128, tn=256)
    # 3) K-tiled path: 3 K tiles with an f32 accumulator scratch.
    run_case("K-tiled accumulator path", batch=256, in_feat=384, out_feat=256,
             case_key=k3, tk=128)

    print("KERNEL_OK")
</pallas_src>

<mosaic_0001>
module attributes {stable_mosaic.version = 11 : i64} {
  func.func @_exu_kernel(%arg0: i32, %arg1: i32, %arg2: memref<256x16xf32, #tpu.memory_space<vmem>>, %arg3: memref<1x16xf32, #tpu.memory_space<vmem>>, %arg4: memref<16x256xf32, #tpu.memory_space<vmem>>, %arg5: memref<256x256xf32, #tpu.memory_space<vmem>>, %arg6: memref<16x256xf32, #tpu.memory_space<vmem>>, %arg7: memref<1x256xf32, #tpu.memory_space<vmem>>) attributes {dimension_semantics = [#tpu.dimension_semantics<parallel>, #tpu.dimension_semantics<parallel>], iteration_bounds = array<i64: 1, 1>, scalar_prefetch = 0 : i64, scratch_operands = 2 : i64, tpu.core_type = #tpu.core_type<tc>, window_params = [{transform_indices = @transform_0, window_bounds = array<i64: 256, 16>}, {pipeline_mode = #tpu.pipeline_mode<synchronous>, transform_indices = @transform_1, window_bounds = array<i64: 1, 16>}, {transform_indices = @transform_2, window_bounds = array<i64: 16, 256>}, {transform_indices = @transform_3, window_bounds = array<i64: 256, 256>}]} {
    %c0 = arith.constant 0 : index
    %c0_0 = arith.constant 0 : index
    %0 = vector.load %arg4[%c0, %c0_0] : memref<16x256xf32, #tpu.memory_space<vmem>>, vector<16x256xf32>
    %1 = math.exp %0 : vector<16x256xf32>
    %c0_1 = arith.constant 0 : index
    %c0_2 = arith.constant 0 : index
    %2 = vector.load %arg6[%c0_1, %c0_2] : memref<16x256xf32, #tpu.memory_space<vmem>>, vector<16x256xf32>
    tpu.vector_store %arg6[%c0_1, %c0_2], %1 {strides = array<i32>} : memref<16x256xf32, #tpu.memory_space<vmem>>, vector<16x256xf32>,
    %c0_3 = arith.constant 0 : index
    %c0_4 = arith.constant 0 : index
    %3 = vector.load %arg3[%c0_3, %c0_4] : memref<1x16xf32, #tpu.memory_space<vmem>>, vector<1x16xf32>
    %cst = arith.constant dense<0.000000e+00> : vector<1x256xf32>
    %4 = tpu.matmul %3, %1, %cst {dimension_numbers = #tpu.dot_dimension_numbers<[1], [0], [0], [1], [0, 0, 1, 1], [], []>} : vector<1x16xf32>, vector<16x256xf32>, vector<1x256xf32> -> vector<1x256xf32>
    %c0_5 = arith.constant 0 : index
    %c0_6 = arith.constant 0 : index
    %5 = vector.load %arg7[%c0_5, %c0_6] : memref<1x256xf32, #tpu.memory_space<vmem>>, vector<1x256xf32>
    tpu.vector_store %arg7[%c0_5, %c0_6], %4 {strides = array<i32>} : memref<1x256xf32, #tpu.memory_space<vmem>>, vector<1x256xf32>,
    %c0_7 = arith.constant 0 : index
    %c0_8 = arith.constant 0 : index
    %6 = vector.load %arg2[%c0_7, %c0_8] : memref<256x16xf32, #tpu.memory_space<vmem>>, vector<256x16xf32>
    %c0_9 = arith.constant 0 : index
    %c0_10 = arith.constant 0 : index
    %7 = vector.load %arg6[%c0_9, %c0_10] : memref<16x256xf32, #tpu.memory_space<vmem>>, vector<16x256xf32>
    %cst_11 = arith.constant 0.000000e+00 : f32
    %8 = vector.broadcast %cst_11 : f32 to vector<256x256xf32>
    %9 = vector.extract_strided_slice %6 {offsets = [0, 0], sizes = [256, 1], strides = [1, 1]} : vector<256x16xf32> to vector<256x1xf32>
    %10 = vector.extract_strided_slice %7 {offsets = [0, 0], sizes = [1, 256], strides = [1, 1]} : vector<16x256xf32> to vector<1x256xf32>
    %11 = vector.broadcast %9 : vector<256x1xf32> to vector<256x256xf32>
    %12 = vector.broadcast %10 : vector<1x256xf32> to vector<256x256xf32>
    %13 = arith.mulf %11, %12 : vector<256x256xf32>
    %14 = arith.addf %8, %13 : vector<256x256xf32>
    %15 = vector.extract_strided_slice %6 {offsets = [0, 1], sizes = [256, 1], strides = [1, 1]} : vector<256x16xf32> to vector<256x1xf32>
    %16 = vector.extract_strided_slice %7 {offsets = [1, 0], sizes = [1, 256], strides = [1, 1]} : vector<16x256xf32> to vector<1x256xf32>
    %17 = vector.broadcast %15 : vector<256x1xf32> to vector<256x256xf32>
    %18 = vector.broadcast %16 : vector<1x256xf32> to vector<256x256xf32>
    %19 = arith.mulf %17, %18 : vector<256x256xf32>
    %20 = arith.addf %14, %19 : vector<256x256xf32>
    %21 = vector.extract_strided_slice %6 {offsets = [0, 2], sizes = [256, 1], strides = [1, 1]} : vector<256x16xf32> to vector<256x1xf32>
    %22 = vector.extract_strided_slice %7 {offsets = [2, 0], sizes = [1, 256], strides = [1, 1]} : vector<16x256xf32> to vector<1x256xf32>
    %23 = vector.broadcast %21 : vector<256x1xf32> to vector<256x256xf32>
    %24 = vector.broadcast %22 : vector<1x256xf32> to vector<256x256xf32>
    %25 = arith.mulf %23, %24 : vector<256x256xf32>
    %26 = arith.addf %20, %25 : vector<256x256xf32>
    %27 = vector.extract_strided_slice %6 {offsets = [0, 3], sizes = [256, 1], strides = [1, 1]} : vector<256x16xf32> to vector<256x1xf32>
    %28 = vector.extract_strided_slice %7 {offsets = [3, 0], sizes = [1, 256], strides = [1, 1]} : vector<16x256xf32> to vector<1x256xf32>
    %29 = vector.broadcast %27 : vector<256x1xf32> to vector<256x256xf32>
    %30 = vector.broadcast %28 : vector<1x256xf32> to vector<256x256xf32>
    %31 = arith.mulf %29, %30 : vector<256x256xf32>
    %32 = arith.addf %26, %31 : vector<256x256xf32>
    %33 = vector.extract_strided_slice %6 {offsets = [0, 4], sizes = [256, 1], strides = [1, 1]} : vector<256x16xf32> to vector<256x1xf32>
    %34 = vector.extract_strided_slice %7 {offsets = [4, 0], sizes = [1, 256], strides = [1, 1]} : vector<16x256xf32> to vector<1x256xf32>
    %35 = vector.broadcast %33 : vector<256x1xf32> to vector<256x256xf32>
    %36 = vector.broadcast %34 : vector<1x256xf32> to vector<256x256xf32>
    %37 = arith.mulf %35, %36 : vector<256x256xf32>
    %38 = arith.addf %32, %37 : vector<256x256xf32>
    %39 = vector.extract_strided_slice %6 {offsets = [0, 5], sizes = [256, 1], strides = [1, 1]} : vector<256x16xf32> to vector<256x1xf32>
    %40 = vector.extract_strided_slice %7 {offsets = [5, 0], sizes = [1, 256], strides = [1, 1]} : vector<16x256xf32> to vector<1x256xf32>
    %41 = vector.broadcast %39 : vector<256x1xf32> to vector<256x256xf32>
    %42 = vector.broadcast %40 : vector<1x256xf32> to vector<256x256xf32>
    %43 = arith.mulf %41, %42 : vector<256x256xf32>
    %44 = arith.addf %38, %43 : vector<256x256xf32>
    %45 = vector.extract_strided_slice %6 {offsets = [0, 6], sizes = [256, 1], strides = [1, 1]} : vector<256x16xf32> to vector<256x1xf32>
    %46 = vector.extract_strided_slice %7 {offsets = [6, 0], sizes = [1, 256], strides = [1, 1]} : vector<16x256xf32> to vector<1x256xf32>
    %47 = vector.broadcast %45 : vector<256x1xf32> to vector<256x256xf32>
    %48 = vector.broadcast %46 : vector<1x256xf32> to vector<256x256xf32>
    %49 = arith.mulf %47, %48 : vector<256x256xf32>
    %50 = arith.addf %44, %49 : vector<256x256xf32>
    %51 = vector.extract_strided_slice %6 {offsets = [0, 7], sizes = [256, 1], strides = [1, 1]} : vector<256x16xf32> to vector<256x1xf32>
    %52 = vector.extract_strided_slice %7 {offsets = [7, 0], sizes = [1, 256], strides = [1, 1]} : vector<16x256xf32> to vector<1x256xf32>
    %53 = vector.broadcast %51 : vector<256x1xf32> to vector<256x256xf32>
    %54 = vector.broadcast %52 : vector<1x256xf32> to vector<256x256xf32>
    %55 = arith.mulf %53, %54 : vector<256x256xf32>
    %56 = arith.addf %50, %55 : vector<256x256xf32>
    %57 = vector.extract_strided_slice %6 {offsets = [0, 8], sizes = [256, 1], strides = [1, 1]} : vector<256x16xf32> to vector<256x1xf32>
    %58 = vector.extract_strided_slice %7 {offsets = [8, 0], sizes = [1, 256], strides = [1, 1]} : vector<16x256xf32> to vector<1x256xf32>
    %59 = vector.broadcast %57 : vector<256x1xf32> to vector<256x256xf32>
    %60 = vector.broadcast %58 : vector<1x256xf32> to vector<256x256xf32>
    %61 = arith.mulf %59, %60 : vector<256x256xf32>
    %62 = arith.addf %56, %61 : vector<256x256xf32>
    %63 = vector.extract_strided_slice %6 {offsets = [0, 9], sizes = [256, 1], strides = [1, 1]} : vector<256x16xf32> to vector<256x1xf32>
    %64 = vector.extract_strided_slice %7 {offsets = [9, 0], sizes = [1, 256], strides = [1, 1]} : vector<16x256xf32> to vector<1x256xf32>
    %65 = vector.broadcast %63 : vector<256x1xf32> to vector<256x256xf32>
    %66 = vector.broadcast %64 : vector<1x256xf32> to vector<256x256xf32>
    %67 = arith.mulf %65, %66 : vector<256x256xf32>
    %68 = arith.addf %62, %67 : vector<256x256xf32>
    %69 = vector.extract_strided_slice %6 {offsets = [0, 10], sizes = [256, 1], strides = [1, 1]} : vector<256x16xf32> to vector<256x1xf32>
    %70 = vector.extract_strided_slice %7 {offsets = [10, 0], sizes = [1, 256], strides = [1, 1]} : vector<16x256xf32> to vector<1x256xf32>
    %71 = vector.broadcast %69 : vector<256x1xf32> to vector<256x256xf32>
    %72 = vector.broadcast %70 : vector<1x256xf32> to vector<256x256xf32>
    %73 = arith.mulf %71, %72 : vector<256x256xf32>
    %74 = arith.addf %68, %73 : vector<256x256xf32>
    %75 = vector.extract_strided_slice %6 {offsets = [0, 11], sizes = [256, 1], strides = [1, 1]} : vector<256x16xf32> to vector<256x1xf32>
    %76 = vector.extract_strided_slice %7 {offsets = [11, 0], sizes = [1, 256], strides = [1, 1]} : vector<16x256xf32> to vector<1x256xf32>
    %77 = vector.broadcast %75 : vector<256x1xf32> to vector<256x256xf32>
    %78 = vector.broadcast %76 : vector<1x256xf32> to vector<256x256xf32>
    %79 = arith.mulf %77, %78 : vector<256x256xf32>
    %80 = arith.addf %74, %79 : vector<256x256xf32>
    %81 = vector.extract_strided_slice %6 {offsets = [0, 12], sizes = [256, 1], strides = [1, 1]} : vector<256x16xf32> to vector<256x1xf32>
    %82 = vector.extract_strided_slice %7 {offsets = [12, 0], sizes = [1, 256], strides = [1, 1]} : vector<16x256xf32> to vector<1x256xf32>
    %83 = vector.broadcast %81 : vector<256x1xf32> to vector<256x256xf32>
    %84 = vector.broadcast %82 : vector<1x256xf32> to vector<256x256xf32>
    %85 = arith.mulf %83, %84 : vector<256x256xf32>
    %86 = arith.addf %80, %85 : vector<256x256xf32>
    %87 = vector.extract_strided_slice %6 {offsets = [0, 13], sizes = [256, 1], strides = [1, 1]} : vector<256x16xf32> to vector<256x1xf32>
    %88 = vector.extract_strided_slice %7 {offsets = [13, 0], sizes = [1, 256], strides = [1, 1]} : vector<16x256xf32> to vector<1x256xf32>
    %89 = vector.broadcast %87 : vector<256x1xf32> to vector<256x256xf32>
    %90 = vector.broadcast %88 : vector<1x256xf32> to vector<256x256xf32>
    %91 = arith.mulf %89, %90 : vector<256x256xf32>
    %92 = arith.addf %86, %91 : vector<256x256xf32>
    %93 = vector.extract_strided_slice %6 {offsets = [0, 14], sizes = [256, 1], strides = [1, 1]} : vector<256x16xf32> to vector<256x1xf32>
    %94 = vector.extract_strided_slice %7 {offsets = [14, 0], sizes = [1, 256], strides = [1, 1]} : vector<16x256xf32> to vector<1x256xf32>
    %95 = vector.broadcast %93 : vector<256x1xf32> to vector<256x256xf32>
    %96 = vector.broadcast %94 : vector<1x256xf32> to vector<256x256xf32>
    %97 = arith.mulf %95, %96 : vector<256x256xf32>
    %98 = arith.addf %92, %97 : vector<256x256xf32>
    %99 = vector.extract_strided_slice %6 {offsets = [0, 15], sizes = [256, 1], strides = [1, 1]} : vector<256x16xf32> to vector<256x1xf32>
    %100 = vector.extract_strided_slice %7 {offsets = [15, 0], sizes = [1, 256], strides = [1, 1]} : vector<16x256xf32> to vector<1x256xf32>
    %101 = vector.broadcast %99 : vector<256x1xf32> to vector<256x256xf32>
    %102 = vector.broadcast %100 : vector<1x256xf32> to vector<256x256xf32>
    %103 = arith.mulf %101, %102 : vector<256x256xf32>
    %104 = arith.addf %98, %103 : vector<256x256xf32>
    %c0_12 = arith.constant 0 : index
    %c0_13 = arith.constant 0 : index
    %105 = vector.load %arg7[%c0_12, %c0_13] : memref<1x256xf32, #tpu.memory_space<vmem>>, vector<1x256xf32>
    %106 = vector.broadcast %105 : vector<1x256xf32> to vector<256x256xf32>
    %107 = arith.subf %104, %106 : vector<256x256xf32>
    %cst_14 = arith.constant 0.000000e+00 : f32
    %cst_15 = arith.constant 1.000000e+00 : f32
    %108 = vector.broadcast %cst_14 : f32 to vector<256x256xf32>
    %109 = arith.maximumf %108, %107 : vector<256x256xf32>
    %110 = vector.broadcast %cst_15 : f32 to vector<256x256xf32>
    %111 = arith.minimumf %110, %109 : vector<256x256xf32>
    %c0_16 = arith.constant 0 : index
    %c0_17 = arith.constant 0 : index
    %112 = vector.load %arg5[%c0_16, %c0_17] : memref<256x256xf32, #tpu.memory_space<vmem>>, vector<256x256xf32>
    tpu.vector_store %arg5[%c0_16, %c0_17], %111 {strides = array<i32>} : memref<256x256xf32, #tpu.memory_space<vmem>>, vector<256x256xf32>,
    return
  }
  func.func @transform_0(%arg0: i32, %arg1: i32) -> (i32, i32) {
    %c0_i32 = arith.constant 0 : i32
    %c0_i32_0 = arith.constant 0 : i32
    return %arg1, %c0_i32 : i32, i32
  }
  func.func @transform_1(%arg0: i32, %arg1: i32) -> (i32, i32) {
    %c0_i32 = arith.constant 0 : i32
    %c0_i32_0 = arith.constant 0 : i32
    %c0_i32_1 = arith.constant 0 : i32
    return %c0_i32, %c0_i32_0 : i32, i32
  }
  func.func @transform_2(%arg0: i32, %arg1: i32) -> (i32, i32) {
    %c0_i32 = arith.constant 0 : i32
    %c0_i32_0 = arith.constant 0 : i32
    return %c0_i32, %arg0 : i32, i32
  }
  func.func @transform_3(%arg0: i32, %arg1: i32) -> (i32, i32) {
    %c0_i32 = arith.constant 0 : i32
    return %arg1, %arg0 : i32, i32
  }
}

</mosaic_0001>

<llo_original>
// kernel: tpu_custom_call.1
$region0: #{tpu_custom_call.1}
  #allocation0 [shape = 'u32[]', space=smem, size = 0x4, offset = 0x4, fixed_abs, tag = 'smem constant byte address 0x4 - core index']
  #allocation1 [shape = 'u32[144,128]{1,0:T(1,128)}', space=vmem, size = 0x12000, scoped, tag = 'internal scratch']
  #allocation2 [shape = 'f32[16,256]{1,0:T(8,128)}', space=vmem, size = 0x4000, scoped, tag = 'scratch operand']
  #allocation3 [shape = 'f32[1,256]{1,0:T(1,128)}', space=vmem, size = 0x400, scoped, tag = 'scratch operand']
  %s0 = inlined_call_operand.vmem [shape: f32[256,16], index: 0, kind: input, shape index: {}]
  %s1 = inlined_call_operand.vmem [shape: f32[1,16], index: 1, kind: input, shape index: {}]
  %s2 = inlined_call_operand.vmem [shape: f32[16,256], index: 2, kind: input, shape index: {}]
  %s3 = inlined_call_operand.hbm [shape: f32[256,256], index: 3, kind: output, shape index: {}]
  %s4 = sld [smem:[#allocation0]]
  $region22: #{tpu_custom_call.1} parent=0
    _
  %s6 = ssub.s32 1, %s4
  %s7 = scalar_select 0, %s6, %s4
  $region1: #{tpu_custom_call.1} parent=0
    #allocation4 [shape = 'u8[262144]{0}', space=vmem, size = 0x40000, scoped, tag = 'output window, operand 0, single buffered']
    #allocation5 [shape = 's32[1]{0}', space=sflag, size = 0x4, scoped, tag = 'scoped memory for tpu_custom_call.1']
    %8 = vsyncpa [#allocation5], 0
    // Predicated region
    $region2: #{tpu_custom_call.1} parent=1 // pred_check
      _
    $region3: #{tpu_custom_call.1} parent=1 // pred_check_branch
      %10 = sbr.rel (0) target = $region5
    $region4: #{tpu_custom_call.1} parent=1 // pred_region
      _
    $region5: #{tpu_custom_call.1} parent=1 // pred_fallthru
      _
    // Predicated region
    $region6: #{tpu_custom_call.1} parent=1 // pred_check
      _
    $region7: #{tpu_custom_call.1} parent=1 // pred_check_branch
      %12 = sbr.rel (0) target = $region9
    $region8: #{tpu_custom_call.1} parent=1 // pred_region
      _
    $region9: #{tpu_custom_call.1} parent=1 // pred_fallthru
      _
    // Predicated region
    $region10: #{tpu_custom_call.1} parent=1 // pred_check
      _
    $region11: #{tpu_custom_call.1} parent=1 // pred_check_branch
      %14 = sbr.rel (0) target = $region13
    $region12: #{tpu_custom_call.1} parent=1 // pred_region
      _
    $region13: #{tpu_custom_call.1} parent=1 // pred_fallthru
      _
    %v15 = vld [vmem:[%s2] sm:$0xff]
    %v16 = vld [vmem:[%s2 + $0x8] sm:$0xff]
    %v17 = vld [vmem:[%s2 + $0x10] sm:$0xff]
    %v18 = vld [vmem:[%s2 + $0x18] sm:$0xff]
    %v19 = vmul.f32 %v15, 1.442695
    %v20 = vpow.pop %v19
    %v21 = vmul.f32 %v16, 1.442695
    %v22 = vpow.pop %v21
    %v23 = vmul.f32 %v17, 1.442695
    %v24 = vpow.pop %v23
    %v25 = vmul.f32 %v18, 1.442695
    %v26 = vpow.pop %v25
    %27 = vst [vmem:[#allocation2] sm:$0xff] %v20
    %28 = vst [vmem:[#allocation2 + $0x8] sm:$0xff] %v22
    %29 = vst [vmem:[#allocation2 + $0x10] sm:$0xff] %v24
    %30 = vst [vmem:[#allocation2 + $0x18] sm:$0xff] %v26
    %v31 = vld [vmem:[%s1] sm:$0x1]
    %vm32 = vcmask 130048
    %v34 = vsel %vm32, %v31, 0
    %36 = vmatprep.subr.mxu0 0.0
    %37 = vmatpush1.msra.mxu0 0.0
    %38 = vmatprep.subr.mxu0 0.0
    %39 = vmatpush1.msra.mxu0 0.0
    %40 = vmatprep.subr.mxu0 0.0
    %41 = vmatpush1.msra.mxu0 0.0
    %42 = vmatprep.subr.mxu0 0.0
    %43 = vmatpush1.msra.mxu0 0.0
    %44 = vmatprep.subr.mxu0 0.0
    %45 = vmatpush1.msra.mxu0 0.0
    %46 = vmatprep.subr.mxu0 0.0
    %47 = vmatpush1.msra.mxu0 0.0
    %48 = vmatprep.subr.mxu0 0.0
    %49 = vmatpush1.msra.mxu0 0.0
    %50 = vmatprep.subr.mxu0 0.0
    %51 = vmatpush1.msra.mxu0 0.0
    %52 = vmatprep.subr.mxu0 0.0
    %53 = vmatpush1.msra.mxu0 0.0
    %54 = vmatprep.subr.mxu0 0.0
    %55 = vmatpush1.msra.mxu0 0.0
    %56 = vmatprep.subr.mxu0 0.0
    %57 = vmatpush1.msra.mxu0 0.0
    %58 = vmatprep.subr.mxu0 0.0
    %59 = vmatpush1.msra.mxu0 0.0
    %60 = vmatprep.subr.mxu0 0.0
    %61 = vmatpush1.msra.mxu0 0.0
    %62 = vmatprep.subr.mxu0 0.0
    %63 = vmatpush1.msra.mxu0 0.0
    %64 = vmatprep.subr.mxu0 %v26
    %65 = vmatpush1.msra.mxu0 %v24
    %66 = vmatprep.subr.mxu0 %v22
    %67 = vmatpush1.msra.mxu0 %v20
    %68 = vmatprep.subr.mxu0 0.0
    %69 = vmatpush2.msra.mxu0 0.0
    %70 = vmatprep.subr.mxu0 0.0
    %71 = vmatpush2.msra.mxu0 0.0
    %72 = vmatprep.subr.mxu0 0.0
    %73 = vmatpush2.msra.mxu0 0.0
    %74 = vmatprep.subr.mxu0 0.0
    %75 = vmatpush2.msra.mxu0 0.0
    %76 = vmatprep.subr.mxu0 0.0
    %77 = vmatpush2.msra.mxu0 0.0
    %78 = vmatprep.subr.mxu0 0.0
    %79 = vmatpush2.msra.mxu0 0.0
    %80 = vmatprep.subr.mxu0 0.0
    %81 = vmatpush2.msra.mxu0 0.0
    %82 = vmatprep.subr.mxu0 0.0
    %83 = vmatpush2.msra.mxu0 0.0
    %84 = vmatprep.subr.mxu0 0.0
    %85 = vmatpush2.msra.mxu0 0.0
    %86 = vmatprep.subr.mxu0 0.0
    %87 = vmatpush2.msra.mxu0 0.0
    %88 = vmatprep.subr.mxu0 0.0
    %89 = vmatpush2.msra.mxu0 0.0
    %90 = vmatprep.subr.mxu0 0.0
    %91 = vmatpush2.msra.mxu0 0.0
    %92 = vmatprep.subr.mxu0 0.0
    %93 = vmatpush2.msra.mxu0 0.0
    %94 = vmatprep.subr.mxu0 0.0
    %95 = vmatpush2.msra.mxu0 0.0
    %96 = vmatprep.subr.mxu0 0.0
    %97 = vmatpush2.msra.mxu0 0.0
    %98 = vmatprep.subr.mxu0 0.0
    %99 = vmatpush2.msra.mxu0 0.0
    %100 = vmatprep.mubr.f32.mxu0 0.0
    %101 = vmatmul.mubr.f32.gmra.mxu0 %v34
    %v102 = vpop.f32.mrf.mxu0
    %v103 = vadd.f32 0.0, %v102
    %v104 = vpop.f32.mrf.mxu0
    %v105 = vadd.f32 0.0, %v104
    %106 = vdwg.mxu0
    %v109 = vcombine.low %v103, %v105
    %v111 = vunpack.c.l.s4 1966171168
    %v112 = vunpack.c.0.s8 %v111
    %v113 = vlaneseq
    %v114 = vshrl.u32 %v113, 7
    %v115 = vsub.s32 %v112, %v114
    %v116 = vrot.slane %v109, %v115
    %v118 = vunpack.c.l.s4 1966171168
    %v119 = vunpack.c.0.s8 %v118
    %v120 = vlaneseq
    %v121 = vshrl.u32 %v120, 7
    %v122 = vsub.s32 %v119, %v121
    %v123 = vrot.slane %v116, %v122
    %v125 = vlaneseq
    %vm126 = vcmp.ge.s32.totalorder %v125, 0
    %vm127 = vcmp.lt.s32.totalorder %v125, 256
    %vm128 = vmand %vm126, %vm127
    %129 = vst.msk [vmem:[#allocation3] sm:$0x3] %vm128, %v123
    %v130 = vld [vmem:[%s0] sm:$0xff]
    %v131 = vld [vmem:[%s0 + $0x8] sm:$0xff]
    %v132 = vld [vmem:[%s0 + $0x10] sm:$0xff]
    %v133 = vld [vmem:[%s0 + $0x18] sm:$0xff]
    %v134 = vld [vmem:[%s0 + $0x20] sm:$0xff]
    %v135 = vld [vmem:[%s0 + $0x28] sm:$0xff]
    %v136 = vld [vmem:[%s0 + $0x30] sm:$0xff]
    %v137 = vld [vmem:[%s0 + $0x38] sm:$0xff]
    %v138 = vld [vmem:[%s0 + $0x40] sm:$0xff]
    %v139 = vld [vmem:[%s0 + $0x48] sm:$0xff]
    %v140 = vld [vmem:[%s0 + $0x50] sm:$0xff]
    %v141 = vld [vmem:[%s0 + $0x58] sm:$0xff]
    %v142 = vld [vmem:[%s0 + $0x60] sm:$0xff]
    %v143 = vld [vmem:[%s0 + $0x68] sm:$0xff]
    %v144 = vld [vmem:[%s0 + $0x70] sm:$0xff]
    %v145 = vld [vmem:[%s0 + $0x78] sm:$0xff]
    %v146 = vld [vmem:[%s0 + $0x80] sm:$0xff]
    %v147 = vld [vmem:[%s0 + $0x88] sm:$0xff]
    %v148 = vld [vmem:[%s0 + $0x90] sm:$0xff]
    %v149 = vld [vmem:[%s0 + $0x98] sm:$0xff]
    %v150 = vld [vmem:[%s0 + $0xa0] sm:$0xff]
    %v151 = vld [vmem:[%s0 + $0xa8] sm:$0xff]
    %v152 = vld [vmem:[%s0 + $0xb0] sm:$0xff]
    %v153 = vld [vmem:[%s0 + $0xb8] sm:$0xff]
    %v154 = vld [vmem:[%s0 + $0xc0] sm:$0xff]
    %v155 = vld [vmem:[%s0 + $0xc8] sm:$0xff]
    %v156 = vld [vmem:[%s0 + $0xd0] sm:$0xff]
    %v157 = vld [vmem:[%s0 + $0xd8] sm:$0xff]
    %v158 = vld [vmem:[%s0 + $0xe0] sm:$0xff]
    %v159 = vld [vmem:[%s0 + $0xe8] sm:$0xff]
    %v160 = vld [vmem:[%s0 + $0xf0] sm:$0xff]
    %v161 = vld [vmem:[%s0 + $0xf8] sm:$0xff]
    %v162 = vld [vmem:[#allocation2] sm:$0xff]
    %v163 = vld [vmem:[#allocation2 + $0x8] sm:$0xff]
    %v164 = vld [vmem:[#allocation2 + $0x10] sm:$0xff]
    %v165 = vld [vmem:[#allocation2 + $0x18] sm:$0xff]
    %167 = vset.pattern.permute.xlu0 0
    %168 = vperm.xlu0 %167, %v130
    %v169 = vpop.permute.xlu0 %168
    %172 = vset.pattern.permute.xlu0 0
    %173 = vperm.xlu0 %172, %v131
    %v174 = vpop.permute.xlu0 %173
    %177 = vset.pattern.permute.xlu0 0
    %178 = vperm.xlu0 %177, %v132
    %v179 = vpop.permute.xlu0 %178
    %182 = vset.pattern.permute.xlu0 0
    %183 = vperm.xlu0 %182, %v133
    %v184 = vpop.permute.xlu0 %183
    %187 = vset.pattern.permute.xlu0 0
    %188 = vperm.xlu0 %187, %v134
    %v189 = vpop.permute.xlu0 %188
    %192 = vset.pattern.permute.xlu0 0
    %193 = vperm.xlu0 %192, %v135
    %v194 = vpop.permute.xlu0 %193
    %197 = vset.pattern.permute.xlu0 0
    %198 = vperm.xlu0 %197, %v136
    %v199 = vpop.permute.xlu0 %198
    %202 = vset.pattern.permute.xlu0 0
    %203 = vperm.xlu0 %202, %v137
    %v204 = vpop.permute.xlu0 %203
    %207 = vset.pattern.permute.xlu0 0
    %208 = vperm.xlu0 %207, %v138
    %v209 = vpop.permute.xlu0 %208
    %212 = vset.pattern.permute.xlu0 0
    %213 = vperm.xlu0 %212, %v139
    %v214 = vpop.permute.xlu0 %213
    %217 = vset.pattern.permute.xlu0 0
    %218 = vperm.xlu0 %217, %v140
    %v219 = vpop.permute.xlu0 %218
    %222 = vset.pattern.permute.xlu0 0
    %223 = vperm.xlu0 %222, %v141
    %v224 = vpop.permute.xlu0 %223
    %227 = vset.pattern.permute.xlu0 0
    %228 = vperm.xlu0 %227, %v142
    %v229 = vpop.permute.xlu0 %228
    %232 = vset.pattern.permute.xlu0 0
    %233 = vperm.xlu0 %232, %v143
    %v234 = vpop.permute.xlu0 %233
    %237 = vset.pattern.permute.xlu0 0
    %238 = vperm.xlu0 %237, %v144
    %v239 = vpop.permute.xlu0 %238
    %242 = vset.pattern.permute.xlu0 0
    %243 = vperm.xlu0 %242, %v145
    %v244 = vpop.permute.xlu0 %243
    %247 = vset.pattern.permute.xlu0 0
    %248 = vperm.xlu0 %247, %v146
    %v249 = vpop.permute.xlu0 %248
    %252 = vset.pattern.permute.xlu0 0
    %253 = vperm.xlu0 %252, %v147
    %v254 = vpop.permute.xlu0 %253
    %257 = vset.pattern.permute.xlu0 0
    %258 = vperm.xlu0 %257, %v148
    %v259 = vpop.permute.xlu0 %258
    %262 = vset.pattern.permute.xlu0 0
    %263 = vperm.xlu0 %262, %v149
    %v264 = vpop.permute.xlu0 %263
    %267 = vset.pattern.permute.xlu0 0
    %268 = vperm.xlu0 %267, %v150
    %v269 = vpop.permute.xlu0 %268
    %272 = vset.pattern.permute.xlu0 0
    %273 = vperm.xlu0 %272, %v151
    %v274 = vpop.permute.xlu0 %273
    %277 = vset.pattern.permute.xlu0 0
    %278 = vperm.xlu0 %277, %v152
    %v279 = vpop.permute.xlu0 %278
    %282 = vset.pattern.permute.xlu0 0
    %283 = vperm.xlu0 %282, %v153
    %v284 = vpop.permute.xlu0 %283
    %287 = vset.pattern.permute.xlu0 0
    %288 = vperm.xlu0 %287, %v154
    %v289 = vpop.permute.xlu0 %288
    %292 = vset.pattern.permute.xlu0 0
    %293 = vperm.xlu0 %292, %v155
    %v294 = vpop.permute.xlu0 %293
    %297 = vset.pattern.permute.xlu0 0
    %298 = vperm.xlu0 %297, %v156
    %v299 = vpop.permute.xlu0 %298
    %302 = vset.pattern.permute.xlu0 0
    %303 = vperm.xlu0 %302, %v157
    %v304 = vpop.permute.xlu0 %303
    %307 = vset.pattern.permute.xlu0 0
    %308 = vperm.xlu0 %307, %v158
    %v309 = vpop.permute.xlu0 %308
    %312 = vset.pattern.permute.xlu0 0
    %313 = vperm.xlu0 %312, %v159
    %v314 = vpop.permute.xlu0 %313
    %317 = vset.pattern.permute.xlu0 0
    %318 = vperm.xlu0 %317, %v160
    %v319 = vpop.permute.xlu0 %318
    %322 = vset.pattern.permute.xlu0 0
    %323 = vperm.xlu0 %322, %v161
    %v324 = vpop.permute.xlu0 %323
    %v326 = vlaneseq
    %v327 = vshrl.u32 %v326, 7
    %v328 = vsub.s32 0, %v327
    %v329 = vrot.slane %v162, %v328
    %v330 = vlaneseq
    %v331 = vshrl.u32 %v330, 7
    %v332 = vsub.s32 0, %v331
    %v333 = vrot.slane %v163, %v332
    %v334 = vmul.f32 %v169, %v329
    %v335 = vmul.f32 %v169, %v333
    %v336 = vmul.f32 %v174, %v329
    %v337 = vmul.f32 %v174, %v333
    %v338 = vmul.f32 %v179, %v329
    %v339 = vmul.f32 %v179, %v333
    %v340 = vmul.f32 %v184, %v329
    %v341 = vmul.f32 %v184, %v333
    %v342 = vmul.f32 %v189, %v329
    %v343 = vmul.f32 %v189, %v333
    %v344 = vmul.f32 %v194, %v329
    %v345 = vmul.f32 %v194, %v333
    %v346 = vmul.f32 %v199, %v329
    %v347 = vmul.f32 %v199, %v333
    %v348 = vmul.f32 %v204, %v329
    %v349 = vmul.f32 %v204, %v333
    %v350 = vmul.f32 %v209, %v329
    %v351 = vmul.f32 %v209, %v333
    %v352 = vmul.f32 %v214, %v329
    %v353 = vmul.f32 %v214, %v333
    %v354 = vmul.f32 %v219, %v329
    %v355 = vmul.f32 %v219, %v333
    %v356 = vmul.f32 %v224, %v329
    %v357 = vmul.f32 %v224, %v333
    %v358 = vmul.f32 %v229, %v329
    %v359 = vmul.f32 %v229, %v333
    %v360 = vmul.f32 %v234, %v329
    %v361 = vmul.f32 %v234, %v333
    %v362 = vmul.f32 %v239, %v329
    %v363 = vmul.f32 %v239, %v333
    %v364 = vmul.f32 %v244, %v329
    %v365 = vmul.f32 %v244, %v333
    %v366 = vmul.f32 %v249, %v329
    %v367 = vmul.f32 %v249, %v333
    %v368 = vmul.f32 %v254, %v329
    %v369 = vmul.f32 %v254, %v333
    %v370 = vmul.f32 %v259, %v329
    %v371 = vmul.f32 %v259, %v333
    %v372 = vmul.f32 %v264, %v329
    %v373 = vmul.f32 %v264, %v333
    %v374 = vmul.f32 %v269, %v329
    %v375 = vmul.f32 %v269, %v333
    %v376 = vmul.f32 %v274, %v329
    %v377 = vmul.f32 %v274, %v333
    %v378 = vmul.f32 %v279, %v329
    %v379 = vmul.f32 %v279, %v333
    %v380 = vmul.f32 %v284, %v329
    %v381 = vmul.f32 %v284, %v333
    %v382 = vmul.f32 %v289, %v329
    %v383 = vmul.f32 %v289, %v333
    %v384 = vmul.f32 %v294, %v329
    %v385 = vmul.f32 %v294, %v333
    %v386 = vmul.f32 %v299, %v329
    %v387 = vmul.f32 %v299, %v333
    %v388 = vmul.f32 %v304, %v329
    %v389 = vmul.f32 %v304, %v333
    %v390 = vmul.f32 %v309, %v329
    %v391 = vmul.f32 %v309, %v333
    %v392 = vmul.f32 %v314, %v329
    %v393 = vmul.f32 %v314, %v333
    %v394 = vmul.f32 %v319, %v329
    %v395 = vmul.f32 %v319, %v333
    %v396 = vmul.f32 %v324, %v329
    %v397 = vmul.f32 %v324, %v333
    %v398 = vadd.f32 %v334, 0.0
    %v399 = vadd.f32 %v335, 0.0
    %v400 = vadd.f32 %v336, 0.0
    %v401 = vadd.f32 %v337, 0.0
    %v402 = vadd.f32 %v338, 0.0
    %v403 = vadd.f32 %v339, 0.0
    %v404 = vadd.f32 %v340, 0.0
    %v405 = vadd.f32 %v341, 0.0
    %v406 = vadd.f32 %v342, 0.0
    %v407 = vadd.f32 %v343, 0.0
    %v408 = vadd.f32 %v344, 0.0
    %v409 = vadd.f32 %v345, 0.0
    %v410 = vadd.f32 %v346, 0.0
    %v411 = vadd.f32 %v347, 0.0
    %v412 = vadd.f32 %v348, 0.0
    %v413 = vadd.f32 %v349, 0.0
    %v414 = vadd.f32 %v350, 0.0
    %v415 = vadd.f32 %v351, 0.0
    %v416 = vadd.f32 %v352, 0.0
    %v417 = vadd.f32 %v353, 0.0
    %v418 = vadd.f32 %v354, 0.0
    %v419 = vadd.f32 %v355, 0.0
    %v420 = vadd.f32 %v356, 0.0
    %v421 = vadd.f32 %v357, 0.0
    %v422 = vadd.f32 %v358, 0.0
    %v423 = vadd.f32 %v359, 0.0
    %v424 = vadd.f32 %v360, 0.0
    %v425 = vadd.f32 %v361, 0.0
    %v426 = vadd.f32 %v362, 0.0
    %v427 = vadd.f32 %v363, 0.0
    %v428 = vadd.f32 %v364, 0.0
    %v429 = vadd.f32 %v365, 0.0
    %v430 = vadd.f32 %v366, 0.0
    %v431 = vadd.f32 %v367, 0.0
    %v432 = vadd.f32 %v368, 0.0
    %v433 = vadd.f32 %v369, 0.0
    %v434 = vadd.f32 %v370, 0.0
    %v435 = vadd.f32 %v371, 0.0
    %v436 = vadd.f32 %v372, 0.0
    %v437 = vadd.f32 %v373, 0.0
    %v438 = vadd.f32 %v374, 0.0
    %v439 = vadd.f32 %v375, 0.0
    %v440 = vadd.f32 %v376, 0.0
    %v441 = vadd.f32 %v377, 0.0
    %v442 = vadd.f32 %v378, 0.0
    %v443 = vadd.f32 %v379, 0.0
    %v444 = vadd.f32 %v380, 0.0
    %v445 = vadd.f32 %v381, 0.0
    %v446 = vadd.f32 %v382, 0.0
    %v447 = vadd.f32 %v383, 0.0
    %v448 = vadd.f32 %v384, 0.0
    %v449 = vadd.f32 %v385, 0.0
    %v450 = vadd.f32 %v386, 0.0
    %v451 = vadd.f32 %v387, 0.0
    %v452 = vadd.f32 %v388, 0.0
    %v453 = vadd.f32 %v389, 0.0
    %v454 = vadd.f32 %v390, 0.0
    %v455 = vadd.f32 %v391, 0.0
    %v456 = vadd.f32 %v392, 0.0
    %v457 = vadd.f32 %v393, 0.0
    %v458 = vadd.f32 %v394, 0.0
    %v459 = vadd.f32 %v395, 0.0
    %v460 = vadd.f32 %v396, 0.0
    %v461 = vadd.f32 %v397, 0.0
    %462 = vset.pattern.permute.xlu0 1
    %463 = vperm.xlu0 %462, %v130
    %v464 = vpop.permute.xlu0 %463
    %466 = vset.pattern.permute.xlu0 1
    %467 = vperm.xlu0 %466, %v131
    %v468 = vpop.permute.xlu0 %467
    %470 = vset.pattern.permute.xlu0 1
    %471 = vperm.xlu0 %470, %v132
    %v472 = vpop.permute.xlu0 %471
    %474 = vset.pattern.permute.xlu0 1
    %475 = vperm.xlu0 %474, %v133
    %v476 = vpop.permute.xlu0 %475
    %478 = vset.pattern.permute.xlu0 1
    %479 = vperm.xlu0 %478, %v134
    %v480 = vpop.permute.xlu0 %479
    %482 = vset.pattern.permute.xlu0 1
    %483 = vperm.xlu0 %482, %v135
    %v484 = vpop.permute.xlu0 %483
    %486 = vset.pattern.permute.xlu0 1
    %487 = vperm.xlu0 %486, %v136
    %v488 = vpop.permute.xlu0 %487
    %490 = vset.pattern.permute.xlu0 1
    %491 = vperm.xlu0 %490, %v137
    %v492 = vpop.permute.xlu0 %491
    %494 = vset.pattern.permute.xlu0 1
    %495 = vperm.xlu0 %494, %v138
    %v496 = vpop.permute.xlu0 %495
    %498 = vset.pattern.permute.xlu0 1
    %499 = vperm.xlu0 %498, %v139
    %v500 = vpop.permute.xlu0 %499
    %502 = vset.pattern.permute.xlu0 1
    %503 = vperm.xlu0 %502, %v140
    %v504 = vpop.permute.xlu0 %503
    %506 = vset.pattern.permute.xlu0 1
    %507 = vperm.xlu0 %506, %v141
    %v508 = vpop.permute.xlu0 %507
    %510 = vset.pattern.permute.xlu0 1
    %511 = vperm.xlu0 %510, %v142
    %v512 = vpop.permute.xlu0 %511
    %514 = vset.pattern.permute.xlu0 1
    %515 = vperm.xlu0 %514, %v143
    %v516 = vpop.permute.xlu0 %515
    %518 = vset.pattern.permute.xlu0 1
    %519 = vperm.xlu0 %518, %v144
    %v520 = vpop.permute.xlu0 %519
    %522 = vset.pattern.permute.xlu0 1
    %523 = vperm.xlu0 %522, %v145
    %v524 = vpop.permute.xlu0 %523
    %526 = vset.pattern.permute.xlu0 1
    %527 = vperm.xlu0 %526, %v146
    %v528 = vpop.permute.xlu0 %527
    %530 = vset.pattern.permute.xlu0 1
    %531 = vperm.xlu0 %530, %v147
    %v532 = vpop.permute.xlu0 %531
    %534 = vset.pattern.permute.xlu0 1
    %535 = vperm.xlu0 %534, %v148
    %v536 = vpop.permute.xlu0 %535
    %538 = vset.pattern.permute.xlu0 1
    %539 = vperm.xlu0 %538, %v149
    %v540 = vpop.permute.xlu0 %539
    %542 = vset.pattern.permute.xlu0 1
    %543 = vperm.xlu0 %542, %v150
    %v544 = vpop.permute.xlu0 %543
    %546 = vset.pattern.permute.xlu0 1
    %547 = vperm.xlu0 %546, %v151
    %v548 = vpop.permute.xlu0 %547
    %550 = vset.pattern.permute.xlu0 1
    %551 = vperm.xlu0 %550, %v152
    %v552 = vpop.permute.xlu0 %551
    %554 = vset.pattern.permute.xlu0 1
    %555 = vperm.xlu0 %554, %v153
    %v556 = vpop.permute.xlu0 %555
    %558 = vset.pattern.permute.xlu0 1
    %559 = vperm.xlu0 %558, %v154
    %v560 = vpop.permute.xlu0 %559
    %562 = vset.pattern.permute.xlu0 1
    %563 = vperm.xlu0 %562, %v155
    %v564 = vpop.permute.xlu0 %563
    %566 = vset.pattern.permute.xlu0 1
    %567 = vperm.xlu0 %566, %v156
    %v568 = vpop.permute.xlu0 %567
    %570 = vset.pattern.permute.xlu0 1
    %571 = vperm.xlu0 %570, %v157
    %v572 = vpop.permute.xlu0 %571
    %574 = vset.pattern.permute.xlu0 1
    %575 = vperm.xlu0 %574, %v158
    %v576 = vpop.permute.xlu0 %575
    %578 = vset.pattern.permute.xlu0 1
    %579 = vperm.xlu0 %578, %v159
    %v580 = vpop.permute.xlu0 %579
    %582 = vset.pattern.permute.xlu0 1
    %583 = vperm.xlu0 %582, %v160
    %v584 = vpop.permute.xlu0 %583
    %586 = vset.pattern.permute.xlu0 1
    %587 = vperm.xlu0 %586, %v161
    %v588 = vpop.permute.xlu0 %587
    %v590 = vlaneseq
    %v591 = vshrl.u32 %v590, 7
    %v592 = vsub.s32 1, %v591
    %v593 = vrot.slane %v162, %v592
    %v594 = vlaneseq
    %v595 = vshrl.u32 %v594, 7
    %v596 = vsub.s32 1, %v595
    %v597 = vrot.slane %v163, %v596
    %v598 = vmul.f32 %v464, %v593
    %v599 = vmul.f32 %v464, %v597
    %v600 = vmul.f32 %v468, %v593
    %v601 = vmul.f32 %v468, %v597
    %v602 = vmul.f32 %v472, %v593
    %v603 = vmul.f32 %v472, %v597
    %v604 = vmul.f32 %v476, %v593
    %v605 = vmul.f32 %v476, %v597
    %v606 = vmul.f32 %v480, %v593
    %v607 = vmul.f32 %v480, %v597
    %v608 = vmul.f32 %v484, %v593
    %v609 = vmul.f32 %v484, %v597
    %v610 = vmul.f32 %v488, %v593
    %v611 = vmul.f32 %v488, %v597
    %v612 = vmul.f32 %v492, %v593
    %v613 = vmul.f32 %v492, %v597
    %v614 = vmul.f32 %v496, %v593
    %v615 = vmul.f32 %v496, %v597
    %v616 = vmul.f32 %v500, %v593
    %v617 = vmul.f32 %v500, %v597
    %v618 = vmul.f32 %v504, %v593
    %v619 = vmul.f32 %v504, %v597
    %v620 = vmul.f32 %v508, %v593
    %v621 = vmul.f32 %v508, %v597
    %v622 = vmul.f32 %v512, %v593
    %v623 = vmul.f32 %v512, %v597
    %v624 = vmul.f32 %v516, %v593
    %v625 = vmul.f32 %v516, %v597
    %v626 = vmul.f32 %v520, %v593
    %v627 = vmul.f32 %v520, %v597
    %v628 = vmul.f32 %v524, %v593
    %v629 = vmul.f32 %v524, %v597
    %v630 = vmul.f32 %v528, %v593
    %v631 = vmul.f32 %v528, %v597
    %v632 = vmul.f32 %v532, %v593
    %v633 = vmul.f32 %v532, %v597
    %v634 = vmul.f32 %v536, %v593
    %v635 = vmul.f32 %v536, %v597
    %v636 = vmul.f32 %v540, %v593
    %v637 = vmul.f32 %v540, %v597
    %v638 = vmul.f32 %v544, %v593
    %v639 = vmul.f32 %v544, %v597
    %v640 = vmul.f32 %v548, %v593
    %v641 = vmul.f32 %v548, %v597
    %v642 = vmul.f32 %v552, %v593
    %v643 = vmul.f32 %v552, %v597
    %v644 = vmul.f32 %v556, %v593
    %v645 = vmul.f32 %v556, %v597
    %v646 = vmul.f32 %v560, %v593
    %v647 = vmul.f32 %v560, %v597
    %v648 = vmul.f32 %v564, %v593
    %v649 = vmul.f32 %v564, %v597
    %v650 = vmul.f32 %v568, %v593
    %v651 = vmul.f32 %v568, %v597
    %v652 = vmul.f32 %v572, %v593
    %v653 = vmul.f32 %v572, %v597
    %v654 = vmul.f32 %v576, %v593
    %v655 = vmul.f32 %v576, %v597
    %v656 = vmul.f32 %v580, %v593
    %v657 = vmul.f32 %v580, %v597
    %v658 = vmul.f32 %v584, %v593
    %v659 = vmul.f32 %v584, %v597
    %v660 = vmul.f32 %v588, %v593
    %v661 = vmul.f32 %v588, %v597
    %v662 = vadd.f32 %v398, %v598
    %v663 = vadd.f32 %v399, %v599
    %v664 = vadd.f32 %v400, %v600
    %v665 = vadd.f32 %v401, %v601
    %v666 = vadd.f32 %v402, %v602
    %v667 = vadd.f32 %v403, %v603
    %v668 = vadd.f32 %v404, %v604
    %v669 = vadd.f32 %v405, %v605
    %v670 = vadd.f32 %v406, %v606
    %v671 = vadd.f32 %v407, %v607
    %v672 = vadd.f32 %v408, %v608
    %v673 = vadd.f32 %v409, %v609
    %v674 = vadd.f32 %v410, %v610
    %v675 = vadd.f32 %v411, %v611
    %v676 = vadd.f32 %v412, %v612
    %v677 = vadd.f32 %v413, %v613
    %v678 = vadd.f32 %v414, %v614
    %v679 = vadd.f32 %v415, %v615
    %v680 = vadd.f32 %v416, %v616
    %v681 = vadd.f32 %v417, %v617
    %v682 = vadd.f32 %v418, %v618
    %v683 = vadd.f32 %v419, %v619
    %v684 = vadd.f32 %v420, %v620
    %v685 = vadd.f32 %v421, %v621
    %v686 = vadd.f32 %v422, %v622
    %v687 = vadd.f32 %v423, %v623
    %v688 = vadd.f32 %v424, %v624
    %v689 = vadd.f32 %v425, %v625
    %v690 = vadd.f32 %v426, %v626
    %v691 = vadd.f32 %v427, %v627
    %v692 = vadd.f32 %v428, %v628
    %v693 = vadd.f32 %v429, %v629
    %v694 = vadd.f32 %v430, %v630
    %v695 = vadd.f32 %v431, %v631
    %v696 = vadd.f32 %v432, %v632
    %v697 = vadd.f32 %v433, %v633
    %v698 = vadd.f32 %v434, %v634
    %v699 = vadd.f32 %v435, %v635
    %v700 = vadd.f32 %v436, %v636
    %v701 = vadd.f32 %v437, %v637
    %v702 = vadd.f32 %v438, %v638
    %v703 = vadd.f32 %v439, %v639
    %v704 = vadd.f32 %v440, %v640
    %v705 = vadd.f32 %v441, %v641
    %v706 = vadd.f32 %v442, %v642
    %v707 = vadd.f32 %v443, %v643
    %v708 = vadd.f32 %v444, %v644
    %v709 = vadd.f32 %v445, %v645
    %v710 = vadd.f32 %v446, %v646
    %v711 = vadd.f32 %v447, %v647
    %v712 = vadd.f32 %v448, %v648
    %v713 = vadd.f32 %v449, %v649
    %v714 = vadd.f32 %v450, %v650
    %v715 = vadd.f32 %v451, %v651
    %v716 = vadd.f32 %v452, %v652
    %v717 = vadd.f32 %v453, %v653
    %v718 = vadd.f32 %v454, %v654
    %v719 = vadd.f32 %v455, %v655
    %v720 = vadd.f32 %v456, %v656
    %v721 = vadd.f32 %v457, %v657
    %v722 = vadd.f32 %v458, %v658
    %v723 = vadd.f32 %v459, %v659
    %v724 = vadd.f32 %v460, %v660
    %v725 = vadd.f32 %v461, %v661
    %726 = vset.pattern.permute.xlu0 2
    %727 = vperm.xlu0 %726, %v130
    %v728 = vpop.permute.xlu0 %727
    %730 = vset.pattern.permute.xlu0 2
    %731 = vperm.xlu0 %730, %v131
    %v732 = vpop.permute.xlu0 %731
    %734 = vset.pattern.permute.xlu0 2
    %735 = vperm.xlu0 %734, %v132
    %v736 = vpop.permute.xlu0 %735
    %738 = vset.pattern.permute.xlu0 2
    %739 = vperm.xlu0 %738, %v133
    %v740 = vpop.permute.xlu0 %739
    %742 = vset.pattern.permute.xlu0 2
    %743 = vperm.xlu0 %742, %v134
    %v744 = vpop.permute.xlu0 %743
    %746 = vset.pattern.permute.xlu0 2
    %747 = vperm.xlu0 %746, %v135
    %v748 = vpop.permute.xlu0 %747
    %750 = vset.pattern.permute.xlu0 2
    %751 = vperm.xlu0 %750, %v136
    %v752 = vpop.permute.xlu0 %751
    %754 = vset.pattern.permute.xlu0 2
    %755 = vperm.xlu0 %754, %v137
    %v756 = vpop.permute.xlu0 %755
    %758 = vset.pattern.permute.xlu0 2
    %759 = vperm.xlu0 %758, %v138
    %v760 = vpop.permute.xlu0 %759
    %762 = vset.pattern.permute.xlu0 2
    %763 = vperm.xlu0 %762, %v139
    %v764 = vpop.permute.xlu0 %763
    %766 = vset.pattern.permute.xlu0 2
    %767 = vperm.xlu0 %766, %v140
    %v768 = vpop.permute.xlu0 %767
    %770 = vset.pattern.permute.xlu0 2
    %771 = vperm.xlu0 %770, %v141
    %v772 = vpop.permute.xlu0 %771
    %774 = vset.pattern.permute.xlu0 2
    %775 = vperm.xlu0 %774, %v142
    %v776 = vpop.permute.xlu0 %775
    %778 = vset.pattern.permute.xlu0 2
    %779 = vperm.xlu0 %778, %v143
    %v780 = vpop.permute.xlu0 %779
    %782 = vset.pattern.permute.xlu0 2
    %783 = vperm.xlu0 %782, %v144
    %v784 = vpop.permute.xlu0 %783
    %786 = vset.pattern.permute.xlu0 2
    %787 = vperm.xlu0 %786, %v145
    %v788 = vpop.permute.xlu0 %787
    %790 = vset.pattern.permute.xlu0 2
    %791 = vperm.xlu0 %790, %v146
    %v792 = vpop.permute.xlu0 %791
    %794 = vset.pattern.permute.xlu0 2
    %795 = vperm.xlu0 %794, %v147
    %v796 = vpop.permute.xlu0 %795
    %798 = vset.pattern.permute.xlu0 2
    %799 = vperm.xlu0 %798, %v148
    %v800 = vpop.permute.xlu0 %799
    %802 = vset.pattern.permute.xlu0 2
    %803 = vperm.xlu0 %802, %v149
    %v804 = vpop.permute.xlu0 %803
    %806 = vset.pattern.permute.xlu0 2
    %807 = vperm.xlu0 %806, %v150
    %v808 = vpop.permute.xlu0 %807
    %810 = vset.pattern.permute.xlu0 2
    %811 = vperm.xlu0 %810, %v151
    %v812 = vpop.permute.xlu0 %811
    %814 = vset.pattern.permute.xlu0 2
    %815 = vperm.xlu0 %814, %v152
    %v816 = vpop.permute.xlu0 %815
    %818 = vset.pattern.permute.xlu0 2
    %819 = vperm.xlu0 %818, %v153
    %v820 = vpop.permute.xlu0 %819
    %822 = vset.pattern.permute.xlu0 2
    %823 = vperm.xlu0 %822, %v154
    %v824 = vpop.permute.xlu0 %823
    %826 = vset.pattern.permute.xlu0 2
    %827 = vperm.xlu0 %826, %v155
    %v828 = vpop.permute.xlu0 %827
    %830 = vset.pattern.permute.xlu0 2
    %831 = vperm.xlu0 %830, %v156
    %v832 = vpop.permute.xlu0 %831
    %834 = vset.pattern.permute.xlu0 2
    %835 = vperm.xlu0 %834, %v157
    %v836 = vpop.permute.xlu0 %835
    %838 = vset.pattern.permute.xlu0 2
    %839 = vperm.xlu0 %838, %v158
    %v840 = vpop.permute.xlu0 %839
    %842 = vset.pattern.permute.xlu0 2
    %843 = vperm.xlu0 %842, %v159
    %v844 = vpop.permute.xlu0 %843
    %846 = vset.pattern.permute.xlu0 2
    %847 = vperm.xlu0 %846, %v160
    %v848 = vpop.permute.xlu0 %847
    %850 = vset.pattern.permute.xlu0 2
    %851 = vperm.xlu0 %850, %v161
    %v852 = vpop.permute.xlu0 %851
    %v854 = vlaneseq
    %v855 = vshrl.u32 %v854, 7
    %v856 = vsub.s32 2, %v855
    %v857 = vrot.slane %v162, %v856
    %v858 = vlaneseq
    %v859 = vshrl.u32 %v858, 7
    %v860 = vsub.s32 2, %v859
    %v861 = vrot.slane %v163, %v860
    %v862 = vmul.f32 %v728, %v857
    %v863 = vmul.f32 %v728, %v861
    %v864 = vmul.f32 %v732, %v857
    %v865 = vmul.f32 %v732, %v861
    %v866 = vmul.f32 %v736, %v857
    %v867 = vmul.f32 %v736, %v861
    %v868 = vmul.f32 %v740, %v857
    %v869 = vmul.f32 %v740, %v861
    %v870 = vmul.f32 %v744, %v857
    %v871 = vmul.f32 %v744, %v861
    %v872 = vmul.f32 %v748, %v857
    %v873 = vmul.f32 %v748, %v861
    %v874 = vmul.f32 %v752, %v857
    %v875 = vmul.f32 %v752, %v861
    %v876 = vmul.f32 %v756, %v857
    %v877 = vmul.f32 %v756, %v861
    %v878 = vmul.f32 %v760, %v857
    %v879 = vmul.f32 %v760, %v861
    %v880 = vmul.f32 %v764, %v857
    %v881 = vmul.f32 %v764, %v861
    %v882 = vmul.f32 %v768, %v857
    %v883 = vmul.f32 %v768, %v861
    %v884 = vmul.f32 %v772, %v857
    %v885 = vmul.f32 %v772, %v861
    %v886 = vmul.f32 %v776, %v857
    %v887 = vmul.f32 %v776, %v861
    %v888 = vmul.f32 %v780, %v857
    %v889 = vmul.f32 %v780, %v861
    %v890 = vmul.f32 %v784, %v857
    %v891 = vmul.f32 %v784, %v861
    %v892 = vmul.f32 %v788, %v857
    %v893 = vmul.f32 %v788, %v861
    %v894 = vmul.f32 %v792, %v857
    %v895 = vmul.f32 %v792, %v861
    %v896 = vmul.f32 %v796, %v857
    %v897 = vmul.f32 %v796, %v861
    %v898 = vmul.f32 %v800, %v857
    %v899 = vmul.f32 %v800, %v861
    %v900 = vmul.f32 %v804, %v857
    %v901 = vmul.f32 %v804, %v861
    %v902 = vmul.f32 %v808, %v857
    %v903 = vmul.f32 %v808, %v861
    %v904 = vmul.f32 %v812, %v857
    %v905 = vmul.f32 %v812, %v861
    %v906 = vmul.f32 %v816, %v857
    %v907 = vmul.f32 %v816, %v861
    %v908 = vmul.f32 %v820, %v857
    %v909 = vmul.f32 %v820, %v861
    %v910 = vmul.f32 %v824, %v857
    %v911 = vmul.f32 %v824, %v861
    %v912 = vmul.f32 %v828, %v857
    %v913 = vmul.f32 %v828, %v861
    %v914 = vmul.f32 %v832, %v857
    %v915 = vmul.f32 %v832, %v861
    %v916 = vmul.f32 %v836, %v857
    %v917 = vmul.f32 %v836, %v861
    %v918 = vmul.f32 %v840, %v857
    %v919 = vmul.f32 %v840, %v861
    %v920 = vmul.f32 %v844, %v857
    %v921 = vmul.f32 %v844, %v861
    %v922 = vmul.f32 %v848, %v857
    %v923 = vmul.f32 %v848, %v861
    %v924 = vmul.f32 %v852, %v857
    %v925 = vmul.f32 %v852, %v861
    %v926 = vadd.f32 %v662, %v862
    %v927 = vadd.f32 %v663, %v863
    %v928 = vadd.f32 %v664, %v864
    %v929 = vadd.f32 %v665, %v865
    %v930 = vadd.f32 %v666, %v866
    %v931 = vadd.f32 %v667, %v867
    %v932 = vadd.f32 %v668, %v868
    %v933 = vadd.f32 %v669, %v869
    %v934 = vadd.f32 %v670, %v870
    %v935 = vadd.f32 %v671, %v871
    %v936 = vadd.f32 %v672, %v872
    %v937 = vadd.f32 %v673, %v873
    %v938 = vadd.f32 %v674, %v874
    %v939 = vadd.f32 %v675, %v875
    %v940 = vadd.f32 %v676, %v876
    %v941 = vadd.f32 %v677, %v877
    %v942 = vadd.f32 %v678, %v878
    %v943 = vadd.f32 %v679, %v879
    %v944 = vadd.f32 %v680, %v880
    %v945 = vadd.f32 %v681, %v881
    %v946 = vadd.f32 %v682, %v882
    %v947 = vadd.f32 %v683, %v883
    %v948 = vadd.f32 %v684, %v884
    %v949 = vadd.f32 %v685, %v885
    %v950 = vadd.f32 %v686, %v886
    %v951 = vadd.f32 %v687, %v887
    %v952 = vadd.f32 %v688, %v888
    %v953 = vadd.f32 %v689, %v889
    %v954 = vadd.f32 %v690, %v890
    %v955 = vadd.f32 %v691, %v891
    %v956 = vadd.f32 %v692, %v892
    %v957 = vadd.f32 %v693, %v893
    %v958 = vadd.f32 %v694, %v894
    %v959 = vadd.f32 %v695, %v895
    %v960 = vadd.f32 %v696, %v896
    %v961 = vadd.f32 %v697, %v897
    %v962 = vadd.f32 %v698, %v898
    %v963 = vadd.f32 %v699, %v899
    %v964 = vadd.f32 %v700, %v900
    %v965 = vadd.f32 %v701, %v901
    %v966 = vadd.f32 %v702, %v902
    %v967 = vadd.f32 %v703, %v903
    %v968 = vadd.f32 %v704, %v904
    %v969 = vadd.f32 %v705, %v905
    %v970 = vadd.f32 %v706, %v906
    %v971 = vadd.f32 %v707, %v907
    %v972 = vadd.f32 %v708, %v908
    %v973 = vadd.f32 %v709, %v909
    %v974 = vadd.f32 %v710, %v910
    %v975 = vadd.f32 %v711, %v911
    %v976 = vadd.f32 %v712, %v912
    %v977 = vadd.f32 %v713, %v913
    %v978 = vadd.f32 %v714, %v914
    %v979 = vadd.f32 %v715, %v915
    %v980 = vadd.f32 %v716, %v916
    %v981 = vadd.f32 %v717, %v917
    %v982 = vadd.f32 %v718, %v918
    %v983 = vadd.f32 %v719, %v919
    %v984 = vadd.f32 %v720, %v920
    %v985 = vadd.f32 %v721, %v921
    %v986 = vadd.f32 %v722, %v922
    %v987 = vadd.f32 %v723, %v923
    %v988 = vadd.f32 %v724, %v924
    %v989 = vadd.f32 %v725, %v925
    %990 = vset.pattern.permute.xlu0 3
    %991 = vperm.xlu0 %990, %v130
    %v992 = vpop.permute.xlu0 %991
    %994 = vset.pattern.permute.xlu0 3
    %995 = vperm.xlu0 %994, %v131
    %v996 = vpop.permute.xlu0 %995
    %998 = vset.pattern.permute.xlu0 3
    %999 = vperm.xlu0 %998, %v132
    %v1000 = vpop.permute.xlu0 %999
    %1002 = vset.pattern.permute.xlu0 3
    %1003 = vperm.xlu0 %1002, %v133
    %v1004 = vpop.permute.xlu0 %1003
    %1006 = vset.pattern.permute.xlu0 3
    %1007 = vperm.xlu0 %1006, %v134
    %v1008 = vpop.permute.xlu0 %1007
    %1010 = vset.pattern.permute.xlu0 3
    %1011 = vperm.xlu0 %1010, %v135
    %v1012 = vpop.permute.xlu0 %1011
    %1014 = vset.pattern.permute.xlu0 3
    %1015 = vperm.xlu0 %1014, %v136
    %v1016 = vpop.permute.xlu0 %1015
    %1018 = vset.pattern.permute.xlu0 3
    %1019 = vperm.xlu0 %1018, %v137
    %v1020 = vpop.permute.xlu0 %1019
    %1022 = vset.pattern.permute.xlu0 3
    %1023 = vperm.xlu0 %1022, %v138
    %v1024 = vpop.permute.xlu0 %1023
    %1026 = vset.pattern.permute.xlu0 3
    %1027 = vperm.xlu0 %1026, %v139
    %v1028 = vpop.permute.xlu0 %1027
    %1030 = vset.pattern.permute.xlu0 3
    %1031 = vperm.xlu0 %1030, %v140
    %v1032 = vpop.permute.xlu0 %1031
    %1034 = vset.pattern.permute.xlu0 3
    %1035 = vperm.xlu0 %1034, %v141
    %v1036 = vpop.permute.xlu0 %1035
    %1038 = vset.pattern.permute.xlu0 3
    %1039 = vperm.xlu0 %1038, %v142
    %v1040 = vpop.permute.xlu0 %1039
    %1042 = vset.pattern.permute.xlu0 3
    %1043 = vperm.xlu0 %1042, %v143
    %v1044 = vpop.permute.xlu0 %1043
    %1046 = vset.pattern.permute.xlu0 3
    %1047 = vperm.xlu0 %1046, %v144
    %v1048 = vpop.permute.xlu0 %1047
    %1050 = vset.pattern.permute.xlu0 3
    %1051 = vperm.xlu0 %1050, %v145
    %v1052 = vpop.permute.xlu0 %1051
    %1054 = vset.pattern.permute.xlu0 3
    %1055 = vperm.xlu0 %1054, %v146
    %v1056 = vpop.permute.xlu0 %1055
    %1058 = vset.pattern.permute.xlu0 3
    %1059 = vperm.xlu0 %1058, %v147
    %v1060 = vpop.permute.xlu0 %1059
    %1062 = vset.pattern.permute.xlu0 3
    %1063 = vperm.xlu0 %1062, %v148
    %v1064 = vpop.permute.xlu0 %1063
    %1066 = vset.pattern.permute.xlu0 3
    %1067 = vperm.xlu0 %1066, %v149
    %v1068 = vpop.permute.xlu0 %1067
    %1070 = vset.pattern.permute.xlu0 3
    %1071 = vperm.xlu0 %1070, %v150
    %v1072 = vpop.permute.xlu0 %1071
    %1074 = vset.pattern.permute.xlu0 3
    %1075 = vperm.xlu0 %1074, %v151
    %v1076 = vpop.permute.xlu0 %1075
    %1078 = vset.pattern.permute.xlu0 3
    %1079 = vperm.xlu0 %1078, %v152
    %v1080 = vpop.permute.xlu0 %1079
    %1082 = vset.pattern.permute.xlu0 3
    %1083 = vperm.xlu0 %1082, %v153
    %v1084 = vpop.permute.xlu0 %1083
    %1086 = vset.pattern.permute.xlu0 3
    %1087 = vperm.xlu0 %1086, %v154
    %v1088 = vpop.permute.xlu0 %1087
    %1090 = vset.pattern.permute.xlu0 3
    %1091 = vperm.xlu0 %1090, %v155
    %v1092 = vpop.permute.xlu0 %1091
    %1094 = vset.pattern.permute.xlu0 3
    %1095 = vperm.xlu0 %1094, %v156
    %v1096 = vpop.permute.xlu0 %1095
    %1098 = vset.pattern.permute.xlu0 3
    %1099 = vperm.xlu0 %1098, %v157
    %v1100 = vpop.permute.xlu0 %1099
    %1102 = vset.pattern.permute.xlu0 3
    %1103 = vperm.xlu0 %1102, %v158
    %v1104 = vpop.permute.xlu0 %1103
    %1106 = vset.pattern.permute.xlu0 3
    %1107 = vperm.xlu0 %1106, %v159
    %v1108 = vpop.permute.xlu0 %1107
    %1110 = vset.pattern.permute.xlu0 3
    %1111 = vperm.xlu0 %1110, %v160
    %v1112 = vpop.permute.xlu0 %1111
    %1114 = vset.pattern.permute.xlu0 3
    %1115 = vperm.xlu0 %1114, %v161
    %v1116 = vpop.permute.xlu0 %1115
    %v1118 = vlaneseq
    %v1119 = vshrl.u32 %v1118, 7
    %v1120 = vsub.s32 3, %v1119
    %v1121 = vrot.slane %v162, %v1120
    %v1122 = vlaneseq
    %v1123 = vshrl.u32 %v1122, 7
    %v1124 = vsub.s32 3, %v1123
    %v1125 = vrot.slane %v163, %v1124
    %v1126 = vmul.f32 %v992, %v1121
    %v1127 = vmul.f32 %v992, %v1125
    %v1128 = vmul.f32 %v996, %v1121
    %v1129 = vmul.f32 %v996, %v1125
    %v1130 = vmul.f32 %v1000, %v1121
    %v1131 = vmul.f32 %v1000, %v1125
    %v1132 = vmul.f32 %v1004, %v1121
    %v1133 = vmul.f32 %v1004, %v1125
    %v1134 = vmul.f32 %v1008, %v1121
    %v1135 = vmul.f32 %v1008, %v1125
    %v1136 = vmul.f32 %v1012, %v1121
    %v1137 = vmul.f32 %v1012, %v1125
    %v1138 = vmul.f32 %v1016, %v1121
    %v1139 = vmul.f32 %v1016, %v1125
    %v1140 = vmul.f32 %v1020, %v1121
    %v1141 = vmul.f32 %v1020, %v1125
    %v1142 = vmul.f32 %v1024, %v1121
    %v1143 = vmul.f32 %v1024, %v1125
    %v1144 = vmul.f32 %v1028, %v1121
    %v1145 = vmul.f32 %v1028, %v1125
    %v1146 = vmul.f32 %v1032, %v1121
    %v1147 = vmul.f32 %v1032, %v1125
    %v1148 = vmul.f32 %v1036, %v1121
    %v1149 = vmul.f32 %v1036, %v1125
    %v1150 = vmul.f32 %v1040, %v1121
    %v1151 = vmul.f32 %v1040, %v1125
    %v1152 = vmul.f32 %v1044, %v1121
    %v1153 = vmul.f32 %v1044, %v1125
    %v1154 = vmul.f32 %v1048, %v1121
    %v1155 = vmul.f32 %v1048, %v1125
    %v1156 = vmul.f32 %v1052, %v1121
    %v1157 = vmul.f32 %v1052, %v1125
    %v1158 = vmul.f32 %v1056, %v1121
    %v1159 = vmul.f32 %v1056, %v1125
    %v1160 = vmul.f32 %v1060, %v1121
    %v1161 = vmul.f32 %v1060, %v1125
    %v1162 = vmul.f32 %v1064, %v1121
    %v1163 = vmul.f32 %v1064, %v1125
    %v1164 = vmul.f32 %v1068, %v1121
    %v1165 = vmul.f32 %v1068, %v1125
    %v1166 = vmul.f32 %v1072, %v1121
    %v1167 = vmul.f32 %v1072, %v1125
    %v1168 = vmul.f32 %v1076, %v1121
    %v1169 = vmul.f32 %v1076, %v1125
    %v1170 = vmul.f32 %v1080, %v1121
    %v1171 = vmul.f32 %v1080, %v1125
    %v1172 = vmul.f32 %v1084, %v1121
    %v1173 = vmul.f32 %v1084, %v1125
    %v1174 = vmul.f32 %v1088, %v1121
    %v1175 = vmul.f32 %v1088, %v1125
    %v1176 = vmul.f32 %v1092, %v1121
    %v1177 = vmul.f32 %v1092, %v1125
    %v1178 = vmul.f32 %v1096, %v1121
    %v1179 = vmul.f32 %v1096, %v1125
    %v1180 = vmul.f32 %v1100, %v1121
    %v1181 = vmul.f32 %v1100, %v1125
    %v1182 = vmul.f32 %v1104, %v1121
    %v1183 = vmul.f32 %v1104, %v1125
    %v1184 = vmul.f32 %v1108, %v1121
    %v1185 = vmul.f32 %v1108, %v1125
    %v1186 = vmul.f32 %v1112, %v1121
    %v1187 = vmul.f32 %v1112, %v1125
    %v1188 = vmul.f32 %v1116, %v1121
    %v1189 = vmul.f32 %v1116, %v1125
    %v1190 = vadd.f32 %v926, %v1126
    %v1191 = vadd.f32 %v927, %v1127
    %v1192 = vadd.f32 %v928, %v1128
    %v1193 = vadd.f32 %v929, %v1129
    %v1194 = vadd.f32 %v930, %v1130
    %v1195 = vadd.f32 %v931, %v1131
    %v1196 = vadd.f32 %v932, %v1132
    %v1197 = vadd.f32 %v933, %v1133
    %v1198 = vadd.f32 %v934, %v1134
    %v1199 = vadd.f32 %v935, %v1135
    %v1200 = vadd.f32 %v936, %v1136
    %v1201 = vadd.f32 %v937, %v1137
    %v1202 = vadd.f32 %v938, %v1138
    %v1203 = vadd.f32 %v939, %v1139
    %v1204 = vadd.f32 %v940, %v1140
    %v1205 = vadd.f32 %v941, %v1141
    %v1206 = vadd.f32 %v942, %v1142
    %v1207 = vadd.f32 %v943, %v1143
    %v1208 = vadd.f32 %v944, %v1144
    %v1209 = vadd.f32 %v945, %v1145
    %v1210 = vadd.f32 %v946, %v1146
    %v1211 = vadd.f32 %v947, %v1147
    %v1212 = vadd.f32 %v948, %v1148
    %v1213 = vadd.f32 %v949, %v1149
    %v1214 = vadd.f32 %v950, %v1150
    %v1215 = vadd.f32 %v951, %v1151
    %v1216 = vadd.f32 %v952, %v1152
    %v1217 = vadd.f32 %v953, %v1153
    %v1218 = vadd.f32 %v954, %v1154
    %v1219 = vadd.f32 %v955, %v1155
    %v1220 = vadd.f32 %v956, %v1156
    %v1221 = vadd.f32 %v957, %v1157
    %v1222 = vadd.f32 %v958, %v1158
    %v1223 = vadd.f32 %v959, %v1159
    %v1224 = vadd.f32 %v960, %v1160
    %v1225 = vadd.f32 %v961, %v1161
    %v1226 = vadd.f32 %v962, %v1162
    %v1227 = vadd.f32 %v963, %v1163
    %v1228 = vadd.f32 %v964, %v1164
    %v1229 = vadd.f32 %v965, %v1165
    %v1230 = vadd.f32 %v966, %v1166
    %v1231 = vadd.f32 %v967, %v1167
    %v1232 = vadd.f32 %v968, %v1168
    %v1233 = vadd.f32 %v969, %v1169
    %v1234 = vadd.f32 %v970, %v1170
    %v1235 = vadd.f32 %v971, %v1171
    %v1236 = vadd.f32 %v972, %v1172
    %v1237 = vadd.f32 %v973, %v1173
    %v1238 = vadd.f32 %v974, %v1174
    %v1239 = vadd.f32 %v975, %v1175
    %v1240 = vadd.f32 %v976, %v1176
    %v1241 = vadd.f32 %v977, %v1177
    %v1242 = vadd.f32 %v978, %v1178
    %v1243 = vadd.f32 %v979, %v1179
    %v1244 = vadd.f32 %v980, %v1180
    %v1245 = vadd.f32 %v981, %v1181
    %v1246 = vadd.f32 %v982, %v1182
    %v1247 = vadd.f32 %v983, %v1183
    %v1248 = vadd.f32 %v984, %v1184
    %v1249 = vadd.f32 %v985, %v1185
    %v1250 = vadd.f32 %v986, %v1186
    %v1251 = vadd.f32 %v987, %v1187
    %v1252 = vadd.f32 %v988, %v1188
    %v1253 = vadd.f32 %v989, %v1189
    %1254 = vset.pattern.permute.xlu0 4
    %1255 = vperm.xlu0 %1254, %v130
    %v1256 = vpop.permute.xlu0 %1255
    %1258 = vset.pattern.permute.xlu0 4
    %1259 = vperm.xlu0 %1258, %v131
    %v1260 = vpop.permute.xlu0 %1259
    %1262 = vset.pattern.permute.xlu0 4
    %1263 = vperm.xlu0 %1262, %v132
    %v1264 = vpop.permute.xlu0 %1263
    %1266 = vset.pattern.permute.xlu0 4
    %1267 = vperm.xlu0 %1266, %v133
    %v1268 = vpop.permute.xlu0 %1267
    %1270 = vset.pattern.permute.xlu0 4
    %1271 = vperm.xlu0 %1270, %v134
    %v1272 = vpop.permute.xlu0 %1271
    %1274 = vset.pattern.permute.xlu0 4
    %1275 = vperm.xlu0 %1274, %v135
    %v1276 = vpop.permute.xlu0 %1275
    %1278 = vset.pattern.permute.xlu0 4
    %1279 = vperm.xlu0 %1278, %v136
    %v1280 = vpop.permute.xlu0 %1279
    %1282 = vset.pattern.permute.xlu0 4
    %1283 = vperm.xlu0 %1282, %v137
    %v1284 = vpop.permute.xlu0 %1283
    %1286 = vset.pattern.permute.xlu0 4
    %1287 = vperm.xlu0 %1286, %v138
    %v1288 = vpop.permute.xlu0 %1287
    %1290 = vset.pattern.permute.xlu0 4
    %1291 = vperm.xlu0 %1290, %v139
    %v1292 = vpop.permute.xlu0 %1291
    %1294 = vset.pattern.permute.xlu0 4
    %1295 = vperm.xlu0 %1294, %v140
    %v1296 = vpop.permute.xlu0 %1295
    %1298 = vset.pattern.permute.xlu0 4
    %1299 = vperm.xlu0 %1298, %v141
    %v1300 = vpop.permute.xlu0 %1299
    %1302 = vset.pattern.permute.xlu0 4
    %1303 = vperm.xlu0 %1302, %v142
    %v1304 = vpop.permute.xlu0 %1303
    %1306 = vset.pattern.permute.xlu0 4
    %1307 = vperm.xlu0 %1306, %v143
    %v1308 = vpop.permute.xlu0 %1307
    %1310 = vset.pattern.permute.xlu0 4
    %1311 = vperm.xlu0 %1310, %v144
    %v1312 = vpop.permute.xlu0 %1311
    %1314 = vset.pattern.permute.xlu0 4
    %1315 = vperm.xlu0 %1314, %v145
    %v1316 = vpop.permute.xlu0 %1315
    %1318 = vset.pattern.permute.xlu0 4
    %1319 = vperm.xlu0 %1318, %v146
    %v1320 = vpop.permute.xlu0 %1319
    %1322 = vset.pattern.permute.xlu0 4
    %1323 = vperm.xlu0 %1322, %v147
    %v1324 = vpop.permute.xlu0 %1323
    %1326 = vset.pattern.permute.xlu0 4
    %1327 = vperm.xlu0 %1326, %v148
    %v1328 = vpop.permute.xlu0 %1327
    %1330 = vset.pattern.permute.xlu0 4
    %1331 = vperm.xlu0 %1330, %v149
    %v1332 = vpop.permute.xlu0 %1331
    %1334 = vset.pattern.permute.xlu0 4
    %1335 = vperm.xlu0 %1334, %v150
    %v1336 = vpop.permute.xlu0 %1335
    %1338 = vset.pattern.permute.xlu0 4
    %1339 = vperm.xlu0 %1338, %v151
    %v1340 = vpop.permute.xlu0 %1339
    %1342 = vset.pattern.permute.xlu0 4
    %1343 = vperm.xlu0 %1342, %v152
    %v1344 = vpop.permute.xlu0 %1343
    %1346 = vset.pattern.permute.xlu0 4
    %1347 = vperm.xlu0 %1346, %v153
    %v1348 = vpop.permute.xlu0 %1347
    %1350 = vset.pattern.permute.xlu0 4
    %1351 = vperm.xlu0 %1350, %v154
    %v1352 = vpop.permute.xlu0 %1351
    %1354 = vset.pattern.permute.xlu0 4
    %1355 = vperm.xlu0 %1354, %v155
    %v1356 = vpop.permute.xlu0 %1355
    %1358 = vset.pattern.permute.xlu0 4
    %1359 = vperm.xlu0 %1358, %v156
    %v1360 = vpop.permute.xlu0 %1359
    %1362 = vset.pattern.permute.xlu0 4
    %1363 = vperm.xlu0 %1362, %v157
    %v1364 = vpop.permute.xlu0 %1363
    %1366 = vset.pattern.permute.xlu0 4
    %1367 = vperm.xlu0 %1366, %v158
    %v1368 = vpop.permute.xlu0 %1367
    %1370 = vset.pattern.permute.xlu0 4
    %1371 = vperm.xlu0 %1370, %v159
    %v1372 = vpop.permute.xlu0 %1371
    %1374 = vset.pattern.permute.xlu0 4
    %1375 = vperm.xlu0 %1374, %v160
    %v1376 = vpop.permute.xlu0 %1375
    %1378 = vset.pattern.permute.xlu0 4
    %1379 = vperm.xlu0 %1378, %v161
    %v1380 = vpop.permute.xlu0 %1379
    %v1382 = vlaneseq
    %v1383 = vshrl.u32 %v1382, 7
    %v1384 = vsub.s32 4, %v1383
    %v1385 = vrot.slane %v162, %v1384
    %v1386 = vlaneseq
    %v1387 = vshrl.u32 %v1386, 7
    %v1388 = vsub.s32 4, %v1387
    %v1389 = vrot.slane %v163, %v1388
    %v1390 = vmul.f32 %v1256, %v1385
    %v1391 = vmul.f32 %v1256, %v1389
    %v1392 = vmul.f32 %v1260, %v1385
    %v1393 = vmul.f32 %v1260, %v1389
    %v1394 = vmul.f32 %v1264, %v1385
    %v1395 = vmul.f32 %v1264, %v1389
    %v1396 = vmul.f32 %v1268, %v1385
    %v1397 = vmul.f32 %v1268, %v1389
    %v1398 = vmul.f32 %v1272, %v1385
    %v1399 = vmul.f32 %v1272, %v1389
    %v1400 = vmul.f32 %v1276, %v1385
    %v1401 = vmul.f32 %v1276, %v1389
    %v1402 = vmul.f32 %v1280, %v1385
    %v1403 = vmul.f32 %v1280, %v1389
    %v1404 = vmul.f32 %v1284, %v1385
    %v1405 = vmul.f32 %v1284, %v1389
    %v1406 = vmul.f32 %v1288, %v1385
    %v1407 = vmul.f32 %v1288, %v1389
    %v1408 = vmul.f32 %v1292, %v1385
    %v1409 = vmul.f32 %v1292, %v1389
    %v1410 = vmul.f32 %v1296, %v1385
    %v1411 = vmul.f32 %v1296, %v1389
    %v1412 = vmul.f32 %v1300, %v1385
    %v1413 = vmul.f32 %v1300, %v1389
    %v1414 = vmul.f32 %v1304, %v1385
    %v1415 = vmul.f32 %v1304, %v1389
    %v1416 = vmul.f32 %v1308, %v1385
    %v1417 = vmul.f32 %v1308, %v1389
    %v1418 = vmul.f32 %v1312, %v1385
    %v1419 = vmul.f32 %v1312, %v1389
    %v1420 = vmul.f32 %v1316, %v1385
    %v1421 = vmul.f32 %v1316, %v1389
    %v1422 = vmul.f32 %v1320, %v1385
    %v1423 = vmul.f32 %v1320, %v1389
    %v1424 = vmul.f32 %v1324, %v1385
    %v1425 = vmul.f32 %v1324, %v1389
    %v1426 = vmul.f32 %v1328, %v1385
    %v1427 = vmul.f32 %v1328, %v1389
    %v1428 = vmul.f32 %v1332, %v1385
    %v1429 = vmul.f32 %v1332, %v1389
    %v1430 = vmul.f32 %v1336, %v1385
    %v1431 = vmul.f32 %v1336, %v1389
    %v1432 = vmul.f32 %v1340, %v1385
    %v1433 = vmul.f32 %v1340, %v1389
    %v1434 = vmul.f32 %v1344, %v1385
    %v1435 = vmul.f32 %v1344, %v1389
    %v1436 = vmul.f32 %v1348, %v1385
    %v1437 = vmul.f32 %v1348, %v1389
    %v1438 = vmul.f32 %v1352, %v1385
    %v1439 = vmul.f32 %v1352, %v1389
    %v1440 = vmul.f32 %v1356, %v1385
    %v1441 = vmul.f32 %v1356, %v1389
    %v1442 = vmul.f32 %v1360, %v1385
    %v1443 = vmul.f32 %v1360, %v1389
    %v1444 = vmul.f32 %v1364, %v1385
    %v1445 = vmul.f32 %v1364, %v1389
    %v1446 = vmul.f32 %v1368, %v1385
    %v1447 = vmul.f32 %v1368, %v1389
    %v1448 = vmul.f32 %v1372, %v1385
    %v1449 = vmul.f32 %v1372, %v1389
    %v1450 = vmul.f32 %v1376, %v1385
    %v1451 = vmul.f32 %v1376, %v1389
    %v1452 = vmul.f32 %v1380, %v1385
    %v1453 = vmul.f32 %v1380, %v1389
    %v1454 = vadd.f32 %v1190, %v1390
    %v1455 = vadd.f32 %v1191, %v1391
    %v1456 = vadd.f32 %v1192, %v1392
    %v1457 = vadd.f32 %v1193, %v1393
    %v1458 = vadd.f32 %v1194, %v1394
    %v1459 = vadd.f32 %v1195, %v1395
    %v1460 = vadd.f32 %v1196, %v1396
    %v1461 = vadd.f32 %v1197, %v1397
    %v1462 = vadd.f32 %v1198, %v1398
    %v1463 = vadd.f32 %v1199, %v1399
    %v1464 = vadd.f32 %v1200, %v1400
    %v1465 = vadd.f32 %v1201, %v1401
    %v1466 = vadd.f32 %v1202, %v1402
    %v1467 = vadd.f32 %v1203, %v1403
    %v1468 = vadd.f32 %v1204, %v1404
    %v1469 = vadd.f32 %v1205, %v1405
    %v1470 = vadd.f32 %v1206, %v1406
    %v1471 = vadd.f32 %v1207, %v1407
    %v1472 = vadd.f32 %v1208, %v1408
    %v1473 = vadd.f32 %v1209, %v1409
    %v1474 = vadd.f32 %v1210, %v1410
    %v1475 = vadd.f32 %v1211, %v1411
    %v1476 = vadd.f32 %v1212, %v1412
    %v1477 = vadd.f32 %v1213, %v1413
    %v1478 = vadd.f32 %v1214, %v1414
    %v1479 = vadd.f32 %v1215, %v1415
    %v1480 = vadd.f32 %v1216, %v1416
    %v1481 = vadd.f32 %v1217, %v1417
    %v1482 = vadd.f32 %v1218, %v1418
    %v1483 = vadd.f32 %v1219, %v1419
    %v1484 = vadd.f32 %v1220, %v1420
    %v1485 = vadd.f32 %v1221, %v1421
    %v1486 = vadd.f32 %v1222, %v1422
    %v1487 = vadd.f32 %v1223, %v1423
    %v1488 = vadd.f32 %v1224, %v1424
    %v1489 = vadd.f32 %v1225, %v1425
    %v1490 = vadd.f32 %v1226, %v1426
    %v1491 = vadd.f32 %v1227, %v1427
    %v1492 = vadd.f32 %v1228, %v1428
    %v1493 = vadd.f32 %v1229, %v1429
    %v1494 = vadd.f32 %v1230, %v1430
    %v1495 = vadd.f32 %v1231, %v1431
    %v1496 = vadd.f32 %v1232, %v1432
    %v1497 = vadd.f32 %v1233, %v1433
    %v1498 = vadd.f32 %v1234, %v1434
    %v1499 = vadd.f32 %v1235, %v1435
    %v1500 = vadd.f32 %v1236, %v1436
    %v1501 = vadd.f32 %v1237, %v1437
    %v1502 = vadd.f32 %v1238, %v1438
    %v1503 = vadd.f32 %v1239, %v1439
    %v1504 = vadd.f32 %v1240, %v1440
    %v1505 = vadd.f32 %v1241, %v1441
    %v1506 = vadd.f32 %v1242, %v1442
    %v1507 = vadd.f32 %v1243, %v1443
    %v1508 = vadd.f32 %v1244, %v1444
    %v1509 = vadd.f32 %v1245, %v1445
    %v1510 = vadd.f32 %v1246, %v1446
    %v1511 = vadd.f32 %v1247, %v1447
    %v1512 = vadd.f32 %v1248, %v1448
    %v1513 = vadd.f32 %v1249, %v1449
    %v1514 = vadd.f32 %v1250, %v1450
    %v1515 = vadd.f32 %v1251, %v1451
    %v1516 = vadd.f32 %v1252, %v1452
    %v1517 = vadd.f32 %v1253, %v1453
    %1518 = vset.pattern.permute.xlu0 5
    %1519 = vperm.xlu0 %1518, %v130
    %v1520 = vpop.permute.xlu0 %1519
    %1522 = vset.pattern.permute.xlu0 5
    %1523 = vperm.xlu0 %1522, %v131
    %v1524 = vpop.permute.xlu0 %1523
    %1526 = vset.pattern.permute.xlu0 5
    %1527 = vperm.xlu0 %1526, %v132
    %v1528 = vpop.permute.xlu0 %1527
    %1530 = vset.pattern.permute.xlu0 5
    %1531 = vperm.xlu0 %1530, %v133
    %v1532 = vpop.permute.xlu0 %1531
    %1534 = vset.pattern.permute.xlu0 5
    %1535 = vperm.xlu0 %1534, %v134
    %v1536 = vpop.permute.xlu0 %1535
    %1538 = vset.pattern.permute.xlu0 5
    %1539 = vperm.xlu0 %1538, %v135
    %v1540 = vpop.permute.xlu0 %1539
    %1542 = vset.pattern.permute.xlu0 5
    %1543 = vperm.xlu0 %1542, %v136
    %v1544 = vpop.permute.xlu0 %1543
    %1546 = vset.pattern.permute.xlu0 5
    %1547 = vperm.xlu0 %1546, %v137
    %v1548 = vpop.permute.xlu0 %1547
    %1550 = vset.pattern.permute.xlu0 5
    %1551 = vperm.xlu0 %1550, %v138
    %v1552 = vpop.permute.xlu0 %1551
    %1554 = vset.pattern.permute.xlu0 5
    %1555 = vperm.xlu0 %1554, %v139
    %v1556 = vpop.permute.xlu0 %1555
    %1558 = vset.pattern.permute.xlu0 5
    %1559 = vperm.xlu0 %1558, %v140
    %v1560 = vpop.permute.xlu0 %1559
    %1562 = vset.pattern.permute.xlu0 5
    %1563 = vperm.xlu0 %1562, %v141
    %v1564 = vpop.permute.xlu0 %1563
    %1566 = vset.pattern.permute.xlu0 5
    %1567 = vperm.xlu0 %1566, %v142
    %v1568 = vpop.permute.xlu0 %1567
    %1570 = vset.pattern.permute.xlu0 5
    %1571 = vperm.xlu0 %1570, %v143
    %v1572 = vpop.permute.xlu0 %1571
    %1574 = vset.pattern.permute.xlu0 5
    %1575 = vperm.xlu0 %1574, %v144
    %v1576 = vpop.permute.xlu0 %1575
    %1578 = vset.pattern.permute.xlu0 5
    %1579 = vperm.xlu0 %1578, %v145
    %v1580 = vpop.permute.xlu0 %1579
    %1582 = vset.pattern.permute.xlu0 5
    %1583 = vperm.xlu0 %1582, %v146
    %v1584 = vpop.permute.xlu0 %1583
    %1586 = vset.pattern.permute.xlu0 5
    %1587 = vperm.xlu0 %1586, %v147
    %v1588 = vpop.permute.xlu0 %1587
    %1590 = vset.pattern.permute.xlu0 5
    %1591 = vperm.xlu0 %1590, %v148
    %v1592 = vpop.permute.xlu0 %1591
    %1594 = vset.pattern.permute.xlu0 5
    %1595 = vperm.xlu0 %1594, %v149
    %v1596 = vpop.permute.xlu0 %1595
    %1598 = vset.pattern.permute.xlu0 5
    %1599 = vperm.xlu0 %1598, %v150
    %v1600 = vpop.permute.xlu0 %1599
    %1602 = vset.pattern.permute.xlu0 5
    %1603 = vperm.xlu0 %1602, %v151
    %v1604 = vpop.permute.xlu0 %1603
    %1606 = vset.pattern.permute.xlu0 5
    %1607 = vperm.xlu0 %1606, %v152
    %v1608 = vpop.permute.xlu0 %1607
    %1610 = vset.pattern.permute.xlu0 5
    %1611 = vperm.xlu0 %1610, %v153
    %v1612 = vpop.permute.xlu0 %1611
    %1614 = vset.pattern.permute.xlu0 5
    %1615 = vperm.xlu0 %1614, %v154
    %v1616 = vpop.permute.xlu0 %1615
    %1618 = vset.pattern.permute.xlu0 5
    %1619 = vperm.xlu0 %1618, %v155
    %v1620 = vpop.permute.xlu0 %1619
    %1622 = vset.pattern.permute.xlu0 5
    %1623 = vperm.xlu0 %1622, %v156
    %v1624 = vpop.permute.xlu0 %1623
    %1626 = vset.pattern.permute.xlu0 5
    %1627 = vperm.xlu0 %1626, %v157
    %v1628 = vpop.permute.xlu0 %1627
    %1630 = vset.pattern.permute.xlu0 5
    %1631 = vperm.xlu0 %1630, %v158
    %v1632 = vpop.permute.xlu0 %1631
    %1634 = vset.pattern.permute.xlu0 5
    %1635 = vperm.xlu0 %1634, %v159
    %v1636 = vpop.permute.xlu0 %1635
    %1638 = vset.pattern.permute.xlu0 5
    %1639 = vperm.xlu0 %1638, %v160
    %v1640 = vpop.permute.xlu0 %1639
    %1642 = vset.pattern.permute.xlu0 5
    %1643 = vperm.xlu0 %1642, %v161
    %v1644 = vpop.permute.xlu0 %1643
    %v1646 = vlaneseq
    %v1647 = vshrl.u32 %v1646, 7
    %v1648 = vsub.s32 5, %v1647
    %v1649 = vrot.slane %v162, %v1648
    %v1650 = vlaneseq
    %v1651 = vshrl.u32 %v1650, 7
    %v1652 = vsub.s32 5, %v1651
    %v1653 = vrot.slane %v163, %v1652
    %v1654 = vmul.f32 %v1520, %v1649
    %v1655 = vmul.f32 %v1520, %v1653
    %v1656 = vmul.f32 %v1524, %v1649
    %v1657 = vmul.f32 %v1524, %v1653
    %v1658 = vmul.f32 %v1528, %v1649
    %v1659 = vmul.f32 %v1528, %v1653
    %v1660 = vmul.f32 %v1532, %v1649
    %v1661 = vmul.f32 %v1532, %v1653
    %v1662 = vmul.f32 %v1536, %v1649
    %v1663 = vmul.f32 %v1536, %v1653
    %v1664 = vmul.f32 %v1540, %v1649
    %v1665 = vmul.f32 %v1540, %v1653
    %v1666 = vmul.f32 %v1544, %v1649
    %v1667 = vmul.f32 %v1544, %v1653
    %v1668 = vmul.f32 %v1548, %v1649
    %v1669 = vmul.f32 %v1548, %v1653
    %v1670 = vmul.f32 %v1552, %v1649
    %v1671 = vmul.f32 %v1552, %v1653
    %v1672 = vmul.f32 %v1556, %v1649
    %v1673 = vmul.f32 %v1556, %v1653
    %v1674 = vmul.f32 %v1560, %v1649
    %v1675 = vmul.f32 %v1560, %v1653
    %v1676 = vmul.f32 %v1564, %v1649
    %v1677 = vmul.f32 %v1564, %v1653
    %v1678 = vmul.f32 %v1568, %v1649
    %v1679 = vmul.f32 %v1568, %v1653
    %v1680 = vmul.f32 %v1572, %v1649
    %v1681 = vmul.f32 %v1572, %v1653
    %v1682 = vmul.f32 %v1576, %v1649
    %v1683 = vmul.f32 %v1576, %v1653
    %v1684 = vmul.f32 %v1580, %v1649
    %v1685 = vmul.f32 %v1580, %v1653
    %v1686 = vmul.f32 %v1584, %v1649
    %v1687 = vmul.f32 %v1584, %v1653
    %v1688 = vmul.f32 %v1588, %v1649
    %v1689 = vmul.f32 %v1588, %v1653
    %v1690 = vmul.f32 %v1592, %v1649
    %v1691 = vmul.f32 %v1592, %v1653
    %v1692 = vmul.f32 %v1596, %v1649
    %v1693 = vmul.f32 %v1596, %v1653
    %v1694 = vmul.f32 %v1600, %v1649
    %v1695 = vmul.f32 %v1600, %v1653
    %v1696 = vmul.f32 %v1604, %v1649
    %v1697 = vmul.f32 %v1604, %v1653
    %v1698 = vmul.f32 %v1608, %v1649
    %v1699 = vmul.f32 %v1608, %v1653
    %v1700 = vmul.f32 %v1612, %v1649
    %v1701 = vmul.f32 %v1612, %v1653
    %v1702 = vmul.f32 %v1616, %v1649
    %v1703 = vmul.f32 %v1616, %v1653
    %v1704 = vmul.f32 %v1620, %v1649
    %v1705 = vmul.f32 %v1620, %v1653
    %v1706 = vmul.f32 %v1624, %v1649
    %v1707 = vmul.f32 %v1624, %v1653
    %v1708 = vmul.f32 %v1628, %v1649
    %v1709 = vmul.f32 %v1628, %v1653
    %v1710 = vmul.f32 %v1632, %v1649
    %v1711 = vmul.f32 %v1632, %v1653
    %v1712 = vmul.f32 %v1636, %v1649
    %v1713 = vmul.f32 %v1636, %v1653
    %v1714 = vmul.f32 %v1640, %v1649
    %v1715 = vmul.f32 %v1640, %v1653
    %v1716 = vmul.f32 %v1644, %v1649
    %v1717 = vmul.f32 %v1644, %v1653
    %v1718 = vadd.f32 %v1454, %v1654
    %v1719 = vadd.f32 %v1455, %v1655
    %v1720 = vadd.f32 %v1456, %v1656
    %v1721 = vadd.f32 %v1457, %v1657
    %v1722 = vadd.f32 %v1458, %v1658
    %v1723 = vadd.f32 %v1459, %v1659
    %v1724 = vadd.f32 %v1460, %v1660
    %v1725 = vadd.f32 %v1461, %v1661
    %v1726 = vadd.f32 %v1462, %v1662
    %v1727 = vadd.f32 %v1463, %v1663
    %v1728 = vadd.f32 %v1464, %v1664
    %v1729 = vadd.f32 %v1465, %v1665
    %v1730 = vadd.f32 %v1466, %v1666
    %v1731 = vadd.f32 %v1467, %v1667
    %v1732 = vadd.f32 %v1468, %v1668
    %v1733 = vadd.f32 %v1469, %v1669
    %v1734 = vadd.f32 %v1470, %v1670
    %v1735 = vadd.f32 %v1471, %v1671
    %v1736 = vadd.f32 %v1472, %v1672
    %v1737 = vadd.f32 %v1473, %v1673
    %v1738 = vadd.f32 %v1474, %v1674
    %v1739 = vadd.f32 %v1475, %v1675
    %v1740 = vadd.f32 %v1476, %v1676
    %v1741 = vadd.f32 %v1477, %v1677
    %v1742 = vadd.f32 %v1478, %v1678
    %v1743 = vadd.f32 %v1479, %v1679
    %v1744 = vadd.f32 %v1480, %v1680
    %v1745 = vadd.f32 %v1481, %v1681
    %v1746 = vadd.f32 %v1482, %v1682
    %v1747 = vadd.f32 %v1483, %v1683
    %v1748 = vadd.f32 %v1484, %v1684
    %v1749 = vadd.f32 %v1485, %v1685
    %v1750 = vadd.f32 %v1486, %v1686
    %v1751 = vadd.f32 %v1487, %v1687
    %v1752 = vadd.f32 %v1488, %v1688
    %v1753 = vadd.f32 %v1489, %v1689
    %v1754 = vadd.f32 %v1490, %v1690
    %v1755 = vadd.f32 %v1491, %v1691
    %v1756 = vadd.f32 %v1492, %v1692
    %v1757 = vadd.f32 %v1493, %v1693
    %v1758 = vadd.f32 %v1494, %v1694
    %v1759 = vadd.f32 %v1495, %v1695
    %v1760 = vadd.f32 %v1496, %v1696
    %v1761 = vadd.f32 %v1497, %v1697
    %v1762 = vadd.f32 %v1498, %v1698
    %v1763 = vadd.f32 %v1499, %v1699
    %v1764 = vadd.f32 %v1500, %v1700
    %v1765 = vadd.f32 %v1501, %v1701
    %v1766 = vadd.f32 %v1502, %v1702
    %v1767 = vadd.f32 %v1503, %v1703
    %v1768 = vadd.f32 %v1504, %v1704
    %v1769 = vadd.f32 %v1505, %v1705
    %v1770 = vadd.f32 %v1506, %v1706
    %v1771 = vadd.f32 %v1507, %v1707
    %v1772 = vadd.f32 %v1508, %v1708
    %v1773 = vadd.f32 %v1509, %v1709
    %v1774 = vadd.f32 %v1510, %v1710
    %v1775 = vadd.f32 %v1511, %v1711
    %v1776 = vadd.f32 %v1512, %v1712
    %v1777 = vadd.f32 %v1513, %v1713
    %v1778 = vadd.f32 %v1514, %v1714
    %v1779 = vadd.f32 %v1515, %v1715
    %v1780 = vadd.f32 %v1516, %v1716
    %v1781 = vadd.f32 %v1517, %v1717
    %1782 = vset.pattern.permute.xlu0 6
    %1783 = vperm.xlu0 %1782, %v130
    %v1784 = vpop.permute.xlu0 %1783
    %1786 = vset.pattern.permute.xlu0 6
    %1787 = vperm.xlu0 %1786, %v131
    %v1788 = vpop.permute.xlu0 %1787
    %1790 = vset.pattern.permute.xlu0 6
    %1791 = vperm.xlu0 %1790, %v132
    %v1792 = vpop.permute.xlu0 %1791
    %1794 = vset.pattern.permute.xlu0 6
    %1795 = vperm.xlu0 %1794, %v133
    %v1796 = vpop.permute.xlu0 %1795
    %1798 = vset.pattern.permute.xlu0 6
    %1799 = vperm.xlu0 %1798, %v134
    %v1800 = vpop.permute.xlu0 %1799
    %1802 = vset.pattern.permute.xlu0 6
    %1803 = vperm.xlu0 %1802, %v135
    %v1804 = vpop.permute.xlu0 %1803
    %1806 = vset.pattern.permute.xlu0 6
    %1807 = vperm.xlu0 %1806, %v136
    %v1808 = vpop.permute.xlu0 %1807
    %1810 = vset.pattern.permute.xlu0 6
    %1811 = vperm.xlu0 %1810, %v137
    %v1812 = vpop.permute.xlu0 %1811
    %1814 = vset.pattern.permute.xlu0 6
    %1815 = vperm.xlu0 %1814, %v138
    %v1816 = vpop.permute.xlu0 %1815
    %1818 = vset.pattern.permute.xlu0 6
    %1819 = vperm.xlu0 %1818, %v139
    %v1820 = vpop.permute.xlu0 %1819
    %1822 = vset.pattern.permute.xlu0 6
    %1823 = vperm.xlu0 %1822, %v140
    %v1824 = vpop.permute.xlu0 %1823
    %1826 = vset.pattern.permute.xlu0 6
    %1827 = vperm.xlu0 %1826, %v141
    %v1828 = vpop.permute.xlu0 %1827
    %1830 = vset.pattern.permute.xlu0 6
    %1831 = vperm.xlu0 %1830, %v142
    %v1832 = vpop.permute.xlu0 %1831
    %1834 = vset.pattern.permute.xlu0 6
    %1835 = vperm.xlu0 %1834, %v143
    %v1836 = vpop.permute.xlu0 %1835
    %1838 = vset.pattern.permute.xlu0 6
    %1839 = vperm.xlu0 %1838, %v144
    %v1840 = vpop.permute.xlu0 %1839
    %1842 = vset.pattern.permute.xlu0 6
    %1843 = vperm.xlu0 %1842, %v145
    %v1844 = vpop.permute.xlu0 %1843
    %1846 = vset.pattern.permute.xlu0 6
    %1847 = vperm.xlu0 %1846, %v146
    %v1848 = vpop.permute.xlu0 %1847
    %1850 = vset.pattern.permute.xlu0 6
    %1851 = vperm.xlu0 %1850, %v147
    %v1852 = vpop.permute.xlu0 %1851
    %1854 = vset.pattern.permute.xlu0 6
    %1855 = vperm.xlu0 %1854, %v148
    %v1856 = vpop.permute.xlu0 %1855
    %1858 = vset.pattern.permute.xlu0 6
    %1859 = vperm.xlu0 %1858, %v149
    %v1860 = vpop.permute.xlu0 %1859
    %1862 = vset.pattern.permute.xlu0 6
    %1863 = vperm.xlu0 %1862, %v150
    %v1864 = vpop.permute.xlu0 %1863
    %1866 = vset.pattern.permute.xlu0 6
    %1867 = vperm.xlu0 %1866, %v151
    %v1868 = vpop.permute.xlu0 %1867
    %1870 = vset.pattern.permute.xlu0 6
    %1871 = vperm.xlu0 %1870, %v152
    %v1872 = vpop.permute.xlu0 %1871
    %1874 = vset.pattern.permute.xlu0 6
    %1875 = vperm.xlu0 %1874, %v153
    %v1876 = vpop.permute.xlu0 %1875
    %1878 = vset.pattern.permute.xlu0 6
    %1879 = vperm.xlu0 %1878, %v154
    %v1880 = vpop.permute.xlu0 %1879
    %1882 = vset.pattern.permute.xlu0 6
    %1883 = vperm.xlu0 %1882, %v155
    %v1884 = vpop.permute.xlu0 %1883
    %1886 = vset.pattern.permute.xlu0 6
    %1887 = vperm.xlu0 %1886, %v156
    %v1888 = vpop.permute.xlu0 %1887
    %1890 = vset.pattern.permute.xlu0 6
    %1891 = vperm.xlu0 %1890, %v157
    %v1892 = vpop.permute.xlu0 %1891
    %1894 = vset.pattern.permute.xlu0 6
    %1895 = vperm.xlu0 %1894, %v158
    %v1896 = vpop.permute.xlu0 %1895
    %1898 = vset.pattern.permute.xlu0 6
    %1899 = vperm.xlu0 %1898, %v159
    %v1900 = vpop.permute.xlu0 %1899
    %1902 = vset.pattern.permute.xlu0 6
    %1903 = vperm.xlu0 %1902, %v160
    %v1904 = vpop.permute.xlu0 %1903
    %1906 = vset.pattern.permute.xlu0 6
    %1907 = vperm.xlu0 %1906, %v161
    %v1908 = vpop.permute.xlu0 %1907
    %v1910 = vlaneseq
    %v1911 = vshrl.u32 %v1910, 7
    %v1912 = vsub.s32 6, %v1911
    %v1913 = vrot.slane %v162, %v1912
    %v1914 = vlaneseq
    %v1915 = vshrl.u32 %v1914, 7
    %v1916 = vsub.s32 6, %v1915
    %v1917 = vrot.slane %v163, %v1916
    %v1918 = vmul.f32 %v1784, %v1913
    %v1919 = vmul.f32 %v1784, %v1917
    %v1920 = vmul.f32 %v1788, %v1913
    %v1921 = vmul.f32 %v1788, %v1917
    %v1922 = vmul.f32 %v1792, %v1913
    %v1923 = vmul.f32 %v1792, %v1917
    %v1924 = vmul.f32 %v1796, %v1913
    %v1925 = vmul.f32 %v1796, %v1917
    %v1926 = vmul.f32 %v1800, %v1913
    %v1927 = vmul.f32 %v1800, %v1917
    %v1928 = vmul.f32 %v1804, %v1913
    %v1929 = vmul.f32 %v1804, %v1917
    %v1930 = vmul.f32 %v1808, %v1913
    %v1931 = vmul.f32 %v1808, %v1917
    %v1932 = vmul.f32 %v1812, %v1913
    %v1933 = vmul.f32 %v1812, %v1917
    %v1934 = vmul.f32 %v1816, %v1913
    %v1935 = vmul.f32 %v1816, %v1917
    %v1936 = vmul.f32 %v1820, %v1913
    %v1937 = vmul.f32 %v1820, %v1917
    %v1938 = vmul.f32 %v1824, %v1913
    %v1939 = vmul.f32 %v1824, %v1917
    %v1940 = vmul.f32 %v1828, %v1913
    %v1941 = vmul.f32 %v1828, %v1917
    %v1942 = vmul.f32 %v1832, %v1913
    %v1943 = vmul.f32 %v1832, %v1917
    %v1944 = vmul.f32 %v1836, %v1913
    %v1945 = vmul.f32 %v1836, %v1917
    %v1946 = vmul.f32 %v1840, %v1913
    %v1947 = vmul.f32 %v1840, %v1917
    %v1948 = vmul.f32 %v1844, %v1913
    %v1949 = vmul.f32 %v1844, %v1917
    %v1950 = vmul.f32 %v1848, %v1913
    %v1951 = vmul.f32 %v1848, %v1917
    %v1952 = vmul.f32 %v1852, %v1913
    %v1953 = vmul.f32 %v1852, %v1917
    %v1954 = vmul.f32 %v1856, %v1913
    %v1955 = vmul.f32 %v1856, %v1917
    %v1956 = vmul.f32 %v1860, %v1913
    %v1957 = vmul.f32 %v1860, %v1917
    %v1958 = vmul.f32 %v1864, %v1913
    %v1959 = vmul.f32 %v1864, %v1917
    %v1960 = vmul.f32 %v1868, %v1913
    %v1961 = vmul.f32 %v1868, %v1917
    %v1962 = vmul.f32 %v1872, %v1913
    %v1963 = vmul.f32 %v1872, %v1917
    %v1964 = vmul.f32 %v1876, %v1913
    %v1965 = vmul.f32 %v1876, %v1917
    %v1966 = vmul.f32 %v1880, %v1913
    %v1967 = vmul.f32 %v1880, %v1917
    %v1968 = vmul.f32 %v1884, %v1913
    %v1969 = vmul.f32 %v1884, %v1917
    %v1970 = vmul.f32 %v1888, %v1913
    %v1971 = vmul.f32 %v1888, %v1917
    %v1972 = vmul.f32 %v1892, %v1913
    %v1973 = vmul.f32 %v1892, %v1917
    %v1974 = vmul.f32 %v1896, %v1913
    %v1975 = vmul.f32 %v1896, %v1917
    %v1976 = vmul.f32 %v1900, %v1913
    %v1977 = vmul.f32 %v1900, %v1917
    %v1978 = vmul.f32 %v1904, %v1913
    %v1979 = vmul.f32 %v1904, %v1917
    %v1980 = vmul.f32 %v1908, %v1913
    %v1981 = vmul.f32 %v1908, %v1917
    %v1982 = vadd.f32 %v1718, %v1918
    %v1983 = vadd.f32 %v1719, %v1919
    %v1984 = vadd.f32 %v1720, %v1920
    %v1985 = vadd.f32 %v1721, %v1921
    %v1986 = vadd.f32 %v1722, %v1922
    %v1987 = vadd.f32 %v1723, %v1923
    %v1988 = vadd.f32 %v1724, %v1924
    %v1989 = vadd.f32 %v1725, %v1925
    %v1990 = vadd.f32 %v1726, %v1926
    %v1991 = vadd.f32 %v1727, %v1927
    %v1992 = vadd.f32 %v1728, %v1928
    %v1993 = vadd.f32 %v1729, %v1929
    %v1994 = vadd.f32 %v1730, %v1930
    %v1995 = vadd.f32 %v1731, %v1931
    %v1996 = vadd.f32 %v1732, %v1932
    %v1997 = vadd.f32 %v1733, %v1933
    %v1998 = vadd.f32 %v1734, %v1934
    %v1999 = vadd.f32 %v1735, %v1935
    %v2000 = vadd.f32 %v1736, %v1936
    %v2001 = vadd.f32 %v1737, %v1937
    %v2002 = vadd.f32 %v1738, %v1938
    %v2003 = vadd.f32 %v1739, %v1939
    %v2004 = vadd.f32 %v1740, %v1940
    %v2005 = vadd.f32 %v1741, %v1941
    %v2006 = vadd.f32 %v1742, %v1942
    %v2007 = vadd.f32 %v1743, %v1943
    %v2008 = vadd.f32 %v1744, %v1944
    %v2009 = vadd.f32 %v1745, %v1945
    %v2010 = vadd.f32 %v1746, %v1946
    %v2011 = vadd.f32 %v1747, %v1947
    %v2012 = vadd.f32 %v1748, %v1948
    %v2013 = vadd.f32 %v1749, %v1949
    %v2014 = vadd.f32 %v1750, %v1950
    %v2015 = vadd.f32 %v1751, %v1951
    %v2016 = vadd.f32 %v1752, %v1952
    %v2017 = vadd.f32 %v1753, %v1953
    %v2018 = vadd.f32 %v1754, %v1954
    %v2019 = vadd.f32 %v1755, %v1955
    %v2020 = vadd.f32 %v1756, %v1956
    %v2021 = vadd.f32 %v1757, %v1957
    %v2022 = vadd.f32 %v1758, %v1958
    %v2023 = vadd.f32 %v1759, %v1959
    %v2024 = vadd.f32 %v1760, %v1960
    %v2025 = vadd.f32 %v1761, %v1961
    %v2026 = vadd.f32 %v1762, %v1962
    %v2027 = vadd.f32 %v1763, %v1963
    %v2028 = vadd.f32 %v1764, %v1964
    %v2029 = vadd.f32 %v1765, %v1965
    %v2030 = vadd.f32 %v1766, %v1966
    %v2031 = vadd.f32 %v1767, %v1967
    %v2032 = vadd.f32 %v1768, %v1968
    %v2033 = vadd.f32 %v1769, %v1969
    %v2034 = vadd.f32 %v1770, %v1970
    %v2035 = vadd.f32 %v1771, %v1971
    %v2036 = vadd.f32 %v1772, %v1972
    %v2037 = vadd.f32 %v1773, %v1973
    %v2038 = vadd.f32 %v1774, %v1974
    %v2039 = vadd.f32 %v1775, %v1975
    %v2040 = vadd.f32 %v1776, %v1976
    %v2041 = vadd.f32 %v1777, %v1977
    %v2042 = vadd.f32 %v1778, %v1978
    %v2043 = vadd.f32 %v1779, %v1979
    %v2044 = vadd.f32 %v1780, %v1980
    %v2045 = vadd.f32 %v1781, %v1981
    %2046 = vset.pattern.permute.xlu0 7
    %2047 = vperm.xlu0 %2046, %v130
    %v2048 = vpop.permute.xlu0 %2047
    %2050 = vset.pattern.permute.xlu0 7
    %2051 = vperm.xlu0 %2050, %v131
    %v2052 = vpop.permute.xlu0 %2051
    %2054 = vset.pattern.permute.xlu0 7
    %2055 = vperm.xlu0 %2054, %v132
    %v2056 = vpop.permute.xlu0 %2055
    %2058 = vset.pattern.permute.xlu0 7
    %2059 = vperm.xlu0 %2058, %v133
    %v2060 = vpop.permute.xlu0 %2059
    %2062 = vset.pattern.permute.xlu0 7
    %2063 = vperm.xlu0 %2062, %v134
    %v2064 = vpop.permute.xlu0 %2063
    %2066 = vset.pattern.permute.xlu0 7
    %2067 = vperm.xlu0 %2066, %v135
    %v2068 = vpop.permute.xlu0 %2067
    %2070 = vset.pattern.permute.xlu0 7
    %2071 = vperm.xlu0 %2070, %v136
    %v2072 = vpop.permute.xlu0 %2071
    %2074 = vset.pattern.permute.xlu0 7
    %2075 = vperm.xlu0 %2074, %v137
    %v2076 = vpop.permute.xlu0 %2075
    %2078 = vset.pattern.permute.xlu0 7
    %2079 = vperm.xlu0 %2078, %v138
    %v2080 = vpop.permute.xlu0 %2079
    %2082 = vset.pattern.permute.xlu0 7
    %2083 = vperm.xlu0 %2082, %v139
    %v2084 = vpop.permute.xlu0 %2083
    %2086 = vset.pattern.permute.xlu0 7
    %2087 = vperm.xlu0 %2086, %v140
    %v2088 = vpop.permute.xlu0 %2087
    %2090 = vset.pattern.permute.xlu0 7
    %2091 = vperm.xlu0 %2090, %v141
    %v2092 = vpop.permute.xlu0 %2091
    %2094 = vset.pattern.permute.xlu0 7
    %2095 = vperm.xlu0 %2094, %v142
    %v2096 = vpop.permute.xlu0 %2095
    %2098 = vset.pattern.permute.xlu0 7
    %2099 = vperm.xlu0 %2098, %v143
    %v2100 = vpop.permute.xlu0 %2099
    %2102 = vset.pattern.permute.xlu0 7
    %2103 = vperm.xlu0 %2102, %v144
    %v2104 = vpop.permute.xlu0 %2103
    %2106 = vset.pattern.permute.xlu0 7
    %2107 = vperm.xlu0 %2106, %v145
    %v2108 = vpop.permute.xlu0 %2107
    %2110 = vset.pattern.permute.xlu0 7
    %2111 = vperm.xlu0 %2110, %v146
    %v2112 = vpop.permute.xlu0 %2111
    %2114 = vset.pattern.permute.xlu0 7
    %2115 = vperm.xlu0 %2114, %v147
    %v2116 = vpop.permute.xlu0 %2115
    %2118 = vset.pattern.permute.xlu0 7
    %2119 = vperm.xlu0 %2118, %v148
    %v2120 = vpop.permute.xlu0 %2119
    %2122 = vset.pattern.permute.xlu0 7
    %2123 = vperm.xlu0 %2122, %v149
    %v2124 = vpop.permute.xlu0 %2123
    %2126 = vset.pattern.permute.xlu0 7
    %2127 = vperm.xlu0 %2126, %v150
    %v2128 = vpop.permute.xlu0 %2127
    %2130 = vset.pattern.permute.xlu0 7
    %2131 = vperm.xlu0 %2130, %v151
    %v2132 = vpop.permute.xlu0 %2131
    %2134 = vset.pattern.permute.xlu0 7
    %2135 = vperm.xlu0 %2134, %v152
    %v2136 = vpop.permute.xlu0 %2135
    %2138 = vset.pattern.permute.xlu0 7
    %2139 = vperm.xlu0 %2138, %v153
    %v2140 = vpop.permute.xlu0 %2139
    %2142 = vset.pattern.permute.xlu0 7
    %2143 = vperm.xlu0 %2142, %v154
    %v2144 = vpop.permute.xlu0 %2143
    %2146 = vset.pattern.permute.xlu0 7
    %2147 = vperm.xlu0 %2146, %v155
    %v2148 = vpop.permute.xlu0 %2147
    %2150 = vset.pattern.permute.xlu0 7
    %2151 = vperm.xlu0 %2150, %v156
    %v2152 = vpop.permute.xlu0 %2151
    %2154 = vset.pattern.permute.xlu0 7
    %2155 = vperm.xlu0 %2154, %v157
    %v2156 = vpop.permute.xlu0 %2155
    %2158 = vset.pattern.permute.xlu0 7
    %2159 = vperm.xlu0 %2158, %v158
    %v2160 = vpop.permute.xlu0 %2159
    %2162 = vset.pattern.permute.xlu0 7
    %2163 = vperm.xlu0 %2162, %v159
    %v2164 = vpop.permute.xlu0 %2163
    %2166 = vset.pattern.permute.xlu0 7
    %2167 = vperm.xlu0 %2166, %v160
    %v2168 = vpop.permute.xlu0 %2167
    %2170 = vset.pattern.permute.xlu0 7
    %2171 = vperm.xlu0 %2170, %v161
    %v2172 = vpop.permute.xlu0 %2171
    %v2174 = vlaneseq
    %v2175 = vshrl.u32 %v2174, 7
    %v2176 = vsub.s32 7, %v2175
    %v2177 = vrot.slane %v162, %v2176
    %v2178 = vlaneseq
    %v2179 = vshrl.u32 %v2178, 7
    %v2180 = vsub.s32 7, %v2179
    %v2181 = vrot.slane %v163, %v2180
    %v2182 = vmul.f32 %v2048, %v2177
    %v2183 = vmul.f32 %v2048, %v2181
    %v2184 = vmul.f32 %v2052, %v2177
    %v2185 = vmul.f32 %v2052, %v2181
    %v2186 = vmul.f32 %v2056, %v2177
    %v2187 = vmul.f32 %v2056, %v2181
    %v2188 = vmul.f32 %v2060, %v2177
    %v2189 = vmul.f32 %v2060, %v2181
    %v2190 = vmul.f32 %v2064, %v2177
    %v2191 = vmul.f32 %v2064, %v2181
    %v2192 = vmul.f32 %v2068, %v2177
    %v2193 = vmul.f32 %v2068, %v2181
    %v2194 = vmul.f32 %v2072, %v2177
    %v2195 = vmul.f32 %v2072, %v2181
    %v2196 = vmul.f32 %v2076, %v2177
    %v2197 = vmul.f32 %v2076, %v2181
    %v2198 = vmul.f32 %v2080, %v2177
    %v2199 = vmul.f32 %v2080, %v2181
    %v2200 = vmul.f32 %v2084, %v2177
    %v2201 = vmul.f32 %v2084, %v2181
    %v2202 = vmul.f32 %v2088, %v2177
    %v2203 = vmul.f32 %v2088, %v2181
    %v2204 = vmul.f32 %v2092, %v2177
    %v2205 = vmul.f32 %v2092, %v2181
    %v2206 = vmul.f32 %v2096, %v2177
    %v2207 = vmul.f32 %v2096, %v2181
    %v2208 = vmul.f32 %v2100, %v2177
    %v2209 = vmul.f32 %v2100, %v2181
    %v2210 = vmul.f32 %v2104, %v2177
    %v2211 = vmul.f32 %v2104, %v2181
    %v2212 = vmul.f32 %v2108, %v2177
    %v2213 = vmul.f32 %v2108, %v2181
    %v2214 = vmul.f32 %v2112, %v2177
    %v2215 = vmul.f32 %v2112, %v2181
    %v2216 = vmul.f32 %v2116, %v2177
    %v2217 = vmul.f32 %v2116, %v2181
    %v2218 = vmul.f32 %v2120, %v2177
    %v2219 = vmul.f32 %v2120, %v2181
    %v2220 = vmul.f32 %v2124, %v2177
    %v2221 = vmul.f32 %v2124, %v2181
    %v2222 = vmul.f32 %v2128, %v2177
    %v2223 = vmul.f32 %v2128, %v2181
    %v2224 = vmul.f32 %v2132, %v2177
    %v2225 = vmul.f32 %v2132, %v2181
    %v2226 = vmul.f32 %v2136, %v2177
    %v2227 = vmul.f32 %v2136, %v2181
    %v2228 = vmul.f32 %v2140, %v2177
    %v2229 = vmul.f32 %v2140, %v2181
    %v2230 = vmul.f32 %v2144, %v2177
    %v2231 = vmul.f32 %v2144, %v2181
    %v2232 = vmul.f32 %v2148, %v2177
    %v2233 = vmul.f32 %v2148, %v2181
    %v2234 = vmul.f32 %v2152, %v2177
    %v2235 = vmul.f32 %v2152, %v2181
    %v2236 = vmul.f32 %v2156, %v2177
    %v2237 = vmul.f32 %v2156, %v2181
    %v2238 = vmul.f32 %v2160, %v2177
    %v2239 = vmul.f32 %v2160, %v2181
    %v2240 = vmul.f32 %v2164, %v2177
    %v2241 = vmul.f32 %v2164, %v2181
    %v2242 = vmul.f32 %v2168, %v2177
    %v2243 = vmul.f32 %v2168, %v2181
    %v2244 = vmul.f32 %v2172, %v2177
    %v2245 = vmul.f32 %v2172, %v2181
    %v2246 = vadd.f32 %v1982, %v2182
    %v2247 = vadd.f32 %v1983, %v2183
    %v2248 = vadd.f32 %v1984, %v2184
    %v2249 = vadd.f32 %v1985, %v2185
    %v2250 = vadd.f32 %v1986, %v2186
    %v2251 = vadd.f32 %v1987, %v2187
    %v2252 = vadd.f32 %v1988, %v2188
    %v2253 = vadd.f32 %v1989, %v2189
    %v2254 = vadd.f32 %v1990, %v2190
    %v2255 = vadd.f32 %v1991, %v2191
    %v2256 = vadd.f32 %v1992, %v2192
    %v2257 = vadd.f32 %v1993, %v2193
    %v2258 = vadd.f32 %v1994, %v2194
    %v2259 = vadd.f32 %v1995, %v2195
    %v2260 = vadd.f32 %v1996, %v2196
    %v2261 = vadd.f32 %v1997, %v2197
    %v2262 = vadd.f32 %v1998, %v2198
    %v2263 = vadd.f32 %v1999, %v2199
    %v2264 = vadd.f32 %v2000, %v2200
    %v2265 = vadd.f32 %v2001, %v2201
    %v2266 = vadd.f32 %v2002, %v2202
    %v2267 = vadd.f32 %v2003, %v2203
    %v2268 = vadd.f32 %v2004, %v2204
    %v2269 = vadd.f32 %v2005, %v2205
    %v2270 = vadd.f32 %v2006, %v2206
    %v2271 = vadd.f32 %v2007, %v2207
    %v2272 = vadd.f32 %v2008, %v2208
    %v2273 = vadd.f32 %v2009, %v2209
    %v2274 = vadd.f32 %v2010, %v2210
    %v2275 = vadd.f32 %v2011, %v2211
    %v2276 = vadd.f32 %v2012, %v2212
    %v2277 = vadd.f32 %v2013, %v2213
    %v2278 = vadd.f32 %v2014, %v2214
    %v2279 = vadd.f32 %v2015, %v2215
    %v2280 = vadd.f32 %v2016, %v2216
    %v2281 = vadd.f32 %v2017, %v2217
    %v2282 = vadd.f32 %v2018, %v2218
    %v2283 = vadd.f32 %v2019, %v2219
    %v2284 = vadd.f32 %v2020, %v2220
    %v2285 = vadd.f32 %v2021, %v2221
    %v2286 = vadd.f32 %v2022, %v2222
    %v2287 = vadd.f32 %v2023, %v2223
    %v2288 = vadd.f32 %v2024, %v2224
    %v2289 = vadd.f32 %v2025, %v2225
    %v2290 = vadd.f32 %v2026, %v2226
    %v2291 = vadd.f32 %v2027, %v2227
    %v2292 = vadd.f32 %v2028, %v2228
    %v2293 = vadd.f32 %v2029, %v2229
    %v2294 = vadd.f32 %v2030, %v2230
    %v2295 = vadd.f32 %v2031, %v2231
    %v2296 = vadd.f32 %v2032, %v2232
    %v2297 = vadd.f32 %v2033, %v2233
    %v2298 = vadd.f32 %v2034, %v2234
    %v2299 = vadd.f32 %v2035, %v2235
    %v2300 = vadd.f32 %v2036, %v2236
    %v2301 = vadd.f32 %v2037, %v2237
    %v2302 = vadd.f32 %v2038, %v2238
    %v2303 = vadd.f32 %v2039, %v2239
    %v2304 = vadd.f32 %v2040, %v2240
    %v2305 = vadd.f32 %v2041, %v2241
    %v2306 = vadd.f32 %v2042, %v2242
    %v2307 = vadd.f32 %v2043, %v2243
    %v2308 = vadd.f32 %v2044, %v2244
    %v2309 = vadd.f32 %v2045, %v2245
    %2310 = vset.pattern.permute.xlu0 8
    %2311 = vperm.xlu0 %2310, %v130
    %v2312 = vpop.permute.xlu0 %2311
    %2314 = vset.pattern.permute.xlu0 8
    %2315 = vperm.xlu0 %2314, %v131
    %v2316 = vpop.permute.xlu0 %2315
    %2318 = vset.pattern.permute.xlu0 8
    %2319 = vperm.xlu0 %2318, %v132
    %v2320 = vpop.permute.xlu0 %2319
    %2322 = vset.pattern.permute.xlu0 8
    %2323 = vperm.xlu0 %2322, %v133
    %v2324 = vpop.permute.xlu0 %2323
    %2326 = vset.pattern.permute.xlu0 8
    %2327 = vperm.xlu0 %2326, %v134
    %v2328 = vpop.permute.xlu0 %2327
    %2330 = vset.pattern.permute.xlu0 8
    %2331 = vperm.xlu0 %2330, %v135
    %v2332 = vpop.permute.xlu0 %2331
    %2334 = vset.pattern.permute.xlu0 8
    %2335 = vperm.xlu0 %2334, %v136
    %v2336 = vpop.permute.xlu0 %2335
    %2338 = vset.pattern.permute.xlu0 8
    %2339 = vperm.xlu0 %2338, %v137
    %v2340 = vpop.permute.xlu0 %2339
    %2342 = vset.pattern.permute.xlu0 8
    %2343 = vperm.xlu0 %2342, %v138
    %v2344 = vpop.permute.xlu0 %2343
    %2346 = vset.pattern.permute.xlu0 8
    %2347 = vperm.xlu0 %2346, %v139
    %v2348 = vpop.permute.xlu0 %2347
    %2350 = vset.pattern.permute.xlu0 8
    %2351 = vperm.xlu0 %2350, %v140
    %v2352 = vpop.permute.xlu0 %2351
    %2354 = vset.pattern.permute.xlu0 8
    %2355 = vperm.xlu0 %2354, %v141
    %v2356 = vpop.permute.xlu0 %2355
    %2358 = vset.pattern.permute.xlu0 8
    %2359 = vperm.xlu0 %2358, %v142
    %v2360 = vpop.permute.xlu0 %2359
    %2362 = vset.pattern.permute.xlu0 8
    %2363 = vperm.xlu0 %2362, %v143
    %v2364 = vpop.permute.xlu0 %2363
    %2366 = vset.pattern.permute.xlu0 8
    %2367 = vperm.xlu0 %2366, %v144
    %v2368 = vpop.permute.xlu0 %2367
    %2370 = vset.pattern.permute.xlu0 8
    %2371 = vperm.xlu0 %2370, %v145
    %v2372 = vpop.permute.xlu0 %2371
    %2374 = vset.pattern.permute.xlu0 8
    %2375 = vperm.xlu0 %2374, %v146
    %v2376 = vpop.permute.xlu0 %2375
    %2378 = vset.pattern.permute.xlu0 8
    %2379 = vperm.xlu0 %2378, %v147
    %v2380 = vpop.permute.xlu0 %2379
    %2382 = vset.pattern.permute.xlu0 8
    %2383 = vperm.xlu0 %2382, %v148
    %v2384 = vpop.permute.xlu0 %2383
    %2386 = vset.pattern.permute.xlu0 8
    %2387 = vperm.xlu0 %2386, %v149
    %v2388 = vpop.permute.xlu0 %2387
    %2390 = vset.pattern.permute.xlu0 8
    %2391 = vperm.xlu0 %2390, %v150
    %v2392 = vpop.permute.xlu0 %2391
    %2394 = vset.pattern.permute.xlu0 8
    %2395 = vperm.xlu0 %2394, %v151
    %v2396 = vpop.permute.xlu0 %2395
    %2398 = vset.pattern.permute.xlu0 8
    %2399 = vperm.xlu0 %2398, %v152
    %v2400 = vpop.permute.xlu0 %2399
    %2402 = vset.pattern.permute.xlu0 8
    %2403 = vperm.xlu0 %2402, %v153
    %v2404 = vpop.permute.xlu0 %2403
    %2406 = vset.pattern.permute.xlu0 8
    %2407 = vperm.xlu0 %2406, %v154
    %v2408 = vpop.permute.xlu0 %2407
    %2410 = vset.pattern.permute.xlu0 8
    %2411 = vperm.xlu0 %2410, %v155
    %v2412 = vpop.permute.xlu0 %2411
    %2414 = vset.pattern.permute.xlu0 8
    %2415 = vperm.xlu0 %2414, %v156
    %v2416 = vpop.permute.xlu0 %2415
    %2418 = vset.pattern.permute.xlu0 8
    %2419 = vperm.xlu0 %2418, %v157
    %v2420 = vpop.permute.xlu0 %2419
    %2422 = vset.pattern.permute.xlu0 8
    %2423 = vperm.xlu0 %2422, %v158
    %v2424 = vpop.permute.xlu0 %2423
    %2426 = vset.pattern.permute.xlu0 8
    %2427 = vperm.xlu0 %2426, %v159
    %v2428 = vpop.permute.xlu0 %2427
    %2430 = vset.pattern.permute.xlu0 8
    %2431 = vperm.xlu0 %2430, %v160
    %v2432 = vpop.permute.xlu0 %2431
    %2434 = vset.pattern.permute.xlu0 8
    %2435 = vperm.xlu0 %2434, %v161
    %v2436 = vpop.permute.xlu0 %2435
    %v2438 = vlaneseq
    %v2439 = vshrl.u32 %v2438, 7
    %v2440 = vsub.s32 0, %v2439
    %v2441 = vrot.slane %v164, %v2440
    %v2442 = vlaneseq
    %v2443 = vshrl.u32 %v2442, 7
    %v2444 = vsub.s32 0, %v2443
    %v2445 = vrot.slane %v165, %v2444
    %v2446 = vmul.f32 %v2312, %v2441
    %v2447 = vmul.f32 %v2312, %v2445
    %v2448 = vmul.f32 %v2316, %v2441
    %v2449 = vmul.f32 %v2316, %v2445
    %v2450 = vmul.f32 %v2320, %v2441
    %v2451 = vmul.f32 %v2320, %v2445
    %v2452 = vmul.f32 %v2324, %v2441
    %v2453 = vmul.f32 %v2324, %v2445
    %v2454 = vmul.f32 %v2328, %v2441
    %v2455 = vmul.f32 %v2328, %v2445
    %v2456 = vmul.f32 %v2332, %v2441
    %v2457 = vmul.f32 %v2332, %v2445
    %v2458 = vmul.f32 %v2336, %v2441
    %v2459 = vmul.f32 %v2336, %v2445
    %v2460 = vmul.f32 %v2340, %v2441
    %v2461 = vmul.f32 %v2340, %v2445
    %v2462 = vmul.f32 %v2344, %v2441
    %v2463 = vmul.f32 %v2344, %v2445
    %v2464 = vmul.f32 %v2348, %v2441
    %v2465 = vmul.f32 %v2348, %v2445
    %v2466 = vmul.f32 %v2352, %v2441
    %v2467 = vmul.f32 %v2352, %v2445
    %v2468 = vmul.f32 %v2356, %v2441
    %v2469 = vmul.f32 %v2356, %v2445
    %v2470 = vmul.f32 %v2360, %v2441
    %v2471 = vmul.f32 %v2360, %v2445
    %v2472 = vmul.f32 %v2364, %v2441
    %v2473 = vmul.f32 %v2364, %v2445
    %v2474 = vmul.f32 %v2368, %v2441
    %v2475 = vmul.f32 %v2368, %v2445
    %v2476 = vmul.f32 %v2372, %v2441
    %v2477 = vmul.f32 %v2372, %v2445
    %v2478 = vmul.f32 %v2376, %v2441
    %v2479 = vmul.f32 %v2376, %v2445
    %v2480 = vmul.f32 %v2380, %v2441
    %v2481 = vmul.f32 %v2380, %v2445
    %v2482 = vmul.f32 %v2384, %v2441
    %v2483 = vmul.f32 %v2384, %v2445
    %v2484 = vmul.f32 %v2388, %v2441
    %v2485 = vmul.f32 %v2388, %v2445
    %v2486 = vmul.f32 %v2392, %v2441
    %v2487 = vmul.f32 %v2392, %v2445
    %v2488 = vmul.f32 %v2396, %v2441
    %v2489 = vmul.f32 %v2396, %v2445
    %v2490 = vmul.f32 %v2400, %v2441
    %v2491 = vmul.f32 %v2400, %v2445
    %v2492 = vmul.f32 %v2404, %v2441
    %v2493 = vmul.f32 %v2404, %v2445
    %v2494 = vmul.f32 %v2408, %v2441
    %v2495 = vmul.f32 %v2408, %v2445
    %v2496 = vmul.f32 %v2412, %v2441
    %v2497 = vmul.f32 %v2412, %v2445
    %v2498 = vmul.f32 %v2416, %v2441
    %v2499 = vmul.f32 %v2416, %v2445
    %v2500 = vmul.f32 %v2420, %v2441
    %v2501 = vmul.f32 %v2420, %v2445
    %v2502 = vmul.f32 %v2424, %v2441
    %v2503 = vmul.f32 %v2424, %v2445
    %v2504 = vmul.f32 %v2428, %v2441
    %v2505 = vmul.f32 %v2428, %v2445
    %v2506 = vmul.f32 %v2432, %v2441
    %v2507 = vmul.f32 %v2432, %v2445
    %v2508 = vmul.f32 %v2436, %v2441
    %v2509 = vmul.f32 %v2436, %v2445
    %v2510 = vadd.f32 %v2246, %v2446
    %v2511 = vadd.f32 %v2247, %v2447
    %v2512 = vadd.f32 %v2248, %v2448
    %v2513 = vadd.f32 %v2249, %v2449
    %v2514 = vadd.f32 %v2250, %v2450
    %v2515 = vadd.f32 %v2251, %v2451
    %v2516 = vadd.f32 %v2252, %v2452
    %v2517 = vadd.f32 %v2253, %v2453
    %v2518 = vadd.f32 %v2254, %v2454
    %v2519 = vadd.f32 %v2255, %v2455
    %v2520 = vadd.f32 %v2256, %v2456
    %v2521 = vadd.f32 %v2257, %v2457
    %v2522 = vadd.f32 %v2258, %v2458
    %v2523 = vadd.f32 %v2259, %v2459
    %v2524 = vadd.f32 %v2260, %v2460
    %v2525 = vadd.f32 %v2261, %v2461
    %v2526 = vadd.f32 %v2262, %v2462
    %v2527 = vadd.f32 %v2263, %v2463
    %v2528 = vadd.f32 %v2264, %v2464
    %v2529 = vadd.f32 %v2265, %v2465
    %v2530 = vadd.f32 %v2266, %v2466
    %v2531 = vadd.f32 %v2267, %v2467
    %v2532 = vadd.f32 %v2268, %v2468
    %v2533 = vadd.f32 %v2269, %v2469
    %v2534 = vadd.f32 %v2270, %v2470
    %v2535 = vadd.f32 %v2271, %v2471
    %v2536 = vadd.f32 %v2272, %v2472
    %v2537 = vadd.f32 %v2273, %v2473
    %v2538 = vadd.f32 %v2274, %v2474
    %v2539 = vadd.f32 %v2275, %v2475
    %v2540 = vadd.f32 %v2276, %v2476
    %v2541 = vadd.f32 %v2277, %v2477
    %v2542 = vadd.f32 %v2278, %v2478
    %v2543 = vadd.f32 %v2279, %v2479
    %v2544 = vadd.f32 %v2280, %v2480
    %v2545 = vadd.f32 %v2281, %v2481
    %v2546 = vadd.f32 %v2282, %v2482
    %v2547 = vadd.f32 %v2283, %v2483
    %v2548 = vadd.f32 %v2284, %v2484
    %v2549 = vadd.f32 %v2285, %v2485
    %v2550 = vadd.f32 %v2286, %v2486
    %v2551 = vadd.f32 %v2287, %v2487
    %v2552 = vadd.f32 %v2288, %v2488
    %v2553 = vadd.f32 %v2289, %v2489
    %v2554 = vadd.f32 %v2290, %v2490
    %v2555 = vadd.f32 %v2291, %v2491
    %v2556 = vadd.f32 %v2292, %v2492
    %v2557 = vadd.f32 %v2293, %v2493
    %v2558 = vadd.f32 %v2294, %v2494
    %v2559 = vadd.f32 %v2295, %v2495
    %v2560 = vadd.f32 %v2296, %v2496
    %v2561 = vadd.f32 %v2297, %v2497
    %v2562 = vadd.f32 %v2298, %v2498
    %v2563 = vadd.f32 %v2299, %v2499
    %v2564 = vadd.f32 %v2300, %v2500
    %v2565 = vadd.f32 %v2301, %v2501
    %v2566 = vadd.f32 %v2302, %v2502
    %v2567 = vadd.f32 %v2303, %v2503
    %v2568 = vadd.f32 %v2304, %v2504
    %v2569 = vadd.f32 %v2305, %v2505
    %v2570 = vadd.f32 %v2306, %v2506
    %v2571 = vadd.f32 %v2307, %v2507
    %v2572 = vadd.f32 %v2308, %v2508
    %v2573 = vadd.f32 %v2309, %v2509
    %2574 = vset.pattern.permute.xlu0 9
    %2575 = vperm.xlu0 %2574, %v130
    %v2576 = vpop.permute.xlu0 %2575
    %2578 = vset.pattern.permute.xlu0 9
    %2579 = vperm.xlu0 %2578, %v131
    %v2580 = vpop.permute.xlu0 %2579
    %2582 = vset.pattern.permute.xlu0 9
    %2583 = vperm.xlu0 %2582, %v132
    %v2584 = vpop.permute.xlu0 %2583
    %2586 = vset.pattern.permute.xlu0 9
    %2587 = vperm.xlu0 %2586, %v133
    %v2588 = vpop.permute.xlu0 %2587
    %2590 = vset.pattern.permute.xlu0 9
    %2591 = vperm.xlu0 %2590, %v134
    %v2592 = vpop.permute.xlu0 %2591
    %2594 = vset.pattern.permute.xlu0 9
    %2595 = vperm.xlu0 %2594, %v135
    %v2596 = vpop.permute.xlu0 %2595
    %2598 = vset.pattern.permute.xlu0 9
    %2599 = vperm.xlu0 %2598, %v136
    %v2600 = vpop.permute.xlu0 %2599
    %2602 = vset.pattern.permute.xlu0 9
    %2603 = vperm.xlu0 %2602, %v137
    %v2604 = vpop.permute.xlu0 %2603
    %2606 = vset.pattern.permute.xlu0 9
    %2607 = vperm.xlu0 %2606, %v138
    %v2608 = vpop.permute.xlu0 %2607
    %2610 = vset.pattern.permute.xlu0 9
    %2611 = vperm.xlu0 %2610, %v139
    %v2612 = vpop.permute.xlu0 %2611
    %2614 = vset.pattern.permute.xlu0 9
    %2615 = vperm.xlu0 %2614, %v140
    %v2616 = vpop.permute.xlu0 %2615
    %2618 = vset.pattern.permute.xlu0 9
    %2619 = vperm.xlu0 %2618, %v141
    %v2620 = vpop.permute.xlu0 %2619
    %2622 = vset.pattern.permute.xlu0 9
    %2623 = vperm.xlu0 %2622, %v142
    %v2624 = vpop.permute.xlu0 %2623
    %2626 = vset.pattern.permute.xlu0 9
    %2627 = vperm.xlu0 %2626, %v143
    %v2628 = vpop.permute.xlu0 %2627
    %2630 = vset.pattern.permute.xlu0 9
    %2631 = vperm.xlu0 %2630, %v144
    %v2632 = vpop.permute.xlu0 %2631
    %2634 = vset.pattern.permute.xlu0 9
    %2635 = vperm.xlu0 %2634, %v145
    %v2636 = vpop.permute.xlu0 %2635
    %2638 = vset.pattern.permute.xlu0 9
    %2639 = vperm.xlu0 %2638, %v146
    %v2640 = vpop.permute.xlu0 %2639
    %2642 = vset.pattern.permute.xlu0 9
    %2643 = vperm.xlu0 %2642, %v147
    %v2644 = vpop.permute.xlu0 %2643
    %2646 = vset.pattern.permute.xlu0 9
    %2647 = vperm.xlu0 %2646, %v148
    %v2648 = vpop.permute.xlu0 %2647
    %2650 = vset.pattern.permute.xlu0 9
    %2651 = vperm.xlu0 %2650, %v149
    %v2652 = vpop.permute.xlu0 %2651
    %2654 = vset.pattern.permute.xlu0 9
    %2655 = vperm.xlu0 %2654, %v150
    %v2656 = vpop.permute.xlu0 %2655
    %2658 = vset.pattern.permute.xlu0 9
    %2659 = vperm.xlu0 %2658, %v151
    %v2660 = vpop.permute.xlu0 %2659
    %2662 = vset.pattern.permute.xlu0 9
    %2663 = vperm.xlu0 %2662, %v152
    %v2664 = vpop.permute.xlu0 %2663
    %2666 = vset.pattern.permute.xlu0 9
    %2667 = vperm.xlu0 %2666, %v153
    %v2668 = vpop.permute.xlu0 %2667
    %2670 = vset.pattern.permute.xlu0 9
    %2671 = vperm.xlu0 %2670, %v154
    %v2672 = vpop.permute.xlu0 %2671
    %2674 = vset.pattern.permute.xlu0 9
    %2675 = vperm.xlu0 %2674, %v155
    %v2676 = vpop.permute.xlu0 %2675
    %2678 = vset.pattern.permute.xlu0 9
    %2679 = vperm.xlu0 %2678, %v156
    %v2680 = vpop.permute.xlu0 %2679
    %2682 = vset.pattern.permute.xlu0 9
    %2683 = vperm.xlu0 %2682, %v157
    %v2684 = vpop.permute.xlu0 %2683
    %2686 = vset.pattern.permute.xlu0 9
    %2687 = vperm.xlu0 %2686, %v158
    %v2688 = vpop.permute.xlu0 %2687
    %2690 = vset.pattern.permute.xlu0 9
    %2691 = vperm.xlu0 %2690, %v159
    %v2692 = vpop.permute.xlu0 %2691
    %2694 = vset.pattern.permute.xlu0 9
    %2695 = vperm.xlu0 %2694, %v160
    %v2696 = vpop.permute.xlu0 %2695
    %2698 = vset.pattern.permute.xlu0 9
    %2699 = vperm.xlu0 %2698, %v161
    %v2700 = vpop.permute.xlu0 %2699
    %v2702 = vlaneseq
    %v2703 = vshrl.u32 %v2702, 7
    %v2704 = vsub.s32 1, %v2703
    %v2705 = vrot.slane %v164, %v2704
    %v2706 = vlaneseq
    %v2707 = vshrl.u32 %v2706, 7
    %v2708 = vsub.s32 1, %v2707
    %v2709 = vrot.slane %v165, %v2708
    %v2710 = vmul.f32 %v2576, %v2705
    %v2711 = vmul.f32 %v2576, %v2709
    %v2712 = vmul.f32 %v2580, %v2705
    %v2713 = vmul.f32 %v2580, %v2709
    %v2714 = vmul.f32 %v2584, %v2705
    %v2715 = vmul.f32 %v2584, %v2709
    %v2716 = vmul.f32 %v2588, %v2705
    %v2717 = vmul.f32 %v2588, %v2709
    %v2718 = vmul.f32 %v2592, %v2705
    %v2719 = vmul.f32 %v2592, %v2709
    %v2720 = vmul.f32 %v2596, %v2705
    %v2721 = vmul.f32 %v2596, %v2709
    %v2722 = vmul.f32 %v2600, %v2705
    %v2723 = vmul.f32 %v2600, %v2709
    %v2724 = vmul.f32 %v2604, %v2705
    %v2725 = vmul.f32 %v2604, %v2709
    %v2726 = vmul.f32 %v2608, %v2705
    %v2727 = vmul.f32 %v2608, %v2709
    %v2728 = vmul.f32 %v2612, %v2705
    %v2729 = vmul.f32 %v2612, %v2709
    %v2730 = vmul.f32 %v2616, %v2705
    %v2731 = vmul.f32 %v2616, %v2709
    %v2732 = vmul.f32 %v2620, %v2705
    %v2733 = vmul.f32 %v2620, %v2709
    %v2734 = vmul.f32 %v2624, %v2705
    %v2735 = vmul.f32 %v2624, %v2709
    %v2736 = vmul.f32 %v2628, %v2705
    %v2737 = vmul.f32 %v2628, %v2709
    %v2738 = vmul.f32 %v2632, %v2705
    %v2739 = vmul.f32 %v2632, %v2709
    %v2740 = vmul.f32 %v2636, %v2705
    %v2741 = vmul.f32 %v2636, %v2709
    %v2742 = vmul.f32 %v2640, %v2705
    %v2743 = vmul.f32 %v2640, %v2709
    %v2744 = vmul.f32 %v2644, %v2705
    %v2745 = vmul.f32 %v2644, %v2709
    %v2746 = vmul.f32 %v2648, %v2705
    %v2747 = vmul.f32 %v2648, %v2709
    %v2748 = vmul.f32 %v2652, %v2705
    %v2749 = vmul.f32 %v2652, %v2709
    %v2750 = vmul.f32 %v2656, %v2705
    %v2751 = vmul.f32 %v2656, %v2709
    %v2752 = vmul.f32 %v2660, %v2705
    %v2753 = vmul.f32 %v2660, %v2709
    %v2754 = vmul.f32 %v2664, %v2705
    %v2755 = vmul.f32 %v2664, %v2709
    %v2756 = vmul.f32 %v2668, %v2705
    %v2757 = vmul.f32 %v2668, %v2709
    %v2758 = vmul.f32 %v2672, %v2705
    %v2759 = vmul.f32 %v2672, %v2709
    %v2760 = vmul.f32 %v2676, %v2705
    %v2761 = vmul.f32 %v2676, %v2709
    %v2762 = vmul.f32 %v2680, %v2705
    %v2763 = vmul.f32 %v2680, %v2709
    %v2764 = vmul.f32 %v2684, %v2705
    %v2765 = vmul.f32 %v2684, %v2709
    %v2766 = vmul.f32 %v2688, %v2705
    %v2767 = vmul.f32 %v2688, %v2709
    %v2768 = vmul.f32 %v2692, %v2705
    %v2769 = vmul.f32 %v2692, %v2709
    %v2770 = vmul.f32 %v2696, %v2705
    %v2771 = vmul.f32 %v2696, %v2709
    %v2772 = vmul.f32 %v2700, %v2705
    %v2773 = vmul.f32 %v2700, %v2709
    %v2774 = vadd.f32 %v2510, %v2710
    %v2775 = vadd.f32 %v2511, %v2711
    %v2776 = vadd.f32 %v2512, %v2712
    %v2777 = vadd.f32 %v2513, %v2713
    %v2778 = vadd.f32 %v2514, %v2714
    %v2779 = vadd.f32 %v2515, %v2715
    %v2780 = vadd.f32 %v2516, %v2716
    %v2781 = vadd.f32 %v2517, %v2717
    %v2782 = vadd.f32 %v2518, %v2718
    %v2783 = vadd.f32 %v2519, %v2719
    %v2784 = vadd.f32 %v2520, %v2720
    %v2785 = vadd.f32 %v2521, %v2721
    %v2786 = vadd.f32 %v2522, %v2722
    %v2787 = vadd.f32 %v2523, %v2723
    %v2788 = vadd.f32 %v2524, %v2724
    %v2789 = vadd.f32 %v2525, %v2725
    %v2790 = vadd.f32 %v2526, %v2726
    %v2791 = vadd.f32 %v2527, %v2727
    %v2792 = vadd.f32 %v2528, %v2728
    %v2793 = vadd.f32 %v2529, %v2729
    %v2794 = vadd.f32 %v2530, %v2730
    %v2795 = vadd.f32 %v2531, %v2731
    %v2796 = vadd.f32 %v2532, %v2732
    %v2797 = vadd.f32 %v2533, %v2733
    %v2798 = vadd.f32 %v2534, %v2734
    %v2799 = vadd.f32 %v2535, %v2735
    %v2800 = vadd.f32 %v2536, %v2736
    %v2801 = vadd.f32 %v2537, %v2737
    %v2802 = vadd.f32 %v2538, %v2738
    %v2803 = vadd.f32 %v2539, %v2739
    %v2804 = vadd.f32 %v2540, %v2740
    %v2805 = vadd.f32 %v2541, %v2741
    %v2806 = vadd.f32 %v2542, %v2742
    %v2807 = vadd.f32 %v2543, %v2743
    %v2808 = vadd.f32 %v2544, %v2744
    %v2809 = vadd.f32 %v2545, %v2745
    %v2810 = vadd.f32 %v2546, %v2746
    %v2811 = vadd.f32 %v2547, %v2747
    %v2812 = vadd.f32 %v2548, %v2748
    %v2813 = vadd.f32 %v2549, %v2749
    %v2814 = vadd.f32 %v2550, %v2750
    %v2815 = vadd.f32 %v2551, %v2751
    %v2816 = vadd.f32 %v2552, %v2752
    %v2817 = vadd.f32 %v2553, %v2753
    %v2818 = vadd.f32 %v2554, %v2754
    %v2819 = vadd.f32 %v2555, %v2755
    %v2820 = vadd.f32 %v2556, %v2756
    %v2821 = vadd.f32 %v2557, %v2757
    %v2822 = vadd.f32 %v2558, %v2758
    %v2823 = vadd.f32 %v2559, %v2759
    %v2824 = vadd.f32 %v2560, %v2760
    %v2825 = vadd.f32 %v2561, %v2761
    %v2826 = vadd.f32 %v2562, %v2762
    %v2827 = vadd.f32 %v2563, %v2763
    %v2828 = vadd.f32 %v2564, %v2764
    %v2829 = vadd.f32 %v2565, %v2765
    %v2830 = vadd.f32 %v2566, %v2766
    %v2831 = vadd.f32 %v2567, %v2767
    %v2832 = vadd.f32 %v2568, %v2768
    %v2833 = vadd.f32 %v2569, %v2769
    %v2834 = vadd.f32 %v2570, %v2770
    %v2835 = vadd.f32 %v2571, %v2771
    %v2836 = vadd.f32 %v2572, %v2772
    %v2837 = vadd.f32 %v2573, %v2773
    %2838 = vset.pattern.permute.xlu0 10
    %2839 = vperm.xlu0 %2838, %v130
    %v2840 = vpop.permute.xlu0 %2839
    %2842 = vset.pattern.permute.xlu0 10
    %2843 = vperm.xlu0 %2842, %v131
    %v2844 = vpop.permute.xlu0 %2843
    %2846 = vset.pattern.permute.xlu0 10
    %2847 = vperm.xlu0 %2846, %v132
    %v2848 = vpop.permute.xlu0 %2847
    %2850 = vset.pattern.permute.xlu0 10
    %2851 = vperm.xlu0 %2850, %v133
    %v2852 = vpop.permute.xlu0 %2851
    %2854 = vset.pattern.permute.xlu0 10
    %2855 = vperm.xlu0 %2854, %v134
    %v2856 = vpop.permute.xlu0 %2855
    %2858 = vset.pattern.permute.xlu0 10
    %2859 = vperm.xlu0 %2858, %v135
    %v2860 = vpop.permute.xlu0 %2859
    %2862 = vset.pattern.permute.xlu0 10
    %2863 = vperm.xlu0 %2862, %v136
    %v2864 = vpop.permute.xlu0 %2863
    %2866 = vset.pattern.permute.xlu0 10
    %2867 = vperm.xlu0 %2866, %v137
    %v2868 = vpop.permute.xlu0 %2867
    %2870 = vset.pattern.permute.xlu0 10
    %2871 = vperm.xlu0 %2870, %v138
    %v2872 = vpop.permute.xlu0 %2871
    %2874 = vset.pattern.permute.xlu0 10
    %2875 = vperm.xlu0 %2874, %v139
    %v2876 = vpop.permute.xlu0 %2875
    %2878 = vset.pattern.permute.xlu0 10
    %2879 = vperm.xlu0 %2878, %v140
    %v2880 = vpop.permute.xlu0 %2879
    %2882 = vset.pattern.permute.xlu0 10
    %2883 = vperm.xlu0 %2882, %v141
    %v2884 = vpop.permute.xlu0 %2883
    %2886 = vset.pattern.permute.xlu0 10
    %2887 = vperm.xlu0 %2886, %v142
    %v2888 = vpop.permute.xlu0 %2887
    %2890 = vset.pattern.permute.xlu0 10
    %2891 = vperm.xlu0 %2890, %v143
    %v2892 = vpop.permute.xlu0 %2891
    %2894 = vset.pattern.permute.xlu0 10
    %2895 = vperm.xlu0 %2894, %v144
    %v2896 = vpop.permute.xlu0 %2895
    %2898 = vset.pattern.permute.xlu0 10
    %2899 = vperm.xlu0 %2898, %v145
    %v2900 = vpop.permute.xlu0 %2899
    %2902 = vset.pattern.permute.xlu0 10
    %2903 = vperm.xlu0 %2902, %v146
    %v2904 = vpop.permute.xlu0 %2903
    %2906 = vset.pattern.permute.xlu0 10
    %2907 = vperm.xlu0 %2906, %v147
    %v2908 = vpop.permute.xlu0 %2907
    %2910 = vset.pattern.permute.xlu0 10
    %2911 = vperm.xlu0 %2910, %v148
    %v2912 = vpop.permute.xlu0 %2911
    %2914 = vset.pattern.permute.xlu0 10
    %2915 = vperm.xlu0 %2914, %v149
    %v2916 = vpop.permute.xlu0 %2915
    %2918 = vset.pattern.permute.xlu0 10
    %2919 = vperm.xlu0 %2918, %v150
    %v2920 = vpop.permute.xlu0 %2919
    %2922 = vset.pattern.permute.xlu0 10
    %2923 = vperm.xlu0 %2922, %v151
    %v2924 = vpop.permute.xlu0 %2923
    %2926 = vset.pattern.permute.xlu0 10
    %2927 = vperm.xlu0 %2926, %v152
    %v2928 = vpop.permute.xlu0 %2927
    %2930 = vset.pattern.permute.xlu0 10
    %2931 = vperm.xlu0 %2930, %v153
    %v2932 = vpop.permute.xlu0 %2931
    %2934 = vset.pattern.permute.xlu0 10
    %2935 = vperm.xlu0 %2934, %v154
    %v2936 = vpop.permute.xlu0 %2935
    %2938 = vset.pattern.permute.xlu0 10
    %2939 = vperm.xlu0 %2938, %v155
    %v2940 = vpop.permute.xlu0 %2939
    %2942 = vset.pattern.permute.xlu0 10
    %2943 = vperm.xlu0 %2942, %v156
    %v2944 = vpop.permute.xlu0 %2943
    %2946 = vset.pattern.permute.xlu0 10
    %2947 = vperm.xlu0 %2946, %v157
    %v2948 = vpop.permute.xlu0 %2947
    %2950 = vset.pattern.permute.xlu0 10
    %2951 = vperm.xlu0 %2950, %v158
    %v2952 = vpop.permute.xlu0 %2951
    %2954 = vset.pattern.permute.xlu0 10
    %2955 = vperm.xlu0 %2954, %v159
    %v2956 = vpop.permute.xlu0 %2955
    %2958 = vset.pattern.permute.xlu0 10
    %2959 = vperm.xlu0 %2958, %v160
    %v2960 = vpop.permute.xlu0 %2959
    %2962 = vset.pattern.permute.xlu0 10
    %2963 = vperm.xlu0 %2962, %v161
    %v2964 = vpop.permute.xlu0 %2963
    %v2966 = vlaneseq
    %v2967 = vshrl.u32 %v2966, 7
    %v2968 = vsub.s32 2, %v2967
    %v2969 = vrot.slane %v164, %v2968
    %v2970 = vlaneseq
    %v2971 = vshrl.u32 %v2970, 7
    %v2972 = vsub.s32 2, %v2971
    %v2973 = vrot.slane %v165, %v2972
    %v2974 = vmul.f32 %v2840, %v2969
    %v2975 = vmul.f32 %v2840, %v2973
    %v2976 = vmul.f32 %v2844, %v2969
    %v2977 = vmul.f32 %v2844, %v2973
    %v2978 = vmul.f32 %v2848, %v2969
    %v2979 = vmul.f32 %v2848, %v2973
    %v2980 = vmul.f32 %v2852, %v2969
    %v2981 = vmul.f32 %v2852, %v2973
    %v2982 = vmul.f32 %v2856, %v2969
    %v2983 = vmul.f32 %v2856, %v2973
    %v2984 = vmul.f32 %v2860, %v2969
    %v2985 = vmul.f32 %v2860, %v2973
    %v2986 = vmul.f32 %v2864, %v2969
    %v2987 = vmul.f32 %v2864, %v2973
    %v2988 = vmul.f32 %v2868, %v2969
    %v2989 = vmul.f32 %v2868, %v2973
    %v2990 = vmul.f32 %v2872, %v2969
    %v2991 = vmul.f32 %v2872, %v2973
    %v2992 = vmul.f32 %v2876, %v2969
    %v2993 = vmul.f32 %v2876, %v2973
    %v2994 = vmul.f32 %v2880, %v2969
    %v2995 = vmul.f32 %v2880, %v2973
    %v2996 = vmul.f32 %v2884, %v2969
    %v2997 = vmul.f32 %v2884, %v2973
    %v2998 = vmul.f32 %v2888, %v2969
    %v2999 = vmul.f32 %v2888, %v2973
    %v3000 = vmul.f32 %v2892, %v2969
    %v3001 = vmul.f32 %v2892, %v2973
    %v3002 = vmul.f32 %v2896, %v2969
    %v3003 = vmul.f32 %v2896, %v2973
    %v3004 = vmul.f32 %v2900, %v2969
    %v3005 = vmul.f32 %v2900, %v2973
    %v3006 = vmul.f32 %v2904, %v2969
    %v3007 = vmul.f32 %v2904, %v2973
    %v3008 = vmul.f32 %v2908, %v2969
    %v3009 = vmul.f32 %v2908, %v2973
    %v3010 = vmul.f32 %v2912, %v2969
    %v3011 = vmul.f32 %v2912, %v2973
    %v3012 = vmul.f32 %v2916, %v2969
    %v3013 = vmul.f32 %v2916, %v2973
    %v3014 = vmul.f32 %v2920, %v2969
    %v3015 = vmul.f32 %v2920, %v2973
    %v3016 = vmul.f32 %v2924, %v2969
    %v3017 = vmul.f32 %v2924, %v2973
    %v3018 = vmul.f32 %v2928, %v2969
    %v3019 = vmul.f32 %v2928, %v2973
    %v3020 = vmul.f32 %v2932, %v2969
    %v3021 = vmul.f32 %v2932, %v2973
    %v3022 = vmul.f32 %v2936, %v2969
    %v3023 = vmul.f32 %v2936, %v2973
    %v3024 = vmul.f32 %v2940, %v2969
    %v3025 = vmul.f32 %v2940, %v2973
    %v3026 = vmul.f32 %v2944, %v2969
    %v3027 = vmul.f32 %v2944, %v2973
    %v3028 = vmul.f32 %v2948, %v2969
    %v3029 = vmul.f32 %v2948, %v2973
    %v3030 = vmul.f32 %v2952, %v2969
    %v3031 = vmul.f32 %v2952, %v2973
    %v3032 = vmul.f32 %v2956, %v2969
    %v3033 = vmul.f32 %v2956, %v2973
    %v3034 = vmul.f32 %v2960, %v2969
    %v3035 = vmul.f32 %v2960, %v2973
    %v3036 = vmul.f32 %v2964, %v2969
    %v3037 = vmul.f32 %v2964, %v2973
    %v3038 = vadd.f32 %v2774, %v2974
    %v3039 = vadd.f32 %v2775, %v2975
    %v3040 = vadd.f32 %v2776, %v2976
    %v3041 = vadd.f32 %v2777, %v2977
    %v3042 = vadd.f32 %v2778, %v2978
    %v3043 = vadd.f32 %v2779, %v2979
    %v3044 = vadd.f32 %v2780, %v2980
    %v3045 = vadd.f32 %v2781, %v2981
    %v3046 = vadd.f32 %v2782, %v2982
    %v3047 = vadd.f32 %v2783, %v2983
    %v3048 = vadd.f32 %v2784, %v2984
    %v3049 = vadd.f32 %v2785, %v2985
    %v3050 = vadd.f32 %v2786, %v2986
    %v3051 = vadd.f32 %v2787, %v2987
    %v3052 = vadd.f32 %v2788, %v2988
    %v3053 = vadd.f32 %v2789, %v2989
    %v3054 = vadd.f32 %v2790, %v2990
    %v3055 = vadd.f32 %v2791, %v2991
    %v3056 = vadd.f32 %v2792, %v2992
    %v3057 = vadd.f32 %v2793, %v2993
    %v3058 = vadd.f32 %v2794, %v2994
    %v3059 = vadd.f32 %v2795, %v2995
    %v3060 = vadd.f32 %v2796, %v2996
    %v3061 = vadd.f32 %v2797, %v2997
    %v3062 = vadd.f32 %v2798, %v2998
    %v3063 = vadd.f32 %v2799, %v2999
    %v3064 = vadd.f32 %v2800, %v3000
    %v3065 = vadd.f32 %v2801, %v3001
    %v3066 = vadd.f32 %v2802, %v3002
    %v3067 = vadd.f32 %v2803, %v3003
    %v3068 = vadd.f32 %v2804, %v3004
    %v3069 = vadd.f32 %v2805, %v3005
    %v3070 = vadd.f32 %v2806, %v3006
    %v3071 = vadd.f32 %v2807, %v3007
    %v3072 = vadd.f32 %v2808, %v3008
    %v3073 = vadd.f32 %v2809, %v3009
    %v3074 = vadd.f32 %v2810, %v3010
    %v3075 = vadd.f32 %v2811, %v3011
    %v3076 = vadd.f32 %v2812, %v3012
    %v3077 = vadd.f32 %v2813, %v3013
    %v3078 = vadd.f32 %v2814, %v3014
    %v3079 = vadd.f32 %v2815, %v3015
    %v3080 = vadd.f32 %v2816, %v3016
    %v3081 = vadd.f32 %v2817, %v3017
    %v3082 = vadd.f32 %v2818, %v3018
    %v3083 = vadd.f32 %v2819, %v3019
    %v3084 = vadd.f32 %v2820, %v3020
    %v3085 = vadd.f32 %v2821, %v3021
    %v3086 = vadd.f32 %v2822, %v3022
    %v3087 = vadd.f32 %v2823, %v3023
    %v3088 = vadd.f32 %v2824, %v3024
    %v3089 = vadd.f32 %v2825, %v3025
    %v3090 = vadd.f32 %v2826, %v3026
    %v3091 = vadd.f32 %v2827, %v3027
    %v3092 = vadd.f32 %v2828, %v3028
    %v3093 = vadd.f32 %v2829, %v3029
    %v3094 = vadd.f32 %v2830, %v3030
    %v3095 = vadd.f32 %v2831, %v3031
    %v3096 = vadd.f32 %v2832, %v3032
    %v3097 = vadd.f32 %v2833, %v3033
    %v3098 = vadd.f32 %v2834, %v3034
    %v3099 = vadd.f32 %v2835, %v3035
    %v3100 = vadd.f32 %v2836, %v3036
    %v3101 = vadd.f32 %v2837, %v3037
    %3102 = vset.pattern.permute.xlu0 11
    %3103 = vperm.xlu0 %3102, %v130
    %v3104 = vpop.permute.xlu0 %3103
    %3106 = vset.pattern.permute.xlu0 11
    %3107 = vperm.xlu0 %3106, %v131
    %v3108 = vpop.permute.xlu0 %3107
    %3110 = vset.pattern.permute.xlu0 11
    %3111 = vperm.xlu0 %3110, %v132
    %v3112 = vpop.permute.xlu0 %3111
    %3114 = vset.pattern.permute.xlu0 11
    %3115 = vperm.xlu0 %3114, %v133
    %v3116 = vpop.permute.xlu0 %3115
    %3118 = vset.pattern.permute.xlu0 11
    %3119 = vperm.xlu0 %3118, %v134
    %v3120 = vpop.permute.xlu0 %3119
    %3122 = vset.pattern.permute.xlu0 11
    %3123 = vperm.xlu0 %3122, %v135
    %v3124 = vpop.permute.xlu0 %3123
    %3126 = vset.pattern.permute.xlu0 11
    %3127 = vperm.xlu0 %3126, %v136
    %v3128 = vpop.permute.xlu0 %3127
    %3130 = vset.pattern.permute.xlu0 11
    %3131 = vperm.xlu0 %3130, %v137
    %v3132 = vpop.permute.xlu0 %3131
    %3134 = vset.pattern.permute.xlu0 11
    %3135 = vperm.xlu0 %3134, %v138
    %v3136 = vpop.permute.xlu0 %3135
    %3138 = vset.pattern.permute.xlu0 11
    %3139 = vperm.xlu0 %3138, %v139
    %v3140 = vpop.permute.xlu0 %3139
    %3142 = vset.pattern.permute.xlu0 11
    %3143 = vperm.xlu0 %3142, %v140
    %v3144 = vpop.permute.xlu0 %3143
    %3146 = vset.pattern.permute.xlu0 11
    %3147 = vperm.xlu0 %3146, %v141
    %v3148 = vpop.permute.xlu0 %3147
    %3150 = vset.pattern.permute.xlu0 11
    %3151 = vperm.xlu0 %3150, %v142
    %v3152 = vpop.permute.xlu0 %3151
    %3154 = vset.pattern.permute.xlu0 11
    %3155 = vperm.xlu0 %3154, %v143
    %v3156 = vpop.permute.xlu0 %3155
    %3158 = vset.pattern.permute.xlu0 11
    %3159 = vperm.xlu0 %3158, %v144
    %v3160 = vpop.permute.xlu0 %3159
    %3162 = vset.pattern.permute.xlu0 11
    %3163 = vperm.xlu0 %3162, %v145
    %v3164 = vpop.permute.xlu0 %3163
    %3166 = vset.pattern.permute.xlu0 11
    %3167 = vperm.xlu0 %3166, %v146
    %v3168 = vpop.permute.xlu0 %3167
    %3170 = vset.pattern.permute.xlu0 11
    %3171 = vperm.xlu0 %3170, %v147
    %v3172 = vpop.permute.xlu0 %3171
    %3174 = vset.pattern.permute.xlu0 11
    %3175 = vperm.xlu0 %3174, %v148
    %v3176 = vpop.permute.xlu0 %3175
    %3178 = vset.pattern.permute.xlu0 11
    %3179 = vperm.xlu0 %3178, %v149
    %v3180 = vpop.permute.xlu0 %3179
    %3182 = vset.pattern.permute.xlu0 11
    %3183 = vperm.xlu0 %3182, %v150
    %v3184 = vpop.permute.xlu0 %3183
    %3186 = vset.pattern.permute.xlu0 11
    %3187 = vperm.xlu0 %3186, %v151
    %v3188 = vpop.permute.xlu0 %3187
    %3190 = vset.pattern.permute.xlu0 11
    %3191 = vperm.xlu0 %3190, %v152
    %v3192 = vpop.permute.xlu0 %3191
    %3194 = vset.pattern.permute.xlu0 11
    %3195 = vperm.xlu0 %3194, %v153
    %v3196 = vpop.permute.xlu0 %3195
    %3198 = vset.pattern.permute.xlu0 11
    %3199 = vperm.xlu0 %3198, %v154
    %v3200 = vpop.permute.xlu0 %3199
    %3202 = vset.pattern.permute.xlu0 11
    %3203 = vperm.xlu0 %3202, %v155
    %v3204 = vpop.permute.xlu0 %3203
    %3206 = vset.pattern.permute.xlu0 11
    %3207 = vperm.xlu0 %3206, %v156
    %v3208 = vpop.permute.xlu0 %3207
    %3210 = vset.pattern.permute.xlu0 11
    %3211 = vperm.xlu0 %3210, %v157
    %v3212 = vpop.permute.xlu0 %3211
    %3214 = vset.pattern.permute.xlu0 11
    %3215 = vperm.xlu0 %3214, %v158
    %v3216 = vpop.permute.xlu0 %3215
    %3218 = vset.pattern.permute.xlu0 11
    %3219 = vperm.xlu0 %3218, %v159
    %v3220 = vpop.permute.xlu0 %3219
    %3222 = vset.pattern.permute.xlu0 11
    %3223 = vperm.xlu0 %3222, %v160
    %v3224 = vpop.permute.xlu0 %3223
    %3226 = vset.pattern.permute.xlu0 11
    %3227 = vperm.xlu0 %3226, %v161
    %v3228 = vpop.permute.xlu0 %3227
    %v3230 = vlaneseq
    %v3231 = vshrl.u32 %v3230, 7
    %v3232 = vsub.s32 3, %v3231
    %v3233 = vrot.slane %v164, %v3232
    %v3234 = vlaneseq
    %v3235 = vshrl.u32 %v3234, 7
    %v3236 = vsub.s32 3, %v3235
    %v3237 = vrot.slane %v165, %v3236
    %v3238 = vmul.f32 %v3104, %v3233
    %v3239 = vmul.f32 %v3104, %v3237
    %v3240 = vmul.f32 %v3108, %v3233
    %v3241 = vmul.f32 %v3108, %v3237
    %v3242 = vmul.f32 %v3112, %v3233
    %v3243 = vmul.f32 %v3112, %v3237
    %v3244 = vmul.f32 %v3116, %v3233
    %v3245 = vmul.f32 %v3116, %v3237
    %v3246 = vmul.f32 %v3120, %v3233
    %v3247 = vmul.f32 %v3120, %v3237
    %v3248 = vmul.f32 %v3124, %v3233
    %v3249 = vmul.f32 %v3124, %v3237
    %v3250 = vmul.f32 %v3128, %v3233
    %v3251 = vmul.f32 %v3128, %v3237
    %v3252 = vmul.f32 %v3132, %v3233
    %v3253 = vmul.f32 %v3132, %v3237
    %v3254 = vmul.f32 %v3136, %v3233
    %v3255 = vmul.f32 %v3136, %v3237
    %v3256 = vmul.f32 %v3140, %v3233
    %v3257 = vmul.f32 %v3140, %v3237
    %v3258 = vmul.f32 %v3144, %v3233
    %v3259 = vmul.f32 %v3144, %v3237
    %v3260 = vmul.f32 %v3148, %v3233
    %v3261 = vmul.f32 %v3148, %v3237
    %v3262 = vmul.f32 %v3152, %v3233
    %v3263 = vmul.f32 %v3152, %v3237
    %v3264 = vmul.f32 %v3156, %v3233
    %v3265 = vmul.f32 %v3156, %v3237
    %v3266 = vmul.f32 %v3160, %v3233
    %v3267 = vmul.f32 %v3160, %v3237
    %v3268 = vmul.f32 %v3164, %v3233
    %v3269 = vmul.f32 %v3164, %v3237
    %v3270 = vmul.f32 %v3168, %v3233
    %v3271 = vmul.f32 %v3168, %v3237
    %v3272 = vmul.f32 %v3172, %v3233
    %v3273 = vmul.f32 %v3172, %v3237
    %v3274 = vmul.f32 %v3176, %v3233
    %v3275 = vmul.f32 %v3176, %v3237
    %v3276 = vmul.f32 %v3180, %v3233
    %v3277 = vmul.f32 %v3180, %v3237
    %v3278 = vmul.f32 %v3184, %v3233
    %v3279 = vmul.f32 %v3184, %v3237
    %v3280 = vmul.f32 %v3188, %v3233
    %v3281 = vmul.f32 %v3188, %v3237
    %v3282 = vmul.f32 %v3192, %v3233
    %v3283 = vmul.f32 %v3192, %v3237
    %v3284 = vmul.f32 %v3196, %v3233
    %v3285 = vmul.f32 %v3196, %v3237
    %v3286 = vmul.f32 %v3200, %v3233
    %v3287 = vmul.f32 %v3200, %v3237
    %v3288 = vmul.f32 %v3204, %v3233
    %v3289 = vmul.f32 %v3204, %v3237
    %v3290 = vmul.f32 %v3208, %v3233
    %v3291 = vmul.f32 %v3208, %v3237
    %v3292 = vmul.f32 %v3212, %v3233
    %v3293 = vmul.f32 %v3212, %v3237
    %v3294 = vmul.f32 %v3216, %v3233
    %v3295 = vmul.f32 %v3216, %v3237
    %v3296 = vmul.f32 %v3220, %v3233
    %v3297 = vmul.f32 %v3220, %v3237
    %v3298 = vmul.f32 %v3224, %v3233
    %v3299 = vmul.f32 %v3224, %v3237
    %v3300 = vmul.f32 %v3228, %v3233
    %v3301 = vmul.f32 %v3228, %v3237
    %v3302 = vadd.f32 %v3038, %v3238
    %v3303 = vadd.f32 %v3039, %v3239
    %v3304 = vadd.f32 %v3040, %v3240
    %v3305 = vadd.f32 %v3041, %v3241
    %v3306 = vadd.f32 %v3042, %v3242
    %v3307 = vadd.f32 %v3043, %v3243
    %v3308 = vadd.f32 %v3044, %v3244
    %v3309 = vadd.f32 %v3045, %v3245
    %v3310 = vadd.f32 %v3046, %v3246
    %v3311 = vadd.f32 %v3047, %v3247
    %v3312 = vadd.f32 %v3048, %v3248
    %v3313 = vadd.f32 %v3049, %v3249
    %v3314 = vadd.f32 %v3050, %v3250
    %v3315 = vadd.f32 %v3051, %v3251
    %v3316 = vadd.f32 %v3052, %v3252
    %v3317 = vadd.f32 %v3053, %v3253
    %v3318 = vadd.f32 %v3054, %v3254
    %v3319 = vadd.f32 %v3055, %v3255
    %v3320 = vadd.f32 %v3056, %v3256
    %v3321 = vadd.f32 %v3057, %v3257
    %v3322 = vadd.f32 %v3058, %v3258
    %v3323 = vadd.f32 %v3059, %v3259
    %v3324 = vadd.f32 %v3060, %v3260
    %v3325 = vadd.f32 %v3061, %v3261
    %v3326 = vadd.f32 %v3062, %v3262
    %v3327 = vadd.f32 %v3063, %v3263
    %v3328 = vadd.f32 %v3064, %v3264
    %v3329 = vadd.f32 %v3065, %v3265
    %v3330 = vadd.f32 %v3066, %v3266
    %v3331 = vadd.f32 %v3067, %v3267
    %v3332 = vadd.f32 %v3068, %v3268
    %v3333 = vadd.f32 %v3069, %v3269
    %v3334 = vadd.f32 %v3070, %v3270
    %v3335 = vadd.f32 %v3071, %v3271
    %v3336 = vadd.f32 %v3072, %v3272
    %v3337 = vadd.f32 %v3073, %v3273
    %v3338 = vadd.f32 %v3074, %v3274
    %v3339 = vadd.f32 %v3075, %v3275
    %v3340 = vadd.f32 %v3076, %v3276
    %v3341 = vadd.f32 %v3077, %v3277
    %v3342 = vadd.f32 %v3078, %v3278
    %v3343 = vadd.f32 %v3079, %v3279
    %v3344 = vadd.f32 %v3080, %v3280
    %v3345 = vadd.f32 %v3081, %v3281
    %v3346 = vadd.f32 %v3082, %v3282
    %v3347 = vadd.f32 %v3083, %v3283
    %v3348 = vadd.f32 %v3084, %v3284
    %v3349 = vadd.f32 %v3085, %v3285
    %v3350 = vadd.f32 %v3086, %v3286
    %v3351 = vadd.f32 %v3087, %v3287
    %v3352 = vadd.f32 %v3088, %v3288
    %v3353 = vadd.f32 %v3089, %v3289
    %v3354 = vadd.f32 %v3090, %v3290
    %v3355 = vadd.f32 %v3091, %v3291
    %v3356 = vadd.f32 %v3092, %v3292
    %v3357 = vadd.f32 %v3093, %v3293
    %v3358 = vadd.f32 %v3094, %v3294
    %v3359 = vadd.f32 %v3095, %v3295
    %v3360 = vadd.f32 %v3096, %v3296
    %v3361 = vadd.f32 %v3097, %v3297
    %v3362 = vadd.f32 %v3098, %v3298
    %v3363 = vadd.f32 %v3099, %v3299
    %v3364 = vadd.f32 %v3100, %v3300
    %v3365 = vadd.f32 %v3101, %v3301
    %3366 = vset.pattern.permute.xlu0 12
    %3367 = vperm.xlu0 %3366, %v130
    %v3368 = vpop.permute.xlu0 %3367
    %3370 = vset.pattern.permute.xlu0 12
    %3371 = vperm.xlu0 %3370, %v131
    %v3372 = vpop.permute.xlu0 %3371
    %3374 = vset.pattern.permute.xlu0 12
    %3375 = vperm.xlu0 %3374, %v132
    %v3376 = vpop.permute.xlu0 %3375
    %3378 = vset.pattern.permute.xlu0 12
    %3379 = vperm.xlu0 %3378, %v133
    %v3380 = vpop.permute.xlu0 %3379
    %3382 = vset.pattern.permute.xlu0 12
    %3383 = vperm.xlu0 %3382, %v134
    %v3384 = vpop.permute.xlu0 %3383
    %3386 = vset.pattern.permute.xlu0 12
    %3387 = vperm.xlu0 %3386, %v135
    %v3388 = vpop.permute.xlu0 %3387
    %3390 = vset.pattern.permute.xlu0 12
    %3391 = vperm.xlu0 %3390, %v136
    %v3392 = vpop.permute.xlu0 %3391
    %3394 = vset.pattern.permute.xlu0 12
    %3395 = vperm.xlu0 %3394, %v137
    %v3396 = vpop.permute.xlu0 %3395
    %3398 = vset.pattern.permute.xlu0 12
    %3399 = vperm.xlu0 %3398, %v138
    %v3400 = vpop.permute.xlu0 %3399
    %3402 = vset.pattern.permute.xlu0 12
    %3403 = vperm.xlu0 %3402, %v139
    %v3404 = vpop.permute.xlu0 %3403
    %3406 = vset.pattern.permute.xlu0 12
    %3407 = vperm.xlu0 %3406, %v140
    %v3408 = vpop.permute.xlu0 %3407
    %3410 = vset.pattern.permute.xlu0 12
    %3411 = vperm.xlu0 %3410, %v141
    %v3412 = vpop.permute.xlu0 %3411
    %3414 = vset.pattern.permute.xlu0 12
    %3415 = vperm.xlu0 %3414, %v142
    %v3416 = vpop.permute.xlu0 %3415
    %3418 = vset.pattern.permute.xlu0 12
    %3419 = vperm.xlu0 %3418, %v143
    %v3420 = vpop.permute.xlu0 %3419
    %3422 = vset.pattern.permute.xlu0 12
    %3423 = vperm.xlu0 %3422, %v144
    %v3424 = vpop.permute.xlu0 %3423
    %3426 = vset.pattern.permute.xlu0 12
    %3427 = vperm.xlu0 %3426, %v145
    %v3428 = vpop.permute.xlu0 %3427
    %3430 = vset.pattern.permute.xlu0 12
    %3431 = vperm.xlu0 %3430, %v146
    %v3432 = vpop.permute.xlu0 %3431
    %3434 = vset.pattern.permute.xlu0 12
    %3435 = vperm.xlu0 %3434, %v147
    %v3436 = vpop.permute.xlu0 %3435
    %3438 = vset.pattern.permute.xlu0 12
    %3439 = vperm.xlu0 %3438, %v148
    %v3440 = vpop.permute.xlu0 %3439
    %3442 = vset.pattern.permute.xlu0 12
    %3443 = vperm.xlu0 %3442, %v149
    %v3444 = vpop.permute.xlu0 %3443
    %3446 = vset.pattern.permute.xlu0 12
    %3447 = vperm.xlu0 %3446, %v150
    %v3448 = vpop.permute.xlu0 %3447
    %3450 = vset.pattern.permute.xlu0 12
    %3451 = vperm.xlu0 %3450, %v151
    %v3452 = vpop.permute.xlu0 %3451
    %3454 = vset.pattern.permute.xlu0 12
    %3455 = vperm.xlu0 %3454, %v152
    %v3456 = vpop.permute.xlu0 %3455
    %3458 = vset.pattern.permute.xlu0 12
    %3459 = vperm.xlu0 %3458, %v153
    %v3460 = vpop.permute.xlu0 %3459
    %3462 = vset.pattern.permute.xlu0 12
    %3463 = vperm.xlu0 %3462, %v154
    %v3464 = vpop.permute.xlu0 %3463
    %3466 = vset.pattern.permute.xlu0 12
    %3467 = vperm.xlu0 %3466, %v155
    %v3468 = vpop.permute.xlu0 %3467
    %3470 = vset.pattern.permute.xlu0 12
    %3471 = vperm.xlu0 %3470, %v156
    %v3472 = vpop.permute.xlu0 %3471
    %3474 = vset.pattern.permute.xlu0 12
    %3475 = vperm.xlu0 %3474, %v157
    %v3476 = vpop.permute.xlu0 %3475
    %3478 = vset.pattern.permute.xlu0 12
    %3479 = vperm.xlu0 %3478, %v158
    %v3480 = vpop.permute.xlu0 %3479
    %3482 = vset.pattern.permute.xlu0 12
    %3483 = vperm.xlu0 %3482, %v159
    %v3484 = vpop.permute.xlu0 %3483
    %3486 = vset.pattern.permute.xlu0 12
    %3487 = vperm.xlu0 %3486, %v160
    %v3488 = vpop.permute.xlu0 %3487
    %3490 = vset.pattern.permute.xlu0 12
    %3491 = vperm.xlu0 %3490, %v161
    %v3492 = vpop.permute.xlu0 %3491
    %v3494 = vlaneseq
    %v3495 = vshrl.u32 %v3494, 7
    %v3496 = vsub.s32 4, %v3495
    %v3497 = vrot.slane %v164, %v3496
    %v3498 = vlaneseq
    %v3499 = vshrl.u32 %v3498, 7
    %v3500 = vsub.s32 4, %v3499
    %v3501 = vrot.slane %v165, %v3500
    %v3502 = vmul.f32 %v3368, %v3497
    %v3503 = vmul.f32 %v3368, %v3501
    %v3504 = vmul.f32 %v3372, %v3497
    %v3505 = vmul.f32 %v3372, %v3501
    %v3506 = vmul.f32 %v3376, %v3497
    %v3507 = vmul.f32 %v3376, %v3501
    %v3508 = vmul.f32 %v3380, %v3497
    %v3509 = vmul.f32 %v3380, %v3501
    %v3510 = vmul.f32 %v3384, %v3497
    %v3511 = vmul.f32 %v3384, %v3501
    %v3512 = vmul.f32 %v3388, %v3497
    %v3513 = vmul.f32 %v3388, %v3501
    %v3514 = vmul.f32 %v3392, %v3497
    %v3515 = vmul.f32 %v3392, %v3501
    %v3516 = vmul.f32 %v3396, %v3497
    %v3517 = vmul.f32 %v3396, %v3501
    %v3518 = vmul.f32 %v3400, %v3497
    %v3519 = vmul.f32 %v3400, %v3501
    %v3520 = vmul.f32 %v3404, %v3497
    %v3521 = vmul.f32 %v3404, %v3501
    %v3522 = vmul.f32 %v3408, %v3497
    %v3523 = vmul.f32 %v3408, %v3501
    %v3524 = vmul.f32 %v3412, %v3497
    %v3525 = vmul.f32 %v3412, %v3501
    %v3526 = vmul.f32 %v3416, %v3497
    %v3527 = vmul.f32 %v3416, %v3501
    %v3528 = vmul.f32 %v3420, %v3497
    %v3529 = vmul.f32 %v3420, %v3501
    %v3530 = vmul.f32 %v3424, %v3497
    %v3531 = vmul.f32 %v3424, %v3501
    %v3532 = vmul.f32 %v3428, %v3497
    %v3533 = vmul.f32 %v3428, %v3501
    %v3534 = vmul.f32 %v3432, %v3497
    %v3535 = vmul.f32 %v3432, %v3501
    %v3536 = vmul.f32 %v3436, %v3497
    %v3537 = vmul.f32 %v3436, %v3501
    %v3538 = vmul.f32 %v3440, %v3497
    %v3539 = vmul.f32 %v3440, %v3501
    %v3540 = vmul.f32 %v3444, %v3497
    %v3541 = vmul.f32 %v3444, %v3501
    %v3542 = vmul.f32 %v3448, %v3497
    %v3543 = vmul.f32 %v3448, %v3501
    %v3544 = vmul.f32 %v3452, %v3497
    %v3545 = vmul.f32 %v3452, %v3501
    %v3546 = vmul.f32 %v3456, %v3497
    %v3547 = vmul.f32 %v3456, %v3501
    %v3548 = vmul.f32 %v3460, %v3497
    %v3549 = vmul.f32 %v3460, %v3501
    %v3550 = vmul.f32 %v3464, %v3497
    %v3551 = vmul.f32 %v3464, %v3501
    %v3552 = vmul.f32 %v3468, %v3497
    %v3553 = vmul.f32 %v3468, %v3501
    %v3554 = vmul.f32 %v3472, %v3497
    %v3555 = vmul.f32 %v3472, %v3501
    %v3556 = vmul.f32 %v3476, %v3497
    %v3557 = vmul.f32 %v3476, %v3501
    %v3558 = vmul.f32 %v3480, %v3497
    %v3559 = vmul.f32 %v3480, %v3501
    %v3560 = vmul.f32 %v3484, %v3497
    %v3561 = vmul.f32 %v3484, %v3501
    %v3562 = vmul.f32 %v3488, %v3497
    %v3563 = vmul.f32 %v3488, %v3501
    %v3564 = vmul.f32 %v3492, %v3497
    %v3565 = vmul.f32 %v3492, %v3501
    %v3566 = vadd.f32 %v3302, %v3502
    %v3567 = vadd.f32 %v3303, %v3503
    %v3568 = vadd.f32 %v3304, %v3504
    %v3569 = vadd.f32 %v3305, %v3505
    %v3570 = vadd.f32 %v3306, %v3506
    %v3571 = vadd.f32 %v3307, %v3507
    %v3572 = vadd.f32 %v3308, %v3508
    %v3573 = vadd.f32 %v3309, %v3509
    %v3574 = vadd.f32 %v3310, %v3510
    %v3575 = vadd.f32 %v3311, %v3511
    %v3576 = vadd.f32 %v3312, %v3512
    %v3577 = vadd.f32 %v3313, %v3513
    %v3578 = vadd.f32 %v3314, %v3514
    %v3579 = vadd.f32 %v3315, %v3515
    %v3580 = vadd.f32 %v3316, %v3516
    %v3581 = vadd.f32 %v3317, %v3517
    %v3582 = vadd.f32 %v3318, %v3518
    %v3583 = vadd.f32 %v3319, %v3519
    %v3584 = vadd.f32 %v3320, %v3520
    %v3585 = vadd.f32 %v3321, %v3521
    %v3586 = vadd.f32 %v3322, %v3522
    %v3587 = vadd.f32 %v3323, %v3523
    %v3588 = vadd.f32 %v3324, %v3524
    %v3589 = vadd.f32 %v3325, %v3525
    %v3590 = vadd.f32 %v3326, %v3526
    %v3591 = vadd.f32 %v3327, %v3527
    %v3592 = vadd.f32 %v3328, %v3528
    %v3593 = vadd.f32 %v3329, %v3529
    %v3594 = vadd.f32 %v3330, %v3530
    %v3595 = vadd.f32 %v3331, %v3531
    %v3596 = vadd.f32 %v3332, %v3532
    %v3597 = vadd.f32 %v3333, %v3533
    %v3598 = vadd.f32 %v3334, %v3534
    %v3599 = vadd.f32 %v3335, %v3535
    %v3600 = vadd.f32 %v3336, %v3536
    %v3601 = vadd.f32 %v3337, %v3537
    %v3602 = vadd.f32 %v3338, %v3538
    %v3603 = vadd.f32 %v3339, %v3539
    %v3604 = vadd.f32 %v3340, %v3540
    %v3605 = vadd.f32 %v3341, %v3541
    %v3606 = vadd.f32 %v3342, %v3542
    %v3607 = vadd.f32 %v3343, %v3543
    %v3608 = vadd.f32 %v3344, %v3544
    %v3609 = vadd.f32 %v3345, %v3545
    %v3610 = vadd.f32 %v3346, %v3546
    %v3611 = vadd.f32 %v3347, %v3547
    %v3612 = vadd.f32 %v3348, %v3548
    %v3613 = vadd.f32 %v3349, %v3549
    %v3614 = vadd.f32 %v3350, %v3550
    %v3615 = vadd.f32 %v3351, %v3551
    %v3616 = vadd.f32 %v3352, %v3552
    %v3617 = vadd.f32 %v3353, %v3553
    %v3618 = vadd.f32 %v3354, %v3554
    %v3619 = vadd.f32 %v3355, %v3555
    %v3620 = vadd.f32 %v3356, %v3556
    %v3621 = vadd.f32 %v3357, %v3557
    %v3622 = vadd.f32 %v3358, %v3558
    %v3623 = vadd.f32 %v3359, %v3559
    %v3624 = vadd.f32 %v3360, %v3560
    %v3625 = vadd.f32 %v3361, %v3561
    %v3626 = vadd.f32 %v3362, %v3562
    %v3627 = vadd.f32 %v3363, %v3563
    %v3628 = vadd.f32 %v3364, %v3564
    %v3629 = vadd.f32 %v3365, %v3565
    %3630 = vset.pattern.permute.xlu0 13
    %3631 = vperm.xlu0 %3630, %v130
    %v3632 = vpop.permute.xlu0 %3631
    %3634 = vset.pattern.permute.xlu0 13
    %3635 = vperm.xlu0 %3634, %v131
    %v3636 = vpop.permute.xlu0 %3635
    %3638 = vset.pattern.permute.xlu0 13
    %3639 = vperm.xlu0 %3638, %v132
    %v3640 = vpop.permute.xlu0 %3639
    %3642 = vset.pattern.permute.xlu0 13
    %3643 = vperm.xlu0 %3642, %v133
    %v3644 = vpop.permute.xlu0 %3643
    %3646 = vset.pattern.permute.xlu0 13
    %3647 = vperm.xlu0 %3646, %v134
    %v3648 = vpop.permute.xlu0 %3647
    %3650 = vset.pattern.permute.xlu0 13
    %3651 = vperm.xlu0 %3650, %v135
    %v3652 = vpop.permute.xlu0 %3651
    %3654 = vset.pattern.permute.xlu0 13
    %3655 = vperm.xlu0 %3654, %v136
    %v3656 = vpop.permute.xlu0 %3655
    %3658 = vset.pattern.permute.xlu0 13
    %3659 = vperm.xlu0 %3658, %v137
    %v3660 = vpop.permute.xlu0 %3659
    %3662 = vset.pattern.permute.xlu0 13
    %3663 = vperm.xlu0 %3662, %v138
    %v3664 = vpop.permute.xlu0 %3663
    %3666 = vset.pattern.permute.xlu0 13
    %3667 = vperm.xlu0 %3666, %v139
    %v3668 = vpop.permute.xlu0 %3667
    %3670 = vset.pattern.permute.xlu0 13
    %3671 = vperm.xlu0 %3670, %v140
    %v3672 = vpop.permute.xlu0 %3671
    %3674 = vset.pattern.permute.xlu0 13
    %3675 = vperm.xlu0 %3674, %v141
    %v3676 = vpop.permute.xlu0 %3675
    %3678 = vset.pattern.permute.xlu0 13
    %3679 = vperm.xlu0 %3678, %v142
    %v3680 = vpop.permute.xlu0 %3679
    %3682 = vset.pattern.permute.xlu0 13
    %3683 = vperm.xlu0 %3682, %v143
    %v3684 = vpop.permute.xlu0 %3683
    %3686 = vset.pattern.permute.xlu0 13
    %3687 = vperm.xlu0 %3686, %v144
    %v3688 = vpop.permute.xlu0 %3687
    %3690 = vset.pattern.permute.xlu0 13
    %3691 = vperm.xlu0 %3690, %v145
    %v3692 = vpop.permute.xlu0 %3691
    %3694 = vset.pattern.permute.xlu0 13
    %3695 = vperm.xlu0 %3694, %v146
    %v3696 = vpop.permute.xlu0 %3695
    %3698 = vset.pattern.permute.xlu0 13
    %3699 = vperm.xlu0 %3698, %v147
    %v3700 = vpop.permute.xlu0 %3699
    %3702 = vset.pattern.permute.xlu0 13
    %3703 = vperm.xlu0 %3702, %v148
    %v3704 = vpop.permute.xlu0 %3703
    %3706 = vset.pattern.permute.xlu0 13
    %3707 = vperm.xlu0 %3706, %v149
    %v3708 = vpop.permute.xlu0 %3707
    %3710 = vset.pattern.permute.xlu0 13
    %3711 = vperm.xlu0 %3710, %v150
    %v3712 = vpop.permute.xlu0 %3711
    %3714 = vset.pattern.permute.xlu0 13
    %3715 = vperm.xlu0 %3714, %v151
    %v3716 = vpop.permute.xlu0 %3715
    %3718 = vset.pattern.permute.xlu0 13
    %3719 = vperm.xlu0 %3718, %v152
    %v3720 = vpop.permute.xlu0 %3719
    %3722 = vset.pattern.permute.xlu0 13
    %3723 = vperm.xlu0 %3722, %v153
    %v3724 = vpop.permute.xlu0 %3723
    %3726 = vset.pattern.permute.xlu0 13
    %3727 = vperm.xlu0 %3726, %v154
    %v3728 = vpop.permute.xlu0 %3727
    %3730 = vset.pattern.permute.xlu0 13
    %3731 = vperm.xlu0 %3730, %v155
    %v3732 = vpop.permute.xlu0 %3731
    %3734 = vset.pattern.permute.xlu0 13
    %3735 = vperm.xlu0 %3734, %v156
    %v3736 = vpop.permute.xlu0 %3735
    %3738 = vset.pattern.permute.xlu0 13
    %3739 = vperm.xlu0 %3738, %v157
    %v3740 = vpop.permute.xlu0 %3739
    %3742 = vset.pattern.permute.xlu0 13
    %3743 = vperm.xlu0 %3742, %v158
    %v3744 = vpop.permute.xlu0 %3743
    %3746 = vset.pattern.permute.xlu0 13
    %3747 = vperm.xlu0 %3746, %v159
    %v3748 = vpop.permute.xlu0 %3747
    %3750 = vset.pattern.permute.xlu0 13
    %3751 = vperm.xlu0 %3750, %v160
    %v3752 = vpop.permute.xlu0 %3751
    %3754 = vset.pattern.permute.xlu0 13
    %3755 = vperm.xlu0 %3754, %v161
    %v3756 = vpop.permute.xlu0 %3755
    %v3758 = vlaneseq
    %v3759 = vshrl.u32 %v3758, 7
    %v3760 = vsub.s32 5, %v3759
    %v3761 = vrot.slane %v164, %v3760
    %v3762 = vlaneseq
    %v3763 = vshrl.u32 %v3762, 7
    %v3764 = vsub.s32 5, %v3763
    %v3765 = vrot.slane %v165, %v3764
    %v3766 = vmul.f32 %v3632, %v3761
    %v3767 = vmul.f32 %v3632, %v3765
    %v3768 = vmul.f32 %v3636, %v3761
    %v3769 = vmul.f32 %v3636, %v3765
    %v3770 = vmul.f32 %v3640, %v3761
    %v3771 = vmul.f32 %v3640, %v3765
    %v3772 = vmul.f32 %v3644, %v3761
    %v3773 = vmul.f32 %v3644, %v3765
    %v3774 = vmul.f32 %v3648, %v3761
    %v3775 = vmul.f32 %v3648, %v3765
    %v3776 = vmul.f32 %v3652, %v3761
    %v3777 = vmul.f32 %v3652, %v3765
    %v3778 = vmul.f32 %v3656, %v3761
    %v3779 = vmul.f32 %v3656, %v3765
    %v3780 = vmul.f32 %v3660, %v3761
    %v3781 = vmul.f32 %v3660, %v3765
    %v3782 = vmul.f32 %v3664, %v3761
    %v3783 = vmul.f32 %v3664, %v3765
    %v3784 = vmul.f32 %v3668, %v3761
    %v3785 = vmul.f32 %v3668, %v3765
    %v3786 = vmul.f32 %v3672, %v3761
    %v3787 = vmul.f32 %v3672, %v3765
    %v3788 = vmul.f32 %v3676, %v3761
    %v3789 = vmul.f32 %v3676, %v3765
    %v3790 = vmul.f32 %v3680, %v3761
    %v3791 = vmul.f32 %v3680, %v3765
    %v3792 = vmul.f32 %v3684, %v3761
    %v3793 = vmul.f32 %v3684, %v3765
    %v3794 = vmul.f32 %v3688, %v3761
    %v3795 = vmul.f32 %v3688, %v3765
    %v3796 = vmul.f32 %v3692, %v3761
    %v3797 = vmul.f32 %v3692, %v3765
    %v3798 = vmul.f32 %v3696, %v3761
    %v3799 = vmul.f32 %v3696, %v3765
    %v3800 = vmul.f32 %v3700, %v3761
    %v3801 = vmul.f32 %v3700, %v3765
    %v3802 = vmul.f32 %v3704, %v3761
    %v3803 = vmul.f32 %v3704, %v3765
    %v3804 = vmul.f32 %v3708, %v3761
    %v3805 = vmul.f32 %v3708, %v3765
    %v3806 = vmul.f32 %v3712, %v3761
    %v3807 = vmul.f32 %v3712, %v3765
    %v3808 = vmul.f32 %v3716, %v3761
    %v3809 = vmul.f32 %v3716, %v3765
    %v3810 = vmul.f32 %v3720, %v3761
    %v3811 = vmul.f32 %v3720, %v3765
    %v3812 = vmul.f32 %v3724, %v3761
    %v3813 = vmul.f32 %v3724, %v3765
    %v3814 = vmul.f32 %v3728, %v3761
    %v3815 = vmul.f32 %v3728, %v3765
    %v3816 = vmul.f32 %v3732, %v3761
    %v3817 = vmul.f32 %v3732, %v3765
    %v3818 = vmul.f32 %v3736, %v3761
    %v3819 = vmul.f32 %v3736, %v3765
    %v3820 = vmul.f32 %v3740, %v3761
    %v3821 = vmul.f32 %v3740, %v3765
    %v3822 = vmul.f32 %v3744, %v3761
    %v3823 = vmul.f32 %v3744, %v3765
    %v3824 = vmul.f32 %v3748, %v3761
    %v3825 = vmul.f32 %v3748, %v3765
    %v3826 = vmul.f32 %v3752, %v3761
    %v3827 = vmul.f32 %v3752, %v3765
    %v3828 = vmul.f32 %v3756, %v3761
    %v3829 = vmul.f32 %v3756, %v3765
    %v3830 = vadd.f32 %v3566, %v3766
    %v3831 = vadd.f32 %v3567, %v3767
    %v3832 = vadd.f32 %v3568, %v3768
    %v3833 = vadd.f32 %v3569, %v3769
    %v3834 = vadd.f32 %v3570, %v3770
    %v3835 = vadd.f32 %v3571, %v3771
    %v3836 = vadd.f32 %v3572, %v3772
    %v3837 = vadd.f32 %v3573, %v3773
    %v3838 = vadd.f32 %v3574, %v3774
    %v3839 = vadd.f32 %v3575, %v3775
    %v3840 = vadd.f32 %v3576, %v3776
    %v3841 = vadd.f32 %v3577, %v3777
    %v3842 = vadd.f32 %v3578, %v3778
    %v3843 = vadd.f32 %v3579, %v3779
    %v3844 = vadd.f32 %v3580, %v3780
    %v3845 = vadd.f32 %v3581, %v3781
    %v3846 = vadd.f32 %v3582, %v3782
    %v3847 = vadd.f32 %v3583, %v3783
    %v3848 = vadd.f32 %v3584, %v3784
    %v3849 = vadd.f32 %v3585, %v3785
    %v3850 = vadd.f32 %v3586, %v3786
    %v3851 = vadd.f32 %v3587, %v3787
    %v3852 = vadd.f32 %v3588, %v3788
    %v3853 = vadd.f32 %v3589, %v3789
    %v3854 = vadd.f32 %v3590, %v3790
    %v3855 = vadd.f32 %v3591, %v3791
    %v3856 = vadd.f32 %v3592, %v3792
    %v3857 = vadd.f32 %v3593, %v3793
    %v3858 = vadd.f32 %v3594, %v3794
    %v3859 = vadd.f32 %v3595, %v3795
    %v3860 = vadd.f32 %v3596, %v3796
    %v3861 = vadd.f32 %v3597, %v3797
    %v3862 = vadd.f32 %v3598, %v3798
    %v3863 = vadd.f32 %v3599, %v3799
    %v3864 = vadd.f32 %v3600, %v3800
    %v3865 = vadd.f32 %v3601, %v3801
    %v3866 = vadd.f32 %v3602, %v3802
    %v3867 = vadd.f32 %v3603, %v3803
    %v3868 = vadd.f32 %v3604, %v3804
    %v3869 = vadd.f32 %v3605, %v3805
    %v3870 = vadd.f32 %v3606, %v3806
    %v3871 = vadd.f32 %v3607, %v3807
    %v3872 = vadd.f32 %v3608, %v3808
    %v3873 = vadd.f32 %v3609, %v3809
    %v3874 = vadd.f32 %v3610, %v3810
    %v3875 = vadd.f32 %v3611, %v3811
    %v3876 = vadd.f32 %v3612, %v3812
    %v3877 = vadd.f32 %v3613, %v3813
    %v3878 = vadd.f32 %v3614, %v3814
    %v3879 = vadd.f32 %v3615, %v3815
    %v3880 = vadd.f32 %v3616, %v3816
    %v3881 = vadd.f32 %v3617, %v3817
    %v3882 = vadd.f32 %v3618, %v3818
    %v3883 = vadd.f32 %v3619, %v3819
    %v3884 = vadd.f32 %v3620, %v3820
    %v3885 = vadd.f32 %v3621, %v3821
    %v3886 = vadd.f32 %v3622, %v3822
    %v3887 = vadd.f32 %v3623, %v3823
    %v3888 = vadd.f32 %v3624, %v3824
    %v3889 = vadd.f32 %v3625, %v3825
    %v3890 = vadd.f32 %v3626, %v3826
    %v3891 = vadd.f32 %v3627, %v3827
    %v3892 = vadd.f32 %v3628, %v3828
    %v3893 = vadd.f32 %v3629, %v3829
    %3894 = vset.pattern.permute.xlu0 14
    %3895 = vperm.xlu0 %3894, %v130
    %v3896 = vpop.permute.xlu0 %3895
    %3898 = vset.pattern.permute.xlu0 14
    %3899 = vperm.xlu0 %3898, %v131
    %v3900 = vpop.permute.xlu0 %3899
    %3902 = vset.pattern.permute.xlu0 14
    %3903 = vperm.xlu0 %3902, %v132
    %v3904 = vpop.permute.xlu0 %3903
    %3906 = vset.pattern.permute.xlu0 14
    %3907 = vperm.xlu0 %3906, %v133
    %v3908 = vpop.permute.xlu0 %3907
    %3910 = vset.pattern.permute.xlu0 14
    %3911 = vperm.xlu0 %3910, %v134
    %v3912 = vpop.permute.xlu0 %3911
    %3914 = vset.pattern.permute.xlu0 14
    %3915 = vperm.xlu0 %3914, %v135
    %v3916 = vpop.permute.xlu0 %3915
    %3918 = vset.pattern.permute.xlu0 14
    %3919 = vperm.xlu0 %3918, %v136
    %v3920 = vpop.permute.xlu0 %3919
    %3922 = vset.pattern.permute.xlu0 14
    %3923 = vperm.xlu0 %3922, %v137
    %v3924 = vpop.permute.xlu0 %3923
    %3926 = vset.pattern.permute.xlu0 14
    %3927 = vperm.xlu0 %3926, %v138
    %v3928 = vpop.permute.xlu0 %3927
    %3930 = vset.pattern.permute.xlu0 14
    %3931 = vperm.xlu0 %3930, %v139
    %v3932 = vpop.permute.xlu0 %3931
    %3934 = vset.pattern.permute.xlu0 14
    %3935 = vperm.xlu0 %3934, %v140
    %v3936 = vpop.permute.xlu0 %3935
    %3938 = vset.pattern.permute.xlu0 14
    %3939 = vperm.xlu0 %3938, %v141
    %v3940 = vpop.permute.xlu0 %3939
    %3942 = vset.pattern.permute.xlu0 14
    %3943 = vperm.xlu0 %3942, %v142
    %v3944 = vpop.permute.xlu0 %3943
    %3946 = vset.pattern.permute.xlu0 14
    %3947 = vperm.xlu0 %3946, %v143
    %v3948 = vpop.permute.xlu0 %3947
    %3950 = vset.pattern.permute.xlu0 14
    %3951 = vperm.xlu0 %3950, %v144
    %v3952 = vpop.permute.xlu0 %3951
    %3954 = vset.pattern.permute.xlu0 14
    %3955 = vperm.xlu0 %3954, %v145
    %v3956 = vpop.permute.xlu0 %3955
    %3958 = vset.pattern.permute.xlu0 14
    %3959 = vperm.xlu0 %3958, %v146
    %v3960 = vpop.permute.xlu0 %3959
    %3962 = vset.pattern.permute.xlu0 14
    %3963 = vperm.xlu0 %3962, %v147
    %v3964 = vpop.permute.xlu0 %3963
    %3966 = vset.pattern.permute.xlu0 14
    %3967 = vperm.xlu0 %3966, %v148
    %v3968 = vpop.permute.xlu0 %3967
    %3970 = vset.pattern.permute.xlu0 14
    %3971 = vperm.xlu0 %3970, %v149
    %v3972 = vpop.permute.xlu0 %3971
    %3974 = vset.pattern.permute.xlu0 14
    %3975 = vperm.xlu0 %3974, %v150
    %v3976 = vpop.permute.xlu0 %3975
    %3978 = vset.pattern.permute.xlu0 14
    %3979 = vperm.xlu0 %3978, %v151
    %v3980 = vpop.permute.xlu0 %3979
    %3982 = vset.pattern.permute.xlu0 14
    %3983 = vperm.xlu0 %3982, %v152
    %v3984 = vpop.permute.xlu0 %3983
    %3986 = vset.pattern.permute.xlu0 14
    %3987 = vperm.xlu0 %3986, %v153
    %v3988 = vpop.permute.xlu0 %3987
    %3990 = vset.pattern.permute.xlu0 14
    %3991 = vperm.xlu0 %3990, %v154
    %v3992 = vpop.permute.xlu0 %3991
    %3994 = vset.pattern.permute.xlu0 14
    %3995 = vperm.xlu0 %3994, %v155
    %v3996 = vpop.permute.xlu0 %3995
    %3998 = vset.pattern.permute.xlu0 14
    %3999 = vperm.xlu0 %3998, %v156
    %v4000 = vpop.permute.xlu0 %3999
    %4002 = vset.pattern.permute.xlu0 14
    %4003 = vperm.xlu0 %4002, %v157
    %v4004 = vpop.permute.xlu0 %4003
    %4006 = vset.pattern.permute.xlu0 14
    %4007 = vperm.xlu0 %4006, %v158
    %v4008 = vpop.permute.xlu0 %4007
    %4010 = vset.pattern.permute.xlu0 14
    %4011 = vperm.xlu0 %4010, %v159
    %v4012 = vpop.permute.xlu0 %4011
    %4014 = vset.pattern.permute.xlu0 14
    %4015 = vperm.xlu0 %4014, %v160
    %v4016 = vpop.permute.xlu0 %4015
    %4018 = vset.pattern.permute.xlu0 14
    %4019 = vperm.xlu0 %4018, %v161
    %v4020 = vpop.permute.xlu0 %4019
    %v4022 = vlaneseq
    %v4023 = vshrl.u32 %v4022, 7
    %v4024 = vsub.s32 6, %v4023
    %v4025 = vrot.slane %v164, %v4024
    %v4026 = vlaneseq
    %v4027 = vshrl.u32 %v4026, 7
    %v4028 = vsub.s32 6, %v4027
    %v4029 = vrot.slane %v165, %v4028
    %v4030 = vmul.f32 %v3896, %v4025
    %v4031 = vmul.f32 %v3896, %v4029
    %v4032 = vmul.f32 %v3900, %v4025
    %v4033 = vmul.f32 %v3900, %v4029
    %v4034 = vmul.f32 %v3904, %v4025
    %v4035 = vmul.f32 %v3904, %v4029
    %v4036 = vmul.f32 %v3908, %v4025
    %v4037 = vmul.f32 %v3908, %v4029
    %v4038 = vmul.f32 %v3912, %v4025
    %v4039 = vmul.f32 %v3912, %v4029
    %v4040 = vmul.f32 %v3916, %v4025
    %v4041 = vmul.f32 %v3916, %v4029
    %v4042 = vmul.f32 %v3920, %v4025
    %v4043 = vmul.f32 %v3920, %v4029
    %v4044 = vmul.f32 %v3924, %v4025
    %v4045 = vmul.f32 %v3924, %v4029
    %v4046 = vmul.f32 %v3928, %v4025
    %v4047 = vmul.f32 %v3928, %v4029
    %v4048 = vmul.f32 %v3932, %v4025
    %v4049 = vmul.f32 %v3932, %v4029
    %v4050 = vmul.f32 %v3936, %v4025
    %v4051 = vmul.f32 %v3936, %v4029
    %v4052 = vmul.f32 %v3940, %v4025
    %v4053 = vmul.f32 %v3940, %v4029
    %v4054 = vmul.f32 %v3944, %v4025
    %v4055 = vmul.f32 %v3944, %v4029
    %v4056 = vmul.f32 %v3948, %v4025
    %v4057 = vmul.f32 %v3948, %v4029
    %v4058 = vmul.f32 %v3952, %v4025
    %v4059 = vmul.f32 %v3952, %v4029
    %v4060 = vmul.f32 %v3956, %v4025
    %v4061 = vmul.f32 %v3956, %v4029
    %v4062 = vmul.f32 %v3960, %v4025
    %v4063 = vmul.f32 %v3960, %v4029
    %v4064 = vmul.f32 %v3964, %v4025
    %v4065 = vmul.f32 %v3964, %v4029
    %v4066 = vmul.f32 %v3968, %v4025
    %v4067 = vmul.f32 %v3968, %v4029
    %v4068 = vmul.f32 %v3972, %v4025
    %v4069 = vmul.f32 %v3972, %v4029
    %v4070 = vmul.f32 %v3976, %v4025
    %v4071 = vmul.f32 %v3976, %v4029
    %v4072 = vmul.f32 %v3980, %v4025
    %v4073 = vmul.f32 %v3980, %v4029
    %v4074 = vmul.f32 %v3984, %v4025
    %v4075 = vmul.f32 %v3984, %v4029
    %v4076 = vmul.f32 %v3988, %v4025
    %v4077 = vmul.f32 %v3988, %v4029
    %v4078 = vmul.f32 %v3992, %v4025
    %v4079 = vmul.f32 %v3992, %v4029
    %v4080 = vmul.f32 %v3996, %v4025
    %v4081 = vmul.f32 %v3996, %v4029
    %v4082 = vmul.f32 %v4000, %v4025
    %v4083 = vmul.f32 %v4000, %v4029
    %v4084 = vmul.f32 %v4004, %v4025
    %v4085 = vmul.f32 %v4004, %v4029
    %v4086 = vmul.f32 %v4008, %v4025
    %v4087 = vmul.f32 %v4008, %v4029
    %v4088 = vmul.f32 %v4012, %v4025
    %v4089 = vmul.f32 %v4012, %v4029
    %v4090 = vmul.f32 %v4016, %v4025
    %v4091 = vmul.f32 %v4016, %v4029
    %v4092 = vmul.f32 %v4020, %v4025
    %v4093 = vmul.f32 %v4020, %v4029
    %v4094 = vadd.f32 %v3830, %v4030
    %v4095 = vadd.f32 %v3831, %v4031
    %v4096 = vadd.f32 %v3832, %v4032
    %v4097 = vadd.f32 %v3833, %v4033
    %v4098 = vadd.f32 %v3834, %v4034
    %v4099 = vadd.f32 %v3835, %v4035
    %v4100 = vadd.f32 %v3836, %v4036
    %v4101 = vadd.f32 %v3837, %v4037
    %v4102 = vadd.f32 %v3838, %v4038
    %v4103 = vadd.f32 %v3839, %v4039
    %v4104 = vadd.f32 %v3840, %v4040
    %v4105 = vadd.f32 %v3841, %v4041
    %v4106 = vadd.f32 %v3842, %v4042
    %v4107 = vadd.f32 %v3843, %v4043
    %v4108 = vadd.f32 %v3844, %v4044
    %v4109 = vadd.f32 %v3845, %v4045
    %v4110 = vadd.f32 %v3846, %v4046
    %v4111 = vadd.f32 %v3847, %v4047
    %v4112 = vadd.f32 %v3848, %v4048
    %v4113 = vadd.f32 %v3849, %v4049
    %v4114 = vadd.f32 %v3850, %v4050
    %v4115 = vadd.f32 %v3851, %v4051
    %v4116 = vadd.f32 %v3852, %v4052
    %v4117 = vadd.f32 %v3853, %v4053
    %v4118 = vadd.f32 %v3854, %v4054
    %v4119 = vadd.f32 %v3855, %v4055
    %v4120 = vadd.f32 %v3856, %v4056
    %v4121 = vadd.f32 %v3857, %v4057
    %v4122 = vadd.f32 %v3858, %v4058
    %v4123 = vadd.f32 %v3859, %v4059
    %v4124 = vadd.f32 %v3860, %v4060
    %v4125 = vadd.f32 %v3861, %v4061
    %v4126 = vadd.f32 %v3862, %v4062
    %v4127 = vadd.f32 %v3863, %v4063
    %v4128 = vadd.f32 %v3864, %v4064
    %v4129 = vadd.f32 %v3865, %v4065
    %v4130 = vadd.f32 %v3866, %v4066
    %v4131 = vadd.f32 %v3867, %v4067
    %v4132 = vadd.f32 %v3868, %v4068
    %v4133 = vadd.f32 %v3869, %v4069
    %v4134 = vadd.f32 %v3870, %v4070
    %v4135 = vadd.f32 %v3871, %v4071
    %v4136 = vadd.f32 %v3872, %v4072
    %v4137 = vadd.f32 %v3873, %v4073
    %v4138 = vadd.f32 %v3874, %v4074
    %v4139 = vadd.f32 %v3875, %v4075
    %v4140 = vadd.f32 %v3876, %v4076
    %v4141 = vadd.f32 %v3877, %v4077
    %v4142 = vadd.f32 %v3878, %v4078
    %v4143 = vadd.f32 %v3879, %v4079
    %v4144 = vadd.f32 %v3880, %v4080
    %v4145 = vadd.f32 %v3881, %v4081
    %v4146 = vadd.f32 %v3882, %v4082
    %v4147 = vadd.f32 %v3883, %v4083
    %v4148 = vadd.f32 %v3884, %v4084
    %v4149 = vadd.f32 %v3885, %v4085
    %v4150 = vadd.f32 %v3886, %v4086
    %v4151 = vadd.f32 %v3887, %v4087
    %v4152 = vadd.f32 %v3888, %v4088
    %v4153 = vadd.f32 %v3889, %v4089
    %v4154 = vadd.f32 %v3890, %v4090
    %v4155 = vadd.f32 %v3891, %v4091
    %v4156 = vadd.f32 %v3892, %v4092
    %v4157 = vadd.f32 %v3893, %v4093
    %4158 = vset.pattern.permute.xlu0 15
    %4159 = vperm.xlu0 %4158, %v130
    %v4160 = vpop.permute.xlu0 %4159
    %4162 = vset.pattern.permute.xlu0 15
    %4163 = vperm.xlu0 %4162, %v131
    %v4164 = vpop.permute.xlu0 %4163
    %4166 = vset.pattern.permute.xlu0 15
    %4167 = vperm.xlu0 %4166, %v132
    %v4168 = vpop.permute.xlu0 %4167
    %4170 = vset.pattern.permute.xlu0 15
    %4171 = vperm.xlu0 %4170, %v133
    %v4172 = vpop.permute.xlu0 %4171
    %4174 = vset.pattern.permute.xlu0 15
    %4175 = vperm.xlu0 %4174, %v134
    %v4176 = vpop.permute.xlu0 %4175
    %4178 = vset.pattern.permute.xlu0 15
    %4179 = vperm.xlu0 %4178, %v135
    %v4180 = vpop.permute.xlu0 %4179
    %4182 = vset.pattern.permute.xlu0 15
    %4183 = vperm.xlu0 %4182, %v136
    %v4184 = vpop.permute.xlu0 %4183
    %4186 = vset.pattern.permute.xlu0 15
    %4187 = vperm.xlu0 %4186, %v137
    %v4188 = vpop.permute.xlu0 %4187
    %4190 = vset.pattern.permute.xlu0 15
    %4191 = vperm.xlu0 %4190, %v138
    %v4192 = vpop.permute.xlu0 %4191
    %4194 = vset.pattern.permute.xlu0 15
    %4195 = vperm.xlu0 %4194, %v139
    %v4196 = vpop.permute.xlu0 %4195
    %4198 = vset.pattern.permute.xlu0 15
    %4199 = vperm.xlu0 %4198, %v140
    %v4200 = vpop.permute.xlu0 %4199
    %4202 = vset.pattern.permute.xlu0 15
    %4203 = vperm.xlu0 %4202, %v141
    %v4204 = vpop.permute.xlu0 %4203
    %4206 = vset.pattern.permute.xlu0 15
    %4207 = vperm.xlu0 %4206, %v142
    %v4208 = vpop.permute.xlu0 %4207
    %4210 = vset.pattern.permute.xlu0 15
    %4211 = vperm.xlu0 %4210, %v143
    %v4212 = vpop.permute.xlu0 %4211
    %4214 = vset.pattern.permute.xlu0 15
    %4215 = vperm.xlu0 %4214, %v144
    %v4216 = vpop.permute.xlu0 %4215
    %4218 = vset.pattern.permute.xlu0 15
    %4219 = vperm.xlu0 %4218, %v145
    %v4220 = vpop.permute.xlu0 %4219
    %4222 = vset.pattern.permute.xlu0 15
    %4223 = vperm.xlu0 %4222, %v146
    %v4224 = vpop.permute.xlu0 %4223
    %4226 = vset.pattern.permute.xlu0 15
    %4227 = vperm.xlu0 %4226, %v147
    %v4228 = vpop.permute.xlu0 %4227
    %4230 = vset.pattern.permute.xlu0 15
    %4231 = vperm.xlu0 %4230, %v148
    %v4232 = vpop.permute.xlu0 %4231
    %4234 = vset.pattern.permute.xlu0 15
    %4235 = vperm.xlu0 %4234, %v149
    %v4236 = vpop.permute.xlu0 %4235
    %4238 = vset.pattern.permute.xlu0 15
    %4239 = vperm.xlu0 %4238, %v150
    %v4240 = vpop.permute.xlu0 %4239
    %4242 = vset.pattern.permute.xlu0 15
    %4243 = vperm.xlu0 %4242, %v151
    %v4244 = vpop.permute.xlu0 %4243
    %4246 = vset.pattern.permute.xlu0 15
    %4247 = vperm.xlu0 %4246, %v152
    %v4248 = vpop.permute.xlu0 %4247
    %4250 = vset.pattern.permute.xlu0 15
    %4251 = vperm.xlu0 %4250, %v153
    %v4252 = vpop.permute.xlu0 %4251
    %4254 = vset.pattern.permute.xlu0 15
    %4255 = vperm.xlu0 %4254, %v154
    %v4256 = vpop.permute.xlu0 %4255
    %4258 = vset.pattern.permute.xlu0 15
    %4259 = vperm.xlu0 %4258, %v155
    %v4260 = vpop.permute.xlu0 %4259
    %4262 = vset.pattern.permute.xlu0 15
    %4263 = vperm.xlu0 %4262, %v156
    %v4264 = vpop.permute.xlu0 %4263
    %4266 = vset.pattern.permute.xlu0 15
    %4267 = vperm.xlu0 %4266, %v157
    %v4268 = vpop.permute.xlu0 %4267
    %4270 = vset.pattern.permute.xlu0 15
    %4271 = vperm.xlu0 %4270, %v158
    %v4272 = vpop.permute.xlu0 %4271
    %4274 = vset.pattern.permute.xlu0 15
    %4275 = vperm.xlu0 %4274, %v159
    %v4276 = vpop.permute.xlu0 %4275
    %4278 = vset.pattern.permute.xlu0 15
    %4279 = vperm.xlu0 %4278, %v160
    %v4280 = vpop.permute.xlu0 %4279
    %4282 = vset.pattern.permute.xlu0 15
    %4283 = vperm.xlu0 %4282, %v161
    %v4284 = vpop.permute.xlu0 %4283
    %v4286 = vlaneseq
    %v4287 = vshrl.u32 %v4286, 7
    %v4288 = vsub.s32 7, %v4287
    %v4289 = vrot.slane %v164, %v4288
    %v4290 = vlaneseq
    %v4291 = vshrl.u32 %v4290, 7
    %v4292 = vsub.s32 7, %v4291
    %v4293 = vrot.slane %v165, %v4292
    %v4294 = vmul.f32 %v4160, %v4289
    %v4295 = vmul.f32 %v4160, %v4293
    %v4296 = vmul.f32 %v4164, %v4289
    %v4297 = vmul.f32 %v4164, %v4293
    %v4298 = vmul.f32 %v4168, %v4289
    %v4299 = vmul.f32 %v4168, %v4293
    %v4300 = vmul.f32 %v4172, %v4289
    %v4301 = vmul.f32 %v4172, %v4293
    %v4302 = vmul.f32 %v4176, %v4289
    %v4303 = vmul.f32 %v4176, %v4293
    %v4304 = vmul.f32 %v4180, %v4289
    %v4305 = vmul.f32 %v4180, %v4293
    %v4306 = vmul.f32 %v4184, %v4289
    %v4307 = vmul.f32 %v4184, %v4293
    %v4308 = vmul.f32 %v4188, %v4289
    %v4309 = vmul.f32 %v4188, %v4293
    %v4310 = vmul.f32 %v4192, %v4289
    %v4311 = vmul.f32 %v4192, %v4293
    %v4312 = vmul.f32 %v4196, %v4289
    %v4313 = vmul.f32 %v4196, %v4293
    %v4314 = vmul.f32 %v4200, %v4289
    %v4315 = vmul.f32 %v4200, %v4293
    %v4316 = vmul.f32 %v4204, %v4289
    %v4317 = vmul.f32 %v4204, %v4293
    %v4318 = vmul.f32 %v4208, %v4289
    %v4319 = vmul.f32 %v4208, %v4293
    %v4320 = vmul.f32 %v4212, %v4289
    %v4321 = vmul.f32 %v4212, %v4293
    %v4322 = vmul.f32 %v4216, %v4289
    %v4323 = vmul.f32 %v4216, %v4293
    %v4324 = vmul.f32 %v4220, %v4289
    %v4325 = vmul.f32 %v4220, %v4293
    %v4326 = vmul.f32 %v4224, %v4289
    %v4327 = vmul.f32 %v4224, %v4293
    %v4328 = vmul.f32 %v4228, %v4289
    %v4329 = vmul.f32 %v4228, %v4293
    %v4330 = vmul.f32 %v4232, %v4289
    %v4331 = vmul.f32 %v4232, %v4293
    %v4332 = vmul.f32 %v4236, %v4289
    %v4333 = vmul.f32 %v4236, %v4293
    %v4334 = vmul.f32 %v4240, %v4289
    %v4335 = vmul.f32 %v4240, %v4293
    %v4336 = vmul.f32 %v4244, %v4289
    %v4337 = vmul.f32 %v4244, %v4293
    %v4338 = vmul.f32 %v4248, %v4289
    %v4339 = vmul.f32 %v4248, %v4293
    %v4340 = vmul.f32 %v4252, %v4289
    %v4341 = vmul.f32 %v4252, %v4293
    %v4342 = vmul.f32 %v4256, %v4289
    %v4343 = vmul.f32 %v4256, %v4293
    %v4344 = vmul.f32 %v4260, %v4289
    %v4345 = vmul.f32 %v4260, %v4293
    %v4346 = vmul.f32 %v4264, %v4289
    %v4347 = vmul.f32 %v4264, %v4293
    %v4348 = vmul.f32 %v4268, %v4289
    %v4349 = vmul.f32 %v4268, %v4293
    %v4350 = vmul.f32 %v4272, %v4289
    %v4351 = vmul.f32 %v4272, %v4293
    %v4352 = vmul.f32 %v4276, %v4289
    %v4353 = vmul.f32 %v4276, %v4293
    %v4354 = vmul.f32 %v4280, %v4289
    %v4355 = vmul.f32 %v4280, %v4293
    %v4356 = vmul.f32 %v4284, %v4289
    %v4357 = vmul.f32 %v4284, %v4293
    %v4358 = vadd.f32 %v4094, %v4294
    %v4359 = vadd.f32 %v4095, %v4295
    %v4360 = vadd.f32 %v4096, %v4296
    %v4361 = vadd.f32 %v4097, %v4297
    %v4362 = vadd.f32 %v4098, %v4298
    %v4363 = vadd.f32 %v4099, %v4299
    %v4364 = vadd.f32 %v4100, %v4300
    %v4365 = vadd.f32 %v4101, %v4301
    %v4366 = vadd.f32 %v4102, %v4302
    %v4367 = vadd.f32 %v4103, %v4303
    %v4368 = vadd.f32 %v4104, %v4304
    %v4369 = vadd.f32 %v4105, %v4305
    %v4370 = vadd.f32 %v4106, %v4306
    %v4371 = vadd.f32 %v4107, %v4307
    %v4372 = vadd.f32 %v4108, %v4308
    %v4373 = vadd.f32 %v4109, %v4309
    %v4374 = vadd.f32 %v4110, %v4310
    %v4375 = vadd.f32 %v4111, %v4311
    %v4376 = vadd.f32 %v4112, %v4312
    %v4377 = vadd.f32 %v4113, %v4313
    %v4378 = vadd.f32 %v4114, %v4314
    %v4379 = vadd.f32 %v4115, %v4315
    %v4380 = vadd.f32 %v4116, %v4316
    %v4381 = vadd.f32 %v4117, %v4317
    %v4382 = vadd.f32 %v4118, %v4318
    %v4383 = vadd.f32 %v4119, %v4319
    %v4384 = vadd.f32 %v4120, %v4320
    %v4385 = vadd.f32 %v4121, %v4321
    %v4386 = vadd.f32 %v4122, %v4322
    %v4387 = vadd.f32 %v4123, %v4323
    %v4388 = vadd.f32 %v4124, %v4324
    %v4389 = vadd.f32 %v4125, %v4325
    %v4390 = vadd.f32 %v4126, %v4326
    %v4391 = vadd.f32 %v4127, %v4327
    %v4392 = vadd.f32 %v4128, %v4328
    %v4393 = vadd.f32 %v4129, %v4329
    %v4394 = vadd.f32 %v4130, %v4330
    %v4395 = vadd.f32 %v4131, %v4331
    %v4396 = vadd.f32 %v4132, %v4332
    %v4397 = vadd.f32 %v4133, %v4333
    %v4398 = vadd.f32 %v4134, %v4334
    %v4399 = vadd.f32 %v4135, %v4335
    %v4400 = vadd.f32 %v4136, %v4336
    %v4401 = vadd.f32 %v4137, %v4337
    %v4402 = vadd.f32 %v4138, %v4338
    %v4403 = vadd.f32 %v4139, %v4339
    %v4404 = vadd.f32 %v4140, %v4340
    %v4405 = vadd.f32 %v4141, %v4341
    %v4406 = vadd.f32 %v4142, %v4342
    %v4407 = vadd.f32 %v4143, %v4343
    %v4408 = vadd.f32 %v4144, %v4344
    %v4409 = vadd.f32 %v4145, %v4345
    %v4410 = vadd.f32 %v4146, %v4346
    %v4411 = vadd.f32 %v4147, %v4347
    %v4412 = vadd.f32 %v4148, %v4348
    %v4413 = vadd.f32 %v4149, %v4349
    %v4414 = vadd.f32 %v4150, %v4350
    %v4415 = vadd.f32 %v4151, %v4351
    %v4416 = vadd.f32 %v4152, %v4352
    %v4417 = vadd.f32 %v4153, %v4353
    %v4418 = vadd.f32 %v4154, %v4354
    %v4419 = vadd.f32 %v4155, %v4355
    %v4420 = vadd.f32 %v4156, %v4356
    %v4421 = vadd.f32 %v4157, %v4357
    %v4422 = vld [vmem:[#allocation3] sm:$0x3]
    %v4424 = vlaneseq
    %v4425 = vshrl.u32 %v4424, 7
    %v4426 = vsub.s32 0, %v4425
    %v4427 = vrot.slane %v4422, %v4426
    %v4428 = vlaneseq
    %v4429 = vshrl.u32 %v4428, 7
    %v4430 = vsub.s32 1, %v4429
    %v4431 = vrot.slane %v4422, %v4430
    %v4434 = vsub.f32 %v4358, %v4427
    %v4435 = vsub.f32 %v4359, %v4431
    %v4436 = vsub.f32 %v4360, %v4427
    %v4437 = vsub.f32 %v4361, %v4431
    %v4438 = vsub.f32 %v4362, %v4427
    %v4439 = vsub.f32 %v4363, %v4431
    %v4440 = vsub.f32 %v4364, %v4427
    %v4441 = vsub.f32 %v4365, %v4431
    %v4442 = vsub.f32 %v4366, %v4427
    %v4443 = vsub.f32 %v4367, %v4431
    %v4444 = vsub.f32 %v4368, %v4427
    %v4445 = vsub.f32 %v4369, %v4431
    %v4446 = vsub.f32 %v4370, %v4427
    %v4447 = vsub.f32 %v4371, %v4431
    %v4448 = vsub.f32 %v4372, %v4427
    %v4449 = vsub.f32 %v4373, %v4431
    %v4450 = vsub.f32 %v4374, %v4427
    %v4451 = vsub.f32 %v4375, %v4431
    %v4452 = vsub.f32 %v4376, %v4427
    %v4453 = vsub.f32 %v4377, %v4431
    %v4454 = vsub.f32 %v4378, %v4427
    %v4455 = vsub.f32 %v4379, %v4431
    %v4456 = vsub.f32 %v4380, %v4427
    %v4457 = vsub.f32 %v4381, %v4431
    %v4458 = vsub.f32 %v4382, %v4427
    %v4459 = vsub.f32 %v4383, %v4431
    %v4460 = vsub.f32 %v4384, %v4427
    %v4461 = vsub.f32 %v4385, %v4431
    %v4462 = vsub.f32 %v4386, %v4427
    %v4463 = vsub.f32 %v4387, %v4431
    %v4464 = vsub.f32 %v4388, %v4427
    %v4465 = vsub.f32 %v4389, %v4431
    %v4466 = vsub.f32 %v4390, %v4427
    %v4467 = vsub.f32 %v4391, %v4431
    %v4468 = vsub.f32 %v4392, %v4427
    %v4469 = vsub.f32 %v4393, %v4431
    %v4470 = vsub.f32 %v4394, %v4427
    %v4471 = vsub.f32 %v4395, %v4431
    %v4472 = vsub.f32 %v4396, %v4427
    %v4473 = vsub.f32 %v4397, %v4431
    %v4474 = vsub.f32 %v4398, %v4427
    %v4475 = vsub.f32 %v4399, %v4431
    %v4476 = vsub.f32 %v4400, %v4427
    %v4477 = vsub.f32 %v4401, %v4431
    %v4478 = vsub.f32 %v4402, %v4427
    %v4479 = vsub.f32 %v4403, %v4431
    %v4480 = vsub.f32 %v4404, %v4427
    %v4481 = vsub.f32 %v4405, %v4431
    %v4482 = vsub.f32 %v4406, %v4427
    %v4483 = vsub.f32 %v4407, %v4431
    %v4484 = vsub.f32 %v4408, %v4427
    %v4485 = vsub.f32 %v4409, %v4431
    %v4486 = vsub.f32 %v4410, %v4427
    %v4487 = vsub.f32 %v4411, %v4431
    %v4488 = vsub.f32 %v4412, %v4427
    %v4489 = vsub.f32 %v4413, %v4431
    %v4490 = vsub.f32 %v4414, %v4427
    %v4491 = vsub.f32 %v4415, %v4431
    %v4492 = vsub.f32 %v4416, %v4427
    %v4493 = vsub.f32 %v4417, %v4431
    %v4494 = vsub.f32 %v4418, %v4427
    %v4495 = vsub.f32 %v4419, %v4431
    %v4496 = vsub.f32 %v4420, %v4427
    %v4497 = vsub.f32 %v4421, %v4431
    %v4498 = vmax.f32 %v4434, 0.0
    %v4499 = vmax.f32 %v4435, 0.0
    %v4500 = vmax.f32 %v4436, 0.0
    %v4501 = vmax.f32 %v4437, 0.0
    %v4502 = vmax.f32 %v4438, 0.0
    %v4503 = vmax.f32 %v4439, 0.0
    %v4504 = vmax.f32 %v4440, 0.0
    %v4505 = vmax.f32 %v4441, 0.0
    %v4506 = vmax.f32 %v4442, 0.0
    %v4507 = vmax.f32 %v4443, 0.0
    %v4508 = vmax.f32 %v4444, 0.0
    %v4509 = vmax.f32 %v4445, 0.0
    %v4510 = vmax.f32 %v4446, 0.0
    %v4511 = vmax.f32 %v4447, 0.0
    %v4512 = vmax.f32 %v4448, 0.0
    %v4513 = vmax.f32 %v4449, 0.0
    %v4514 = vmax.f32 %v4450, 0.0
    %v4515 = vmax.f32 %v4451, 0.0
    %v4516 = vmax.f32 %v4452, 0.0
    %v4517 = vmax.f32 %v4453, 0.0
    %v4518 = vmax.f32 %v4454, 0.0
    %v4519 = vmax.f32 %v4455, 0.0
    %v4520 = vmax.f32 %v4456, 0.0
    %v4521 = vmax.f32 %v4457, 0.0
    %v4522 = vmax.f32 %v4458, 0.0
    %v4523 = vmax.f32 %v4459, 0.0
    %v4524 = vmax.f32 %v4460, 0.0
    %v4525 = vmax.f32 %v4461, 0.0
    %v4526 = vmax.f32 %v4462, 0.0
    %v4527 = vmax.f32 %v4463, 0.0
    %v4528 = vmax.f32 %v4464, 0.0
    %v4529 = vmax.f32 %v4465, 0.0
    %v4530 = vmax.f32 %v4466, 0.0
    %v4531 = vmax.f32 %v4467, 0.0
    %v4532 = vmax.f32 %v4468, 0.0
    %v4533 = vmax.f32 %v4469, 0.0
    %v4534 = vmax.f32 %v4470, 0.0
    %v4535 = vmax.f32 %v4471, 0.0
    %v4536 = vmax.f32 %v4472, 0.0
    %v4537 = vmax.f32 %v4473, 0.0
    %v4538 = vmax.f32 %v4474, 0.0
    %v4539 = vmax.f32 %v4475, 0.0
    %v4540 = vmax.f32 %v4476, 0.0
    %v4541 = vmax.f32 %v4477, 0.0
    %v4542 = vmax.f32 %v4478, 0.0
    %v4543 = vmax.f32 %v4479, 0.0
    %v4544 = vmax.f32 %v4480, 0.0
    %v4545 = vmax.f32 %v4481, 0.0
    %v4546 = vmax.f32 %v4482, 0.0
    %v4547 = vmax.f32 %v4483, 0.0
    %v4548 = vmax.f32 %v4484, 0.0
    %v4549 = vmax.f32 %v4485, 0.0
    %v4550 = vmax.f32 %v4486, 0.0
    %v4551 = vmax.f32 %v4487, 0.0
    %v4552 = vmax.f32 %v4488, 0.0
    %v4553 = vmax.f32 %v4489, 0.0
    %v4554 = vmax.f32 %v4490, 0.0
    %v4555 = vmax.f32 %v4491, 0.0
    %v4556 = vmax.f32 %v4492, 0.0
    %v4557 = vmax.f32 %v4493, 0.0
    %v4558 = vmax.f32 %v4494, 0.0
    %v4559 = vmax.f32 %v4495, 0.0
    %v4560 = vmax.f32 %v4496, 0.0
    %v4561 = vmax.f32 %v4497, 0.0
    %v4562 = vmin.f32 %v4498, 1.0
    %v4563 = vmin.f32 %v4499, 1.0
    %v4564 = vmin.f32 %v4500, 1.0
    %v4565 = vmin.f32 %v4501, 1.0
    %v4566 = vmin.f32 %v4502, 1.0
    %v4567 = vmin.f32 %v4503, 1.0
    %v4568 = vmin.f32 %v4504, 1.0
    %v4569 = vmin.f32 %v4505, 1.0
    %v4570 = vmin.f32 %v4506, 1.0
    %v4571 = vmin.f32 %v4507, 1.0
    %v4572 = vmin.f32 %v4508, 1.0
    %v4573 = vmin.f32 %v4509, 1.0
    %v4574 = vmin.f32 %v4510, 1.0
    %v4575 = vmin.f32 %v4511, 1.0
    %v4576 = vmin.f32 %v4512, 1.0
    %v4577 = vmin.f32 %v4513, 1.0
    %v4578 = vmin.f32 %v4514, 1.0
    %v4579 = vmin.f32 %v4515, 1.0
    %v4580 = vmin.f32 %v4516, 1.0
    %v4581 = vmin.f32 %v4517, 1.0
    %v4582 = vmin.f32 %v4518, 1.0
    %v4583 = vmin.f32 %v4519, 1.0
    %v4584 = vmin.f32 %v4520, 1.0
    %v4585 = vmin.f32 %v4521, 1.0
    %v4586 = vmin.f32 %v4522, 1.0
    %v4587 = vmin.f32 %v4523, 1.0
    %v4588 = vmin.f32 %v4524, 1.0
    %v4589 = vmin.f32 %v4525, 1.0
    %v4590 = vmin.f32 %v4526, 1.0
    %v4591 = vmin.f32 %v4527, 1.0
    %v4592 = vmin.f32 %v4528, 1.0
    %v4593 = vmin.f32 %v4529, 1.0
    %v4594 = vmin.f32 %v4530, 1.0
    %v4595 = vmin.f32 %v4531, 1.0
    %v4596 = vmin.f32 %v4532, 1.0
    %v4597 = vmin.f32 %v4533, 1.0
    %v4598 = vmin.f32 %v4534, 1.0
    %v4599 = vmin.f32 %v4535, 1.0
    %v4600 = vmin.f32 %v4536, 1.0
    %v4601 = vmin.f32 %v4537, 1.0
    %v4602 = vmin.f32 %v4538, 1.0
    %v4603 = vmin.f32 %v4539, 1.0
    %v4604 = vmin.f32 %v4540, 1.0
    %v4605 = vmin.f32 %v4541, 1.0
    %v4606 = vmin.f32 %v4542, 1.0
    %v4607 = vmin.f32 %v4543, 1.0
    %v4608 = vmin.f32 %v4544, 1.0
    %v4609 = vmin.f32 %v4545, 1.0
    %v4610 = vmin.f32 %v4546, 1.0
    %v4611 = vmin.f32 %v4547, 1.0
    %v4612 = vmin.f32 %v4548, 1.0
    %v4613 = vmin.f32 %v4549, 1.0
    %v4614 = vmin.f32 %v4550, 1.0
    %v4615 = vmin.f32 %v4551, 1.0
    %v4616 = vmin.f32 %v4552, 1.0
    %v4617 = vmin.f32 %v4553, 1.0
    %v4618 = vmin.f32 %v4554, 1.0
    %v4619 = vmin.f32 %v4555, 1.0
    %v4620 = vmin.f32 %v4556, 1.0
    %v4621 = vmin.f32 %v4557, 1.0
    %v4622 = vmin.f32 %v4558, 1.0
    %v4623 = vmin.f32 %v4559, 1.0
    %v4624 = vmin.f32 %v4560, 1.0
    %v4625 = vmin.f32 %v4561, 1.0
    %4626 = vst [vmem:[#allocation4] sm:$0xff] %v4562
    %4627 = vst [vmem:[#allocation4 + $0x8] sm:$0xff] %v4563
    %4628 = vst [vmem:[#allocation4 + $0x10] sm:$0xff] %v4564
    %4629 = vst [vmem:[#allocation4 + $0x18] sm:$0xff] %v4565
    %4630 = vst [vmem:[#allocation4 + $0x20] sm:$0xff] %v4566
    %4631 = vst [vmem:[#allocation4 + $0x28] sm:$0xff] %v4567
    %4632 = vst [vmem:[#allocation4 + $0x30] sm:$0xff] %v4568
    %4633 = vst [vmem:[#allocation4 + $0x38] sm:$0xff] %v4569
    %4634 = vst [vmem:[#allocation4 + $0x40] sm:$0xff] %v4570
    %4635 = vst [vmem:[#allocation4 + $0x48] sm:$0xff] %v4571
    %4636 = vst [vmem:[#allocation4 + $0x50] sm:$0xff] %v4572
    %4637 = vst [vmem:[#allocation4 + $0x58] sm:$0xff] %v4573
    %4638 = vst [vmem:[#allocation4 + $0x60] sm:$0xff] %v4574
    %4639 = vst [vmem:[#allocation4 + $0x68] sm:$0xff] %v4575
    %4640 = vst [vmem:[#allocation4 + $0x70] sm:$0xff] %v4576
    %4641 = vst [vmem:[#allocation4 + $0x78] sm:$0xff] %v4577
    %4642 = vst [vmem:[#allocation4 + $0x80] sm:$0xff] %v4578
    %4643 = vst [vmem:[#allocation4 + $0x88] sm:$0xff] %v4579
    %4644 = vst [vmem:[#allocation4 + $0x90] sm:$0xff] %v4580
    %4645 = vst [vmem:[#allocation4 + $0x98] sm:$0xff] %v4581
    %4646 = vst [vmem:[#allocation4 + $0xa0] sm:$0xff] %v4582
    %4647 = vst [vmem:[#allocation4 + $0xa8] sm:$0xff] %v4583
    %4648 = vst [vmem:[#allocation4 + $0xb0] sm:$0xff] %v4584
    %4649 = vst [vmem:[#allocation4 + $0xb8] sm:$0xff] %v4585
    %4650 = vst [vmem:[#allocation4 + $0xc0] sm:$0xff] %v4586
    %4651 = vst [vmem:[#allocation4 + $0xc8] sm:$0xff] %v4587
    %4652 = vst [vmem:[#allocation4 + $0xd0] sm:$0xff] %v4588
    %4653 = vst [vmem:[#allocation4 + $0xd8] sm:$0xff] %v4589
    %4654 = vst [vmem:[#allocation4 + $0xe0] sm:$0xff] %v4590
    %4655 = vst [vmem:[#allocation4 + $0xe8] sm:$0xff] %v4591
    %4656 = vst [vmem:[#allocation4 + $0xf0] sm:$0xff] %v4592
    %4657 = vst [vmem:[#allocation4 + $0xf8] sm:$0xff] %v4593
    %4658 = vst [vmem:[#allocation4 + $0x100] sm:$0xff] %v4594
    %4659 = vst [vmem:[#allocation4 + $0x108] sm:$0xff] %v4595
    %4660 = vst [vmem:[#allocation4 + $0x110] sm:$0xff] %v4596
    %4661 = vst [vmem:[#allocation4 + $0x118] sm:$0xff] %v4597
    %4662 = vst [vmem:[#allocation4 + $0x120] sm:$0xff] %v4598
    %4663 = vst [vmem:[#allocation4 + $0x128] sm:$0xff] %v4599
    %4664 = vst [vmem:[#allocation4 + $0x130] sm:$0xff] %v4600
    %4665 = vst [vmem:[#allocation4 + $0x138] sm:$0xff] %v4601
    %4666 = vst [vmem:[#allocation4 + $0x140] sm:$0xff] %v4602
    %4667 = vst [vmem:[#allocation4 + $0x148] sm:$0xff] %v4603
    %4668 = vst [vmem:[#allocation4 + $0x150] sm:$0xff] %v4604
    %4669 = vst [vmem:[#allocation4 + $0x158] sm:$0xff] %v4605
    %4670 = vst [vmem:[#allocation4 + $0x160] sm:$0xff] %v4606
    %4671 = vst [vmem:[#allocation4 + $0x168] sm:$0xff] %v4607
    %4672 = vst [vmem:[#allocation4 + $0x170] sm:$0xff] %v4608
    %4673 = vst [vmem:[#allocation4 + $0x178] sm:$0xff] %v4609
    %4674 = vst [vmem:[#allocation4 + $0x180] sm:$0xff] %v4610
    %4675 = vst [vmem:[#allocation4 + $0x188] sm:$0xff] %v4611
    %4676 = vst [vmem:[#allocation4 + $0x190] sm:$0xff] %v4612
    %4677 = vst [vmem:[#allocation4 + $0x198] sm:$0xff] %v4613
    %4678 = vst [vmem:[#allocation4 + $0x1a0] sm:$0xff] %v4614
    %4679 = vst [vmem:[#allocation4 + $0x1a8] sm:$0xff] %v4615
    %4680 = vst [vmem:[#allocation4 + $0x1b0] sm:$0xff] %v4616
    %4681 = vst [vmem:[#allocation4 + $0x1b8] sm:$0xff] %v4617
    %4682 = vst [vmem:[#allocation4 + $0x1c0] sm:$0xff] %v4618
    %4683 = vst [vmem:[#allocation4 + $0x1c8] sm:$0xff] %v4619
    %4684 = vst [vmem:[#allocation4 + $0x1d0] sm:$0xff] %v4620
    %4685 = vst [vmem:[#allocation4 + $0x1d8] sm:$0xff] %v4621
    %4686 = vst [vmem:[#allocation4 + $0x1e0] sm:$0xff] %v4622
    %4687 = vst [vmem:[#allocation4 + $0x1e8] sm:$0xff] %v4623
    %4688 = vst [vmem:[#allocation4 + $0x1f0] sm:$0xff] %v4624
    %4689 = vst [vmem:[#allocation4 + $0x1f8] sm:$0xff] %v4625
    // Predicated region
    $region14: #{tpu_custom_call.1} parent=1 // pred_check
      _
    $region15: #{tpu_custom_call.1} parent=1 // pred_check_branch
      %4691 = sbr.rel (0) target = $region17
    $region16: #{tpu_custom_call.1} parent=1 // pred_region
      %s4693 = ssub.s32 8192, 8192
      %4694 = vsyncadd [#allocation5], %s4693
      %s4695 = sshll.u32 [#allocation4], 4
      %s4696 = int_to_ptr.vmem [resolvable:$true] %s4695
      %4701 = dma.vmem_to_hbm [thread:$0]  %s4696, 8192, %s3, [#allocation5], 256, 256, 16
    $region17: #{tpu_custom_call.1} parent=1 // pred_fallthru
      _
    // Predicated region
    $region18: #{tpu_custom_call.1} parent=1 // pred_check
      _
    $region19: #{tpu_custom_call.1} parent=1 // pred_check_branch
      %4703 = sbr.rel (0) target = $region21
    $region20: #{tpu_custom_call.1} parent=1 // pred_region
      %4704 = dma.done [#allocation5], 8192
    $region21: #{tpu_custom_call.1} parent=1 // pred_fallthru
      _
    %4705 = vsyncpa [#allocation5], 1

</llo_original>
